<compile_context>
chip_gen: v7x
topology: tpu7x:2x2x1
jax: 0.10.0
libtpu: 0.0.40
codegen_flags: <defaults>
</compile_context>

<pallas_src>
import functools

import jax
import jax.numpy as jnp
from jax import lax
from jax.experimental import pallas as pl
from jax.experimental.pallas import tpu as pltpu


# ---------------------------------------------------------------------------
# Fused multi-head-attention block kernel
#   out = LayerNorm(x + OutProj(MHA(x, kv, kv, mask)))
# ---------------------------------------------------------------------------

def _mha_block_kernel(x_ref, kv_ref, mask_ref, wqkv_ref, bqkv_ref, wo_ref, bo_ref,
                      g_ref, beta_ref, out_ref, *attn_out_ref,
                      scale, num_heads, self_attn, eps):
    D = x_ref.shape[-1]
    dh = D // num_heads
    return_attn = len(attn_out_ref) > 0

    x = x_ref[0]                                   # (Tq, D) f32 (also the residual)
    bqkv = bqkv_ref[...]                           # (1, 3D)

    if self_attn:
        # single fused (D, 3D) projection
        qkv = jnp.dot(x.astype(jnp.bfloat16),
                      wqkv_ref[...].astype(jnp.bfloat16),
                      preferred_element_type=jnp.float32) + bqkv
        q = qkv[:, :D]
        k = qkv[:, D:2 * D]
        v = qkv[:, 2 * D:]
    else:
        kv_in = kv_ref[0]                          # (Tk, D)
        wqkv = wqkv_ref[...]
        q = jnp.dot(x.astype(jnp.bfloat16),
                    wqkv[:, :D].astype(jnp.bfloat16),
                    preferred_element_type=jnp.float32) + bqkv[:, :D]
        kvp = jnp.dot(kv_in.astype(jnp.bfloat16),
                      wqkv[:, D:].astype(jnp.bfloat16),
                      preferred_element_type=jnp.float32) + bqkv[:, D:]
        k = kvp[:, :D]
        v = kvp[:, D:]

    # additive mask in f32: 0 where keep, -1e9 where masked (matches masked_fill(-1e9))
    neg = (mask_ref[0, 0] - 1.0) * 1e9             # (Tq, Tk)

    ctx_heads = []
    for h in range(num_heads):                     # unrolled, all heads in one grid step
        qh = q[:, h * dh:(h + 1) * dh].astype(jnp.bfloat16)
        kh = k[:, h * dh:(h + 1) * dh].astype(jnp.bfloat16)
        vh = v[:, h * dh:(h + 1) * dh].astype(jnp.bfloat16)
        # scores: contract last dims (no explicit transpose needed)
        s = lax.dot_general(qh, kh, (((1,), (1,)), ((), ())),
                            preferred_element_type=jnp.float32) * scale + neg
        s = s - jnp.max(s, axis=-1, keepdims=True)           # stable softmax (f32)
        p = jnp.exp(s)
        inv = pl.reciprocal(jnp.sum(p, axis=-1, keepdims=True), approx=True)  # EUP
        p = p * inv
        ctx_heads.append(jnp.dot(p.astype(jnp.bfloat16), vh,
                                 preferred_element_type=jnp.float32))
        if return_attn:
            attn_out_ref[0][0, h] = p.astype(attn_out_ref[0].dtype)

    ctx = jnp.concatenate(ctx_heads, axis=-1)      # (Tq, D) lane-dense, stays in VMEM

    o = jnp.dot(ctx.astype(jnp.bfloat16),
                wo_ref[...].astype(jnp.bfloat16),
                preferred_element_type=jnp.float32) + bo_ref[...]

    # residual + LayerNorm (f32 statistics)
    y = x + o
    mu = jnp.mean(y, axis=-1, keepdims=True)
    var = jnp.mean(jnp.square(y - mu), axis=-1, keepdims=True)
    yhat = (y - mu) * lax.rsqrt(var + eps)
    out_ref[0] = (yhat * g_ref[...] + beta_ref[...]).astype(out_ref.dtype)


def mha_block(q_in, kv_in, mask, attn_params, ln_params, num_heads,
              *, self_attn, return_attn):
    """Fused MHA + output-proj + residual + LayerNorm.  Returns (out, attn or None)."""
    B, Tq, D = q_in.shape
    _, Tk, _ = kv_in.shape
    H = num_heads
    dh = D // H
    scale = 1.0 / float(dh) ** 0.5

    wqkv = attn_params["wqkv"]
    bqkv = attn_params["bqkv"].reshape(1, 3 * D)
    wo = attn_params["wo"]
    bo = attn_params["bo"].reshape(1, D)
    gamma = ln_params[0].reshape(1, D)
    beta = ln_params[1].reshape(1, D)

    out_shapes = [jax.ShapeDtypeStruct((B, Tq, D), q_in.dtype)]
    out_specs = [pl.BlockSpec((1, Tq, D), lambda b: (b, 0, 0))]
    if return_attn:
        out_shapes.append(jax.ShapeDtypeStruct((B, H, Tq, Tk), jnp.float32))
        out_specs.append(pl.BlockSpec((1, H, Tq, Tk), lambda b: (b, 0, 0, 0)))

    # advisory cost hint for the XLA scheduler
    flops = 2 * B * (Tq * D * 3 * D + 2 * H * Tq * Tk * dh + Tq * D * D)
    bytes_acc = 4 * (B * Tq * D * 2 + B * Tk * D + B * Tq * Tk
                     + 4 * D * D + 6 * D
                     + (B * H * Tq * Tk if return_attn else 0))
    cost = pl.CostEstimate(flops=flops, transcendentals=B * H * Tq * Tk,
                           bytes_accessed=bytes_acc)

    results = pl.pallas_call(
        functools.partial(_mha_block_kernel, scale=scale, num_heads=H,
                          self_attn=self_attn, eps=1e-5),
        out_shape=tuple(out_shapes) if return_attn else out_shapes[0],
        grid=(B,),
        in_specs=[
            pl.BlockSpec((1, Tq, D), lambda b: (b, 0, 0)),          # x (query + residual)
            pl.BlockSpec((1, Tk, D), lambda b: (b, 0, 0)),          # kv source
            pl.BlockSpec((1, 1, Tq, Tk), lambda b: (b, 0, 0, 0)),   # mask, once per batch
            pl.BlockSpec((D, 3 * D), lambda b: (0, 0)),             # fused Wq|Wk|Wv
            pl.BlockSpec((1, 3 * D), lambda b: (0, 0)),
            pl.BlockSpec((D, D), lambda b: (0, 0)),                 # Wo
            pl.BlockSpec((1, D), lambda b: (0, 0)),
            pl.BlockSpec((1, D), lambda b: (0, 0)),                 # LN gamma
            pl.BlockSpec((1, D), lambda b: (0, 0)),                 # LN beta
        ],
        out_specs=tuple(out_specs) if return_attn else out_specs[0],
        compiler_params=pltpu.CompilerParams(dimension_semantics=("parallel",)),
        cost_estimate=cost,
    )(q_in, kv_in, mask, wqkv, bqkv, wo, bo, gamma, beta)

    if return_attn:
        return results[0], results[1]
    return results, None


# ---------------------------------------------------------------------------
# Fused feed-forward block kernel
#   out = LayerNorm(x + W2 @ relu(W1 @ x + b1) + b2)
# ---------------------------------------------------------------------------

def _ffn_block_kernel(x_ref, w1_ref, b1_ref, w2_ref, b2_ref, g_ref, beta_ref,
                      out_ref, *, eps):
    x = x_ref[0]                                   # (T, D) f32
    h = jnp.dot(x.astype(jnp.bfloat16), w1_ref[...].astype(jnp.bfloat16),
                preferred_element_type=jnp.float32) + b1_ref[...]
    h = jnp.maximum(h, 0.0)
    y = jnp.dot(h.astype(jnp.bfloat16), w2_ref[...].astype(jnp.bfloat16),
                preferred_element_type=jnp.float32) + b2_ref[...]
    y = x + y                                      # residual
    mu = jnp.mean(y, axis=-1, keepdims=True)
    var = jnp.mean(jnp.square(y - mu), axis=-1, keepdims=True)
    yhat = (y - mu) * lax.rsqrt(var + eps)
    out_ref[0] = (yhat * g_ref[...] + beta_ref[...]).astype(out_ref.dtype)


def ffn_block(x, ffn_params, ln_params):
    B, T, D = x.shape
    F = ffn_params["w1"].shape[1]
    gamma = ln_params[0].reshape(1, D)
    beta = ln_params[1].reshape(1, D)

    cost = pl.CostEstimate(flops=4 * B * T * D * F, transcendentals=0,
                           bytes_accessed=4 * (2 * B * T * D + 2 * D * F + F + 3 * D))

    return pl.pallas_call(
        functools.partial(_ffn_block_kernel, eps=1e-5),
        out_shape=jax.ShapeDtypeStruct((B, T, D), x.dtype),
        grid=(B,),
        in_specs=[
            pl.BlockSpec((1, T, D), lambda b: (b, 0, 0)),
            pl.BlockSpec((D, F), lambda b: (0, 0)),
            pl.BlockSpec((1, F), lambda b: (0, 0)),
            pl.BlockSpec((F, D), lambda b: (0, 0)),
            pl.BlockSpec((1, D), lambda b: (0, 0)),
            pl.BlockSpec((1, D), lambda b: (0, 0)),
            pl.BlockSpec((1, D), lambda b: (0, 0)),
        ],
        out_specs=pl.BlockSpec((1, T, D), lambda b: (b, 0, 0)),
        compiler_params=pltpu.CompilerParams(dimension_semantics=("parallel",)),
        cost_estimate=cost,
    )(x, ffn_params["w1"], ffn_params["b1"].reshape(1, F),
      ffn_params["w2"], ffn_params["b2"].reshape(1, D), gamma, beta)


# ---------------------------------------------------------------------------
# Decoder layer (3 fused pallas_calls total)
# ---------------------------------------------------------------------------

@functools.partial(jax.jit, static_argnames=("num_heads",))
def transformer_decoder_layer(params, target, encoded_input, target_mask, input_mask,
                              num_heads):
    # self-attention + out-proj + residual + LayerNorm (attention weights discarded -> not emitted)
    x1, _ = mha_block(target, target, target_mask, params["attn1"],
                      (params["ln1_g"], params["ln1_b"]), num_heads,
                      self_attn=True, return_attn=False)
    # cross-attention + out-proj + residual + LayerNorm (attention weights returned)
    x2, attention = mha_block(x1, encoded_input, input_mask, params["attn2"],
                              (params["ln2_g"], params["ln2_b"]), num_heads,
                              self_attn=False, return_attn=True)
    # feed-forward + residual + LayerNorm
    out = ffn_block(x2, params["ffn"], (params["ln3_g"], params["ln3_b"]))
    return out, attention


# ---------------------------------------------------------------------------
# Deterministic parameter init (Wq|Wk|Wv stored pre-fused as (D, 3D))
# ---------------------------------------------------------------------------

def init_params(key, dim_model, dim_ff):
    def w(k, shape):
        return 0.02 * jax.random.normal(k, shape, dtype=jnp.float32)

    keys = jax.random.split(key, 6)

    def attn_params(kqkv, ko):
        return {
            "wqkv": w(kqkv, (dim_model, 3 * dim_model)),
            "bqkv": jnp.zeros((3 * dim_model,), jnp.float32),
            "wo": w(ko, (dim_model, dim_model)),
            "bo": jnp.zeros((dim_model,), jnp.float32),
        }

    return {
        "attn1": attn_params(keys[0], keys[1]),
        "attn2": attn_params(keys[2], keys[3]),
        "ffn": {
            "w1": w(keys[4], (dim_model, dim_ff)), "b1": jnp.zeros((dim_ff,), jnp.float32),
            "w2": w(keys[5], (dim_ff, dim_model)), "b2": jnp.zeros((dim_model,), jnp.float32),
        },
        "ln1_g": jnp.ones((dim_model,), jnp.float32), "ln1_b": jnp.zeros((dim_model,), jnp.float32),
        "ln2_g": jnp.ones((dim_model,), jnp.float32), "ln2_b": jnp.zeros((dim_model,), jnp.float32),
        "ln3_g": jnp.ones((dim_model,), jnp.float32), "ln3_b": jnp.zeros((dim_model,), jnp.float32),
    }


# ---------------------------------------------------------------------------
# Main
# ---------------------------------------------------------------------------

if __name__ == "__main__":
    B, Tt, Ts = 2, 8, 8
    dim_model, num_heads, dim_ff = 32, 4, 64

    key = jax.random.PRNGKey(0)
    k_p, k_t, k_e = jax.random.split(key, 3)

    params = init_params(k_p, dim_model, dim_ff)
    target = jax.random.normal(k_t, (B, Tt, dim_model), dtype=jnp.float32)
    encoded_input = jax.random.normal(k_e, (B, Ts, dim_model), dtype=jnp.float32)

    # causal mask for self-attention, full mask for cross-attention (1=keep, 0=mask)
    target_mask = jnp.tril(jnp.ones((Tt, Tt), jnp.float32))[None, None, :, :]
    target_mask = jnp.broadcast_to(target_mask, (B, 1, Tt, Tt)).astype(jnp.float32)
    input_mask = jnp.ones((B, 1, Tt, Ts), jnp.float32)

    out, attention = transformer_decoder_layer(
        params, target, encoded_input, target_mask, input_mask, num_heads)
    out = jax.block_until_ready(out)
    attention = jax.block_until_ready(attention)

    assert out.shape == (B, Tt, dim_model)
    assert attention.shape == (B, num_heads, Tt, Ts)
    assert bool(jnp.all(jnp.isfinite(out)))
    assert bool(jnp.all(jnp.isfinite(attention)))
    # softmax rows sum to ~1 (approx EUP reciprocal -> slightly looser tolerance)
    assert bool(jnp.allclose(jnp.sum(attention, axis=-1), 1.0, atol=1e-2))

    print("KERNEL_OK")
</pallas_src>

<mosaic_0001>
module attributes {stable_mosaic.version = 11 : i64} {
  func.func @_ffn_block_kernel(%arg0: i32, %arg1: memref<1x8x32xf32, #tpu.memory_space<vmem>>, %arg2: memref<32x64xf32, #tpu.memory_space<vmem>>, %arg3: memref<1x64xf32, #tpu.memory_space<vmem>>, %arg4: memref<64x32xf32, #tpu.memory_space<vmem>>, %arg5: memref<1x32xf32, #tpu.memory_space<vmem>>, %arg6: memref<1x32xf32, #tpu.memory_space<vmem>>, %arg7: memref<1x32xf32, #tpu.memory_space<vmem>>, %arg8: memref<1x8x32xf32, #tpu.memory_space<vmem>>) attributes {dimension_semantics = [#tpu.dimension_semantics<parallel>], iteration_bounds = array<i64: 2>, scalar_prefetch = 0 : i64, scratch_operands = 0 : i64, tpu.core_type = #tpu.core_type<tc>, window_params = [{transform_indices = @transform_0, window_bounds = array<i64: 1, 8, 32>}, {pipeline_mode = #tpu.pipeline_mode<synchronous>, transform_indices = @transform_1, window_bounds = array<i64: 32, 64>}, {pipeline_mode = #tpu.pipeline_mode<synchronous>, transform_indices = @transform_2, window_bounds = array<i64: 1, 64>}, {pipeline_mode = #tpu.pipeline_mode<synchronous>, transform_indices = @transform_3, window_bounds = array<i64: 64, 32>}, {pipeline_mode = #tpu.pipeline_mode<synchronous>, transform_indices = @transform_4, window_bounds = array<i64: 1, 32>}, {pipeline_mode = #tpu.pipeline_mode<synchronous>, transform_indices = @transform_5, window_bounds = array<i64: 1, 32>}, {pipeline_mode = #tpu.pipeline_mode<synchronous>, transform_indices = @transform_6, window_bounds = array<i64: 1, 32>}, {transform_indices = @transform_7, window_bounds = array<i64: 1, 8, 32>}]} {
    %c0 = arith.constant 0 : index
    %c0_0 = arith.constant 0 : index
    %c0_1 = arith.constant 0 : index
    %0 = vector.load %arg1[%c0, %c0_0, %c0_1] : memref<1x8x32xf32, #tpu.memory_space<vmem>>, vector<1x8x32xf32>
    %1 = vector.shape_cast %0 : vector<1x8x32xf32> to vector<8x32xf32>
    %2 = arith.truncf %1 : vector<8x32xf32> to vector<8x32xbf16>
    %c0_2 = arith.constant 0 : index
    %c0_3 = arith.constant 0 : index
    %3 = vector.load %arg2[%c0_2, %c0_3] : memref<32x64xf32, #tpu.memory_space<vmem>>, vector<32x64xf32>
    %4 = arith.truncf %3 : vector<32x64xf32> to vector<32x64xbf16>
    %cst = arith.constant dense<0.000000e+00> : vector<8x64xf32>
    %5 = tpu.matmul %2, %4, %cst {dimension_numbers = #tpu.dot_dimension_numbers<[1], [0], [0], [1], [0, 0, 1, 1], [], []>} : vector<8x32xbf16>, vector<32x64xbf16>, vector<8x64xf32> -> vector<8x64xf32>
    %c0_4 = arith.constant 0 : index
    %c0_5 = arith.constant 0 : index
    %6 = vector.load %arg3[%c0_4, %c0_5] : memref<1x64xf32, #tpu.memory_space<vmem>>, vector<1x64xf32>
    %7 = vector.broadcast %6 : vector<1x64xf32> to vector<8x64xf32>
    %8 = arith.addf %5, %7 : vector<8x64xf32>
    %cst_6 = arith.constant 0.000000e+00 : f32
    %9 = vector.broadcast %cst_6 : f32 to vector<8x64xf32>
    %10 = arith.maximumf %8, %9 : vector<8x64xf32>
    %11 = arith.truncf %10 : vector<8x64xf32> to vector<8x64xbf16>
    %c0_7 = arith.constant 0 : index
    %c0_8 = arith.constant 0 : index
    %12 = vector.load %arg4[%c0_7, %c0_8] : memref<64x32xf32, #tpu.memory_space<vmem>>, vector<64x32xf32>
    %13 = arith.truncf %12 : vector<64x32xf32> to vector<64x32xbf16>
    %cst_9 = arith.constant dense<0.000000e+00> : vector<8x32xf32>
    %14 = tpu.matmul %11, %13, %cst_9 {dimension_numbers = #tpu.dot_dimension_numbers<[1], [0], [0], [1], [0, 0, 1, 1], [], []>} : vector<8x64xbf16>, vector<64x32xbf16>, vector<8x32xf32> -> vector<8x32xf32>
    %c0_10 = arith.constant 0 : index
    %c0_11 = arith.constant 0 : index
    %15 = vector.load %arg5[%c0_10, %c0_11] : memref<1x32xf32, #tpu.memory_space<vmem>>, vector<1x32xf32>
    %16 = vector.broadcast %15 : vector<1x32xf32> to vector<8x32xf32>
    %17 = arith.addf %14, %16 : vector<8x32xf32>
    %18 = arith.addf %1, %17 : vector<8x32xf32>
    %cst_12 = arith.constant dense<0.000000e+00> : vector<8xf32>
    %19 = vector.multi_reduction <add>, %18, %cst_12 [1] : vector<8x32xf32> to vector<8xf32>
    %20 = vector.shape_cast %19 : vector<8xf32> to vector<8x1xf32>
    %cst_13 = arith.constant 3.200000e+01 : f32
    %21 = vector.broadcast %cst_13 : f32 to vector<8x1xf32>
    %22 = arith.divf %20, %21 : vector<8x1xf32>
    %23 = vector.broadcast %22 : vector<8x1xf32> to vector<8x32xf32>
    %24 = arith.subf %18, %23 : vector<8x32xf32>
    %25 = arith.mulf %24, %24 : vector<8x32xf32>
    %cst_14 = arith.constant dense<0.000000e+00> : vector<8xf32>
    %26 = vector.multi_reduction <add>, %25, %cst_14 [1] : vector<8x32xf32> to vector<8xf32>
    %27 = vector.shape_cast %26 : vector<8xf32> to vector<8x1xf32>
    %cst_15 = arith.constant 3.200000e+01 : f32
    %28 = vector.broadcast %cst_15 : f32 to vector<8x1xf32>
    %29 = arith.divf %27, %28 : vector<8x1xf32>
    %30 = vector.broadcast %22 : vector<8x1xf32> to vector<8x32xf32>
    %31 = arith.subf %18, %30 : vector<8x32xf32>
    %cst_16 = arith.constant 9.99999974E-6 : f32
    %32 = vector.broadcast %cst_16 : f32 to vector<8x1xf32>
    %33 = arith.addf %29, %32 : vector<8x1xf32>
    %34 = math.rsqrt %33 : vector<8x1xf32>
    %35 = vector.broadcast %34 : vector<8x1xf32> to vector<8x32xf32>
    %36 = arith.mulf %31, %35 : vector<8x32xf32>
    %c0_17 = arith.constant 0 : index
    %c0_18 = arith.constant 0 : index
    %37 = vector.load %arg6[%c0_17, %c0_18] : memref<1x32xf32, #tpu.memory_space<vmem>>, vector<1x32xf32>
    %38 = vector.broadcast %37 : vector<1x32xf32> to vector<8x32xf32>
    %39 = arith.mulf %36, %38 : vector<8x32xf32>
    %c0_19 = arith.constant 0 : index
    %c0_20 = arith.constant 0 : index
    %40 = vector.load %arg7[%c0_19, %c0_20] : memref<1x32xf32, #tpu.memory_space<vmem>>, vector<1x32xf32>
    %41 = vector.broadcast %40 : vector<1x32xf32> to vector<8x32xf32>
    %42 = arith.addf %39, %41 : vector<8x32xf32>
    %c0_21 = arith.constant 0 : index
    %c0_22 = arith.constant 0 : index
    %c0_23 = arith.constant 0 : index
    %43 = vector.load %arg8[%c0_21, %c0_22, %c0_23] : memref<1x8x32xf32, #tpu.memory_space<vmem>>, vector<1x8x32xf32>
    %44 = vector.shape_cast %43 : vector<1x8x32xf32> to vector<8x32xf32>
    %45 = vector.shape_cast %42 : vector<8x32xf32> to vector<1x8x32xf32>
    tpu.vector_store %arg8[%c0_21, %c0_22, %c0_23], %45 {strides = array<i32>} : memref<1x8x32xf32, #tpu.memory_space<vmem>>, vector<1x8x32xf32>,
    return
  }
  func.func @transform_0(%arg0: i32) -> (i32, i32, i32) {
    %c0_i32 = arith.constant 0 : i32
    %c0_i32_0 = arith.constant 0 : i32
    %c0_i32_1 = arith.constant 0 : i32
    return %arg0, %c0_i32, %c0_i32_0 : i32, i32, i32
  }
  func.func @transform_1(%arg0: i32) -> (i32, i32) {
    %c0_i32 = arith.constant 0 : i32
    %c0_i32_0 = arith.constant 0 : i32
    %c0_i32_1 = arith.constant 0 : i32
    return %c0_i32, %c0_i32_0 : i32, i32
  }
  func.func @transform_2(%arg0: i32) -> (i32, i32) {
    %c0_i32 = arith.constant 0 : i32
    %c0_i32_0 = arith.constant 0 : i32
    %c0_i32_1 = arith.constant 0 : i32
    return %c0_i32, %c0_i32_0 : i32, i32
  }
  func.func @transform_3(%arg0: i32) -> (i32, i32) {
    %c0_i32 = arith.constant 0 : i32
    %c0_i32_0 = arith.constant 0 : i32
    %c0_i32_1 = arith.constant 0 : i32
    return %c0_i32, %c0_i32_0 : i32, i32
  }
  func.func @transform_4(%arg0: i32) -> (i32, i32) {
    %c0_i32 = arith.constant 0 : i32
    %c0_i32_0 = arith.constant 0 : i32
    %c0_i32_1 = arith.constant 0 : i32
    return %c0_i32, %c0_i32_0 : i32, i32
  }
  func.func @transform_5(%arg0: i32) -> (i32, i32) {
    %c0_i32 = arith.constant 0 : i32
    %c0_i32_0 = arith.constant 0 : i32
    %c0_i32_1 = arith.constant 0 : i32
    return %c0_i32, %c0_i32_0 : i32, i32
  }
  func.func @transform_6(%arg0: i32) -> (i32, i32) {
    %c0_i32 = arith.constant 0 : i32
    %c0_i32_0 = arith.constant 0 : i32
    %c0_i32_1 = arith.constant 0 : i32
    return %c0_i32, %c0_i32_0 : i32, i32
  }
  func.func @transform_7(%arg0: i32) -> (i32, i32, i32) {
    %c0_i32 = arith.constant 0 : i32
    %c0_i32_0 = arith.constant 0 : i32
    %c0_i32_1 = arith.constant 0 : i32
    return %arg0, %c0_i32, %c0_i32_0 : i32, i32, i32
  }
}

module attributes {stable_mosaic.version = 11 : i64} {
  func.func @_mha_block_kernel(%arg0: i32, %arg1: memref<1x8x32xf32, #tpu.memory_space<vmem>>, %arg2: memref<1x8x32xf32, #tpu.memory_space<vmem>>, %arg3: memref<1x1x8x8xf32, #tpu.memory_space<vmem>>, %arg4: memref<32x96xf32, #tpu.memory_space<vmem>>, %arg5: memref<1x96xf32, #tpu.memory_space<vmem>>, %arg6: memref<32x32xf32, #tpu.memory_space<vmem>>, %arg7: memref<1x32xf32, #tpu.memory_space<vmem>>, %arg8: memref<1x32xf32, #tpu.memory_space<vmem>>, %arg9: memref<1x32xf32, #tpu.memory_space<vmem>>, %arg10: memref<1x8x32xf32, #tpu.memory_space<vmem>>) attributes {dimension_semantics = [#tpu.dimension_semantics<parallel>], iteration_bounds = array<i64: 2>, scalar_prefetch = 0 : i64, scratch_operands = 0 : i64, tpu.core_type = #tpu.core_type<tc>, window_params = [{transform_indices = @transform_0, window_bounds = array<i64: 1, 8, 32>}, {transform_indices = @transform_1, window_bounds = array<i64: 1, 8, 32>}, {transform_indices = @transform_2, window_bounds = array<i64: 1, 1, 8, 8>}, {pipeline_mode = #tpu.pipeline_mode<synchronous>, transform_indices = @transform_3, window_bounds = array<i64: 32, 96>}, {pipeline_mode = #tpu.pipeline_mode<synchronous>, transform_indices = @transform_4, window_bounds = array<i64: 1, 96>}, {pipeline_mode = #tpu.pipeline_mode<synchronous>, transform_indices = @transform_5, window_bounds = array<i64: 32, 32>}, {pipeline_mode = #tpu.pipeline_mode<synchronous>, transform_indices = @transform_6, window_bounds = array<i64: 1, 32>}, {pipeline_mode = #tpu.pipeline_mode<synchronous>, transform_indices = @transform_7, window_bounds = array<i64: 1, 32>}, {pipeline_mode = #tpu.pipeline_mode<synchronous>, transform_indices = @transform_8, window_bounds = array<i64: 1, 32>}, {transform_indices = @transform_9, window_bounds = array<i64: 1, 8, 32>}]} {
    %c0 = arith.constant 0 : index
    %c0_0 = arith.constant 0 : index
    %c0_1 = arith.constant 0 : index
    %0 = vector.load %arg1[%c0, %c0_0, %c0_1] : memref<1x8x32xf32, #tpu.memory_space<vmem>>, vector<1x8x32xf32>
    %1 = vector.shape_cast %0 : vector<1x8x32xf32> to vector<8x32xf32>
    %c0_2 = arith.constant 0 : index
    %c0_3 = arith.constant 0 : index
    %2 = vector.load %arg5[%c0_2, %c0_3] : memref<1x96xf32, #tpu.memory_space<vmem>>, vector<1x96xf32>
    %3 = arith.truncf %1 : vector<8x32xf32> to vector<8x32xbf16>
    %c0_4 = arith.constant 0 : index
    %c0_5 = arith.constant 0 : index
    %4 = vector.load %arg4[%c0_4, %c0_5] : memref<32x96xf32, #tpu.memory_space<vmem>>, vector<32x96xf32>
    %5 = arith.truncf %4 : vector<32x96xf32> to vector<32x96xbf16>
    %cst = arith.constant dense<0.000000e+00> : vector<8x96xf32>
    %6 = tpu.matmul %3, %5, %cst {dimension_numbers = #tpu.dot_dimension_numbers<[1], [0], [0], [1], [0, 0, 1, 1], [], []>} : vector<8x32xbf16>, vector<32x96xbf16>, vector<8x96xf32> -> vector<8x96xf32>
    %7 = vector.broadcast %2 : vector<1x96xf32> to vector<8x96xf32>
    %8 = arith.addf %6, %7 : vector<8x96xf32>
    %9 = vector.extract_strided_slice %8 {offsets = [0, 0], sizes = [8, 32], strides = [1, 1]} : vector<8x96xf32> to vector<8x32xf32>
    %10 = vector.extract_strided_slice %8 {offsets = [0, 32], sizes = [8, 32], strides = [1, 1]} : vector<8x96xf32> to vector<8x32xf32>
    %11 = vector.extract_strided_slice %8 {offsets = [0, 64], sizes = [8, 32], strides = [1, 1]} : vector<8x96xf32> to vector<8x32xf32>
    %c0_6 = arith.constant 0 : index
    %c0_7 = arith.constant 0 : index
    %c0_8 = arith.constant 0 : index
    %c0_9 = arith.constant 0 : index
    %12 = vector.load %arg3[%c0_6, %c0_7, %c0_8, %c0_9] : memref<1x1x8x8xf32, #tpu.memory_space<vmem>>, vector<1x1x8x8xf32>
    %13 = vector.shape_cast %12 : vector<1x1x8x8xf32> to vector<8x8xf32>
    %cst_10 = arith.constant 1.000000e+00 : f32
    %14 = vector.broadcast %cst_10 : f32 to vector<8x8xf32>
    %15 = arith.subf %13, %14 : vector<8x8xf32>
    %cst_11 = arith.constant 1.000000e+09 : f32
    %16 = vector.broadcast %cst_11 : f32 to vector<8x8xf32>
    %17 = arith.mulf %15, %16 : vector<8x8xf32>
    %18 = vector.extract_strided_slice %9 {offsets = [0, 0], sizes = [8, 8], strides = [1, 1]} : vector<8x32xf32> to vector<8x8xf32>
    %19 = arith.truncf %18 : vector<8x8xf32> to vector<8x8xbf16>
    %20 = vector.extract_strided_slice %10 {offsets = [0, 0], sizes = [8, 8], strides = [1, 1]} : vector<8x32xf32> to vector<8x8xf32>
    %21 = arith.truncf %20 : vector<8x8xf32> to vector<8x8xbf16>
    %22 = vector.extract_strided_slice %11 {offsets = [0, 0], sizes = [8, 8], strides = [1, 1]} : vector<8x32xf32> to vector<8x8xf32>
    %23 = arith.truncf %22 : vector<8x8xf32> to vector<8x8xbf16>
    %cst_12 = arith.constant dense<0.000000e+00> : vector<8x8xf32>
    %24 = tpu.matmul %19, %21, %cst_12 {dimension_numbers = #tpu.dot_dimension_numbers<[1], [1], [0], [0], [0, 0, 1, 0], [], []>} : vector<8x8xbf16>, vector<8x8xbf16>, vector<8x8xf32> -> vector<8x8xf32>
    %cst_13 = arith.constant 0.353553385 : f32
    %25 = vector.broadcast %cst_13 : f32 to vector<8x8xf32>
    %26 = arith.mulf %24, %25 : vector<8x8xf32>
    %27 = arith.addf %26, %17 : vector<8x8xf32>
    %cst_14 = arith.constant dense<0xFF800000> : vector<8xf32>
    %28 = vector.multi_reduction <maximumf>, %27, %cst_14 [1] : vector<8x8xf32> to vector<8xf32>
    %29 = vector.shape_cast %28 : vector<8xf32> to vector<8x1xf32>
    %30 = vector.broadcast %29 : vector<8x1xf32> to vector<8x8xf32>
    %31 = arith.subf %27, %30 : vector<8x8xf32>
    %32 = math.exp %31 : vector<8x8xf32>
    %cst_15 = arith.constant dense<0.000000e+00> : vector<8xf32>
    %33 = vector.multi_reduction <add>, %32, %cst_15 [1] : vector<8x8xf32> to vector<8xf32>
    %34 = vector.shape_cast %33 : vector<8xf32> to vector<8x1xf32>
    %35 = tpu.reciprocal %34 {approx = true} : vector<8x1xf32> -> vector<8x1xf32>
    %36 = vector.broadcast %35 : vector<8x1xf32> to vector<8x8xf32>
    %37 = arith.mulf %32, %36 : vector<8x8xf32>
    %38 = arith.truncf %37 : vector<8x8xf32> to vector<8x8xbf16>
    %cst_16 = arith.constant dense<0.000000e+00> : vector<8x8xf32>
    %39 = tpu.matmul %38, %23, %cst_16 {dimension_numbers = #tpu.dot_dimension_numbers<[1], [0], [0], [1], [0, 0, 1, 1], [], []>} : vector<8x8xbf16>, vector<8x8xbf16>, vector<8x8xf32> -> vector<8x8xf32>
    %40 = vector.extract_strided_slice %9 {offsets = [0, 8], sizes = [8, 8], strides = [1, 1]} : vector<8x32xf32> to vector<8x8xf32>
    %41 = arith.truncf %40 : vector<8x8xf32> to vector<8x8xbf16>
    %42 = vector.extract_strided_slice %10 {offsets = [0, 8], sizes = [8, 8], strides = [1, 1]} : vector<8x32xf32> to vector<8x8xf32>
    %43 = arith.truncf %42 : vector<8x8xf32> to vector<8x8xbf16>
    %44 = vector.extract_strided_slice %11 {offsets = [0, 8], sizes = [8, 8], strides = [1, 1]} : vector<8x32xf32> to vector<8x8xf32>
    %45 = arith.truncf %44 : vector<8x8xf32> to vector<8x8xbf16>
    %cst_17 = arith.constant dense<0.000000e+00> : vector<8x8xf32>
    %46 = tpu.matmul %41, %43, %cst_17 {dimension_numbers = #tpu.dot_dimension_numbers<[1], [1], [0], [0], [0, 0, 1, 0], [], []>} : vector<8x8xbf16>, vector<8x8xbf16>, vector<8x8xf32> -> vector<8x8xf32>
    %cst_18 = arith.constant 0.353553385 : f32
    %47 = vector.broadcast %cst_18 : f32 to vector<8x8xf32>
    %48 = arith.mulf %46, %47 : vector<8x8xf32>
    %49 = arith.addf %48, %17 : vector<8x8xf32>
    %cst_19 = arith.constant dense<0xFF800000> : vector<8xf32>
    %50 = vector.multi_reduction <maximumf>, %49, %cst_19 [1] : vector<8x8xf32> to vector<8xf32>
    %51 = vector.shape_cast %50 : vector<8xf32> to vector<8x1xf32>
    %52 = vector.broadcast %51 : vector<8x1xf32> to vector<8x8xf32>
    %53 = arith.subf %49, %52 : vector<8x8xf32>
    %54 = math.exp %53 : vector<8x8xf32>
    %cst_20 = arith.constant dense<0.000000e+00> : vector<8xf32>
    %55 = vector.multi_reduction <add>, %54, %cst_20 [1] : vector<8x8xf32> to vector<8xf32>
    %56 = vector.shape_cast %55 : vector<8xf32> to vector<8x1xf32>
    %57 = tpu.reciprocal %56 {approx = true} : vector<8x1xf32> -> vector<8x1xf32>
    %58 = vector.broadcast %57 : vector<8x1xf32> to vector<8x8xf32>
    %59 = arith.mulf %54, %58 : vector<8x8xf32>
    %60 = arith.truncf %59 : vector<8x8xf32> to vector<8x8xbf16>
    %cst_21 = arith.constant dense<0.000000e+00> : vector<8x8xf32>
    %61 = tpu.matmul %60, %45, %cst_21 {dimension_numbers = #tpu.dot_dimension_numbers<[1], [0], [0], [1], [0, 0, 1, 1], [], []>} : vector<8x8xbf16>, vector<8x8xbf16>, vector<8x8xf32> -> vector<8x8xf32>
    %62 = vector.extract_strided_slice %9 {offsets = [0, 16], sizes = [8, 8], strides = [1, 1]} : vector<8x32xf32> to vector<8x8xf32>
    %63 = arith.truncf %62 : vector<8x8xf32> to vector<8x8xbf16>
    %64 = vector.extract_strided_slice %10 {offsets = [0, 16], sizes = [8, 8], strides = [1, 1]} : vector<8x32xf32> to vector<8x8xf32>
    %65 = arith.truncf %64 : vector<8x8xf32> to vector<8x8xbf16>
    %66 = vector.extract_strided_slice %11 {offsets = [0, 16], sizes = [8, 8], strides = [1, 1]} : vector<8x32xf32> to vector<8x8xf32>
    %67 = arith.truncf %66 : vector<8x8xf32> to vector<8x8xbf16>
    %cst_22 = arith.constant dense<0.000000e+00> : vector<8x8xf32>
    %68 = tpu.matmul %63, %65, %cst_22 {dimension_numbers = #tpu.dot_dimension_numbers<[1], [1], [0], [0], [0, 0, 1, 0], [], []>} : vector<8x8xbf16>, vector<8x8xbf16>, vector<8x8xf32> -> vector<8x8xf32>
    %cst_23 = arith.constant 0.353553385 : f32
    %69 = vector.broadcast %cst_23 : f32 to vector<8x8xf32>
    %70 = arith.mulf %68, %69 : vector<8x8xf32>
    %71 = arith.addf %70, %17 : vector<8x8xf32>
    %cst_24 = arith.constant dense<0xFF800000> : vector<8xf32>
    %72 = vector.multi_reduction <maximumf>, %71, %cst_24 [1] : vector<8x8xf32> to vector<8xf32>
    %73 = vector.shape_cast %72 : vector<8xf32> to vector<8x1xf32>
    %74 = vector.broadcast %73 : vector<8x1xf32> to vector<8x8xf32>
    %75 = arith.subf %71, %74 : vector<8x8xf32>
    %76 = math.exp %75 : vector<8x8xf32>
    %cst_25 = arith.constant dense<0.000000e+00> : vector<8xf32>
    %77 = vector.multi_reduction <add>, %76, %cst_25 [1] : vector<8x8xf32> to vector<8xf32>
    %78 = vector.shape_cast %77 : vector<8xf32> to vector<8x1xf32>
    %79 = tpu.reciprocal %78 {approx = true} : vector<8x1xf32> -> vector<8x1xf32>
    %80 = vector.broadcast %79 : vector<8x1xf32> to vector<8x8xf32>
    %81 = arith.mulf %76, %80 : vector<8x8xf32>
    %82 = arith.truncf %81 : vector<8x8xf32> to vector<8x8xbf16>
    %cst_26 = arith.constant dense<0.000000e+00> : vector<8x8xf32>
    %83 = tpu.matmul %82, %67, %cst_26 {dimension_numbers = #tpu.dot_dimension_numbers<[1], [0], [0], [1], [0, 0, 1, 1], [], []>} : vector<8x8xbf16>, vector<8x8xbf16>, vector<8x8xf32> -> vector<8x8xf32>
    %84 = vector.extract_strided_slice %9 {offsets = [0, 24], sizes = [8, 8], strides = [1, 1]} : vector<8x32xf32> to vector<8x8xf32>
    %85 = arith.truncf %84 : vector<8x8xf32> to vector<8x8xbf16>
    %86 = vector.extract_strided_slice %10 {offsets = [0, 24], sizes = [8, 8], strides = [1, 1]} : vector<8x32xf32> to vector<8x8xf32>
    %87 = arith.truncf %86 : vector<8x8xf32> to vector<8x8xbf16>
    %88 = vector.extract_strided_slice %11 {offsets = [0, 24], sizes = [8, 8], strides = [1, 1]} : vector<8x32xf32> to vector<8x8xf32>
    %89 = arith.truncf %88 : vector<8x8xf32> to vector<8x8xbf16>
    %cst_27 = arith.constant dense<0.000000e+00> : vector<8x8xf32>
    %90 = tpu.matmul %85, %87, %cst_27 {dimension_numbers = #tpu.dot_dimension_numbers<[1], [1], [0], [0], [0, 0, 1, 0], [], []>} : vector<8x8xbf16>, vector<8x8xbf16>, vector<8x8xf32> -> vector<8x8xf32>
    %cst_28 = arith.constant 0.353553385 : f32
    %91 = vector.broadcast %cst_28 : f32 to vector<8x8xf32>
    %92 = arith.mulf %90, %91 : vector<8x8xf32>
    %93 = arith.addf %92, %17 : vector<8x8xf32>
    %cst_29 = arith.constant dense<0xFF800000> : vector<8xf32>
    %94 = vector.multi_reduction <maximumf>, %93, %cst_29 [1] : vector<8x8xf32> to vector<8xf32>
    %95 = vector.shape_cast %94 : vector<8xf32> to vector<8x1xf32>
    %96 = vector.broadcast %95 : vector<8x1xf32> to vector<8x8xf32>
    %97 = arith.subf %93, %96 : vector<8x8xf32>
    %98 = math.exp %97 : vector<8x8xf32>
    %cst_30 = arith.constant dense<0.000000e+00> : vector<8xf32>
    %99 = vector.multi_reduction <add>, %98, %cst_30 [1] : vector<8x8xf32> to vector<8xf32>
    %100 = vector.shape_cast %99 : vector<8xf32> to vector<8x1xf32>
    %101 = tpu.reciprocal %100 {approx = true} : vector<8x1xf32> -> vector<8x1xf32>
    %102 = vector.broadcast %101 : vector<8x1xf32> to vector<8x8xf32>
    %103 = arith.mulf %98, %102 : vector<8x8xf32>
    %104 = arith.truncf %103 : vector<8x8xf32> to vector<8x8xbf16>
    %cst_31 = arith.constant dense<0.000000e+00> : vector<8x8xf32>
    %105 = tpu.matmul %104, %89, %cst_31 {dimension_numbers = #tpu.dot_dimension_numbers<[1], [0], [0], [1], [0, 0, 1, 1], [], []>} : vector<8x8xbf16>, vector<8x8xbf16>, vector<8x8xf32> -> vector<8x8xf32>
    %106 = tpu.concatenate %39, %61, %83, %105 in 1 : vector<8x8xf32>, vector<8x8xf32>, vector<8x8xf32>, vector<8x8xf32> -> vector<8x32xf32>
    %107 = arith.truncf %106 : vector<8x32xf32> to vector<8x32xbf16>
    %c0_32 = arith.constant 0 : index
    %c0_33 = arith.constant 0 : index
    %108 = vector.load %arg6[%c0_32, %c0_33] : memref<32x32xf32, #tpu.memory_space<vmem>>, vector<32x32xf32>
    %109 = arith.truncf %108 : vector<32x32xf32> to vector<32x32xbf16>
    %cst_34 = arith.constant dense<0.000000e+00> : vector<8x32xf32>
    %110 = tpu.matmul %107, %109, %cst_34 {dimension_numbers = #tpu.dot_dimension_numbers<[1], [0], [0], [1], [0, 0, 1, 1], [], []>} : vector<8x32xbf16>, vector<32x32xbf16>, vector<8x32xf32> -> vector<8x32xf32>
    %c0_35 = arith.constant 0 : index
    %c0_36 = arith.constant 0 : index
    %111 = vector.load %arg7[%c0_35, %c0_36] : memref<1x32xf32, #tpu.memory_space<vmem>>, vector<1x32xf32>
    %112 = vector.broadcast %111 : vector<1x32xf32> to vector<8x32xf32>
    %113 = arith.addf %110, %112 : vector<8x32xf32>
    %114 = arith.addf %1, %113 : vector<8x32xf32>
    %cst_37 = arith.constant dense<0.000000e+00> : vector<8xf32>
    %115 = vector.multi_reduction <add>, %114, %cst_37 [1] : vector<8x32xf32> to vector<8xf32>
    %116 = vector.shape_cast %115 : vector<8xf32> to vector<8x1xf32>
    %cst_38 = arith.constant 3.200000e+01 : f32
    %117 = vector.broadcast %cst_38 : f32 to vector<8x1xf32>
    %118 = arith.divf %116, %117 : vector<8x1xf32>
    %119 = vector.broadcast %118 : vector<8x1xf32> to vector<8x32xf32>
    %120 = arith.subf %114, %119 : vector<8x32xf32>
    %121 = arith.mulf %120, %120 : vector<8x32xf32>
    %cst_39 = arith.constant dense<0.000000e+00> : vector<8xf32>
    %122 = vector.multi_reduction <add>, %121, %cst_39 [1] : vector<8x32xf32> to vector<8xf32>
    %123 = vector.shape_cast %122 : vector<8xf32> to vector<8x1xf32>
    %cst_40 = arith.constant 3.200000e+01 : f32
    %124 = vector.broadcast %cst_40 : f32 to vector<8x1xf32>
    %125 = arith.divf %123, %124 : vector<8x1xf32>
    %126 = vector.broadcast %118 : vector<8x1xf32> to vector<8x32xf32>
    %127 = arith.subf %114, %126 : vector<8x32xf32>
    %cst_41 = arith.constant 9.99999974E-6 : f32
    %128 = vector.broadcast %cst_41 : f32 to vector<8x1xf32>
    %129 = arith.addf %125, %128 : vector<8x1xf32>
    %130 = math.rsqrt %129 : vector<8x1xf32>
    %131 = vector.broadcast %130 : vector<8x1xf32> to vector<8x32xf32>
    %132 = arith.mulf %127, %131 : vector<8x32xf32>
    %c0_42 = arith.constant 0 : index
    %c0_43 = arith.constant 0 : index
    %133 = vector.load %arg8[%c0_42, %c0_43] : memref<1x32xf32, #tpu.memory_space<vmem>>, vector<1x32xf32>
    %134 = vector.broadcast %133 : vector<1x32xf32> to vector<8x32xf32>
    %135 = arith.mulf %132, %134 : vector<8x32xf32>
    %c0_44 = arith.constant 0 : index
    %c0_45 = arith.constant 0 : index
    %136 = vector.load %arg9[%c0_44, %c0_45] : memref<1x32xf32, #tpu.memory_space<vmem>>, vector<1x32xf32>
    %137 = vector.broadcast %136 : vector<1x32xf32> to vector<8x32xf32>
    %138 = arith.addf %135, %137 : vector<8x32xf32>
    %c0_46 = arith.constant 0 : index
    %c0_47 = arith.constant 0 : index
    %c0_48 = arith.constant 0 : index
    %139 = vector.load %arg10[%c0_46, %c0_47, %c0_48] : memref<1x8x32xf32, #tpu.memory_space<vmem>>, vector<1x8x32xf32>
    %140 = vector.shape_cast %139 : vector<1x8x32xf32> to vector<8x32xf32>
    %141 = vector.shape_cast %138 : vector<8x32xf32> to vector<1x8x32xf32>
    tpu.vector_store %arg10[%c0_46, %c0_47, %c0_48], %141 {strides = array<i32>} : memref<1x8x32xf32, #tpu.memory_space<vmem>>, vector<1x8x32xf32>,
    return
  }
  func.func @transform_0(%arg0: i32) -> (i32, i32, i32) {
    %c0_i32 = arith.constant 0 : i32
    %c0_i32_0 = arith.constant 0 : i32
    %c0_i32_1 = arith.constant 0 : i32
    return %arg0, %c0_i32, %c0_i32_0 : i32, i32, i32
  }
  func.func @transform_1(%arg0: i32) -> (i32, i32, i32) {
    %c0_i32 = arith.constant 0 : i32
    %c0_i32_0 = arith.constant 0 : i32
    %c0_i32_1 = arith.constant 0 : i32
    return %arg0, %c0_i32, %c0_i32_0 : i32, i32, i32
  }
  func.func @transform_2(%arg0: i32) -> (i32, i32, i32, i32) {
    %c0_i32 = arith.constant 0 : i32
    %c0_i32_0 = arith.constant 0 : i32
    %c0_i32_1 = arith.constant 0 : i32
    %c0_i32_2 = arith.constant 0 : i32
    return %arg0, %c0_i32, %c0_i32_0, %c0_i32_1 : i32, i32, i32, i32
  }
  func.func @transform_3(%arg0: i32) -> (i32, i32) {
    %c0_i32 = arith.constant 0 : i32
    %c0_i32_0 = arith.constant 0 : i32
    %c0_i32_1 = arith.constant 0 : i32
    return %c0_i32, %c0_i32_0 : i32, i32
  }
  func.func @transform_4(%arg0: i32) -> (i32, i32) {
    %c0_i32 = arith.constant 0 : i32
    %c0_i32_0 = arith.constant 0 : i32
    %c0_i32_1 = arith.constant 0 : i32
    return %c0_i32, %c0_i32_0 : i32, i32
  }
  func.func @transform_5(%arg0: i32) -> (i32, i32) {
    %c0_i32 = arith.constant 0 : i32
    %c0_i32_0 = arith.constant 0 : i32
    %c0_i32_1 = arith.constant 0 : i32
    return %c0_i32, %c0_i32_0 : i32, i32
  }
  func.func @transform_6(%arg0: i32) -> (i32, i32) {
    %c0_i32 = arith.constant 0 : i32
    %c0_i32_0 = arith.constant 0 : i32
    %c0_i32_1 = arith.constant 0 : i32
    return %c0_i32, %c0_i32_0 : i32, i32
  }
  func.func @transform_7(%arg0: i32) -> (i32, i32) {
    %c0_i32 = arith.constant 0 : i32
    %c0_i32_0 = arith.constant 0 : i32
    %c0_i32_1 = arith.constant 0 : i32
    return %c0_i32, %c0_i32_0 : i32, i32
  }
  func.func @transform_8(%arg0: i32) -> (i32, i32) {
    %c0_i32 = arith.constant 0 : i32
    %c0_i32_0 = arith.constant 0 : i32
    %c0_i32_1 = arith.constant 0 : i32
    return %c0_i32, %c0_i32_0 : i32, i32
  }
  func.func @transform_9(%arg0: i32) -> (i32, i32, i32) {
    %c0_i32 = arith.constant 0 : i32
    %c0_i32_0 = arith.constant 0 : i32
    %c0_i32_1 = arith.constant 0 : i32
    return %arg0, %c0_i32, %c0_i32_0 : i32, i32, i32
  }
}

module attributes {stable_mosaic.version = 11 : i64} {
  func.func @_mha_block_kernel(%arg0: i32, %arg1: memref<1x8x32xf32, #tpu.memory_space<vmem>>, %arg2: memref<1x8x32xf32, #tpu.memory_space<vmem>>, %arg3: memref<1x1x8x8xf32, #tpu.memory_space<vmem>>, %arg4: memref<32x96xf32, #tpu.memory_space<vmem>>, %arg5: memref<1x96xf32, #tpu.memory_space<vmem>>, %arg6: memref<32x32xf32, #tpu.memory_space<vmem>>, %arg7: memref<1x32xf32, #tpu.memory_space<vmem>>, %arg8: memref<1x32xf32, #tpu.memory_space<vmem>>, %arg9: memref<1x32xf32, #tpu.memory_space<vmem>>, %arg10: memref<1x8x32xf32, #tpu.memory_space<vmem>>, %arg11: memref<1x4x8x8xf32, #tpu.memory_space<vmem>>) attributes {dimension_semantics = [#tpu.dimension_semantics<parallel>], iteration_bounds = array<i64: 2>, scalar_prefetch = 0 : i64, scratch_operands = 0 : i64, tpu.core_type = #tpu.core_type<tc>, window_params = [{transform_indices = @transform_0, window_bounds = array<i64: 1, 8, 32>}, {transform_indices = @transform_1, window_bounds = array<i64: 1, 8, 32>}, {transform_indices = @transform_2, window_bounds = array<i64: 1, 1, 8, 8>}, {pipeline_mode = #tpu.pipeline_mode<synchronous>, transform_indices = @transform_3, window_bounds = array<i64: 32, 96>}, {pipeline_mode = #tpu.pipeline_mode<synchronous>, transform_indices = @transform_4, window_bounds = array<i64: 1, 96>}, {pipeline_mode = #tpu.pipeline_mode<synchronous>, transform_indices = @transform_5, window_bounds = array<i64: 32, 32>}, {pipeline_mode = #tpu.pipeline_mode<synchronous>, transform_indices = @transform_6, window_bounds = array<i64: 1, 32>}, {pipeline_mode = #tpu.pipeline_mode<synchronous>, transform_indices = @transform_7, window_bounds = array<i64: 1, 32>}, {pipeline_mode = #tpu.pipeline_mode<synchronous>, transform_indices = @transform_8, window_bounds = array<i64: 1, 32>}, {transform_indices = @transform_9, window_bounds = array<i64: 1, 8, 32>}, {transform_indices = @transform_10, window_bounds = array<i64: 1, 4, 8, 8>}]} {
    %c0 = arith.constant 0 : index
    %c0_0 = arith.constant 0 : index
    %c0_1 = arith.constant 0 : index
    %0 = vector.load %arg1[%c0, %c0_0, %c0_1] : memref<1x8x32xf32, #tpu.memory_space<vmem>>, vector<1x8x32xf32>
    %1 = vector.shape_cast %0 : vector<1x8x32xf32> to vector<8x32xf32>
    %c0_2 = arith.constant 0 : index
    %c0_3 = arith.constant 0 : index
    %2 = vector.load %arg5[%c0_2, %c0_3] : memref<1x96xf32, #tpu.memory_space<vmem>>, vector<1x96xf32>
    %c0_4 = arith.constant 0 : index
    %c0_5 = arith.constant 0 : index
    %c0_6 = arith.constant 0 : index
    %3 = vector.load %arg2[%c0_4, %c0_5, %c0_6] : memref<1x8x32xf32, #tpu.memory_space<vmem>>, vector<1x8x32xf32>
    %4 = vector.shape_cast %3 : vector<1x8x32xf32> to vector<8x32xf32>
    %c0_7 = arith.constant 0 : index
    %c0_8 = arith.constant 0 : index
    %5 = vector.load %arg4[%c0_7, %c0_8] : memref<32x96xf32, #tpu.memory_space<vmem>>, vector<32x96xf32>
    %6 = arith.truncf %1 : vector<8x32xf32> to vector<8x32xbf16>
    %7 = vector.extract_strided_slice %5 {offsets = [0, 0], sizes = [32, 32], strides = [1, 1]} : vector<32x96xf32> to vector<32x32xf32>
    %8 = arith.truncf %7 : vector<32x32xf32> to vector<32x32xbf16>
    %cst = arith.constant dense<0.000000e+00> : vector<8x32xf32>
    %9 = tpu.matmul %6, %8, %cst {dimension_numbers = #tpu.dot_dimension_numbers<[1], [0], [0], [1], [0, 0, 1, 1], [], []>} : vector<8x32xbf16>, vector<32x32xbf16>, vector<8x32xf32> -> vector<8x32xf32>
    %10 = vector.extract_strided_slice %2 {offsets = [0, 0], sizes = [1, 32], strides = [1, 1]} : vector<1x96xf32> to vector<1x32xf32>
    %11 = vector.broadcast %10 : vector<1x32xf32> to vector<8x32xf32>
    %12 = arith.addf %9, %11 : vector<8x32xf32>
    %13 = arith.truncf %4 : vector<8x32xf32> to vector<8x32xbf16>
    %14 = vector.extract_strided_slice %5 {offsets = [0, 32], sizes = [32, 64], strides = [1, 1]} : vector<32x96xf32> to vector<32x64xf32>
    %15 = arith.truncf %14 : vector<32x64xf32> to vector<32x64xbf16>
    %cst_9 = arith.constant dense<0.000000e+00> : vector<8x64xf32>
    %16 = tpu.matmul %13, %15, %cst_9 {dimension_numbers = #tpu.dot_dimension_numbers<[1], [0], [0], [1], [0, 0, 1, 1], [], []>} : vector<8x32xbf16>, vector<32x64xbf16>, vector<8x64xf32> -> vector<8x64xf32>
    %17 = vector.extract_strided_slice %2 {offsets = [0, 32], sizes = [1, 64], strides = [1, 1]} : vector<1x96xf32> to vector<1x64xf32>
    %18 = vector.broadcast %17 : vector<1x64xf32> to vector<8x64xf32>
    %19 = arith.addf %16, %18 : vector<8x64xf32>
    %20 = vector.extract_strided_slice %19 {offsets = [0, 0], sizes = [8, 32], strides = [1, 1]} : vector<8x64xf32> to vector<8x32xf32>
    %21 = vector.extract_strided_slice %19 {offsets = [0, 32], sizes = [8, 32], strides = [1, 1]} : vector<8x64xf32> to vector<8x32xf32>
    %c0_10 = arith.constant 0 : index
    %c0_11 = arith.constant 0 : index
    %c0_12 = arith.constant 0 : index
    %c0_13 = arith.constant 0 : index
    %22 = vector.load %arg3[%c0_10, %c0_11, %c0_12, %c0_13] : memref<1x1x8x8xf32, #tpu.memory_space<vmem>>, vector<1x1x8x8xf32>
    %23 = vector.shape_cast %22 : vector<1x1x8x8xf32> to vector<8x8xf32>
    %cst_14 = arith.constant 1.000000e+00 : f32
    %24 = vector.broadcast %cst_14 : f32 to vector<8x8xf32>
    %25 = arith.subf %23, %24 : vector<8x8xf32>
    %cst_15 = arith.constant 1.000000e+09 : f32
    %26 = vector.broadcast %cst_15 : f32 to vector<8x8xf32>
    %27 = arith.mulf %25, %26 : vector<8x8xf32>
    %28 = vector.extract_strided_slice %12 {offsets = [0, 0], sizes = [8, 8], strides = [1, 1]} : vector<8x32xf32> to vector<8x8xf32>
    %29 = arith.truncf %28 : vector<8x8xf32> to vector<8x8xbf16>
    %30 = vector.extract_strided_slice %20 {offsets = [0, 0], sizes = [8, 8], strides = [1, 1]} : vector<8x32xf32> to vector<8x8xf32>
    %31 = arith.truncf %30 : vector<8x8xf32> to vector<8x8xbf16>
    %32 = vector.extract_strided_slice %21 {offsets = [0, 0], sizes = [8, 8], strides = [1, 1]} : vector<8x32xf32> to vector<8x8xf32>
    %33 = arith.truncf %32 : vector<8x8xf32> to vector<8x8xbf16>
    %cst_16 = arith.constant dense<0.000000e+00> : vector<8x8xf32>
    %34 = tpu.matmul %29, %31, %cst_16 {dimension_numbers = #tpu.dot_dimension_numbers<[1], [1], [0], [0], [0, 0, 1, 0], [], []>} : vector<8x8xbf16>, vector<8x8xbf16>, vector<8x8xf32> -> vector<8x8xf32>
    %cst_17 = arith.constant 0.353553385 : f32
    %35 = vector.broadcast %cst_17 : f32 to vector<8x8xf32>
    %36 = arith.mulf %34, %35 : vector<8x8xf32>
    %37 = arith.addf %36, %27 : vector<8x8xf32>
    %cst_18 = arith.constant dense<0xFF800000> : vector<8xf32>
    %38 = vector.multi_reduction <maximumf>, %37, %cst_18 [1] : vector<8x8xf32> to vector<8xf32>
    %39 = vector.shape_cast %38 : vector<8xf32> to vector<8x1xf32>
    %40 = vector.broadcast %39 : vector<8x1xf32> to vector<8x8xf32>
    %41 = arith.subf %37, %40 : vector<8x8xf32>
    %42 = math.exp %41 : vector<8x8xf32>
    %cst_19 = arith.constant dense<0.000000e+00> : vector<8xf32>
    %43 = vector.multi_reduction <add>, %42, %cst_19 [1] : vector<8x8xf32> to vector<8xf32>
    %44 = vector.shape_cast %43 : vector<8xf32> to vector<8x1xf32>
    %45 = tpu.reciprocal %44 {approx = true} : vector<8x1xf32> -> vector<8x1xf32>
    %46 = vector.broadcast %45 : vector<8x1xf32> to vector<8x8xf32>
    %47 = arith.mulf %42, %46 : vector<8x8xf32>
    %48 = arith.truncf %47 : vector<8x8xf32> to vector<8x8xbf16>
    %cst_20 = arith.constant dense<0.000000e+00> : vector<8x8xf32>
    %49 = tpu.matmul %48, %33, %cst_20 {dimension_numbers = #tpu.dot_dimension_numbers<[1], [0], [0], [1], [0, 0, 1, 1], [], []>} : vector<8x8xbf16>, vector<8x8xbf16>, vector<8x8xf32> -> vector<8x8xf32>
    %c0_21 = arith.constant 0 : index
    %c0_22 = arith.constant 0 : index
    %c0_23 = arith.constant 0 : index
    %c0_24 = arith.constant 0 : index
    %50 = vector.load %arg11[%c0_21, %c0_22, %c0_23, %c0_24] : memref<1x4x8x8xf32, #tpu.memory_space<vmem>>, vector<1x1x8x8xf32>
    %51 = vector.shape_cast %50 : vector<1x1x8x8xf32> to vector<8x8xf32>
    %52 = vector.shape_cast %47 : vector<8x8xf32> to vector<1x1x8x8xf32>
    tpu.vector_store %arg11[%c0_21, %c0_22, %c0_23, %c0_24], %52 {strides = array<i32>} : memref<1x4x8x8xf32, #tpu.memory_space<vmem>>, vector<1x1x8x8xf32>,
    %53 = vector.extract_strided_slice %12 {offsets = [0, 8], sizes = [8, 8], strides = [1, 1]} : vector<8x32xf32> to vector<8x8xf32>
    %54 = arith.truncf %53 : vector<8x8xf32> to vector<8x8xbf16>
    %55 = vector.extract_strided_slice %20 {offsets = [0, 8], sizes = [8, 8], strides = [1, 1]} : vector<8x32xf32> to vector<8x8xf32>
    %56 = arith.truncf %55 : vector<8x8xf32> to vector<8x8xbf16>
    %57 = vector.extract_strided_slice %21 {offsets = [0, 8], sizes = [8, 8], strides = [1, 1]} : vector<8x32xf32> to vector<8x8xf32>
    %58 = arith.truncf %57 : vector<8x8xf32> to vector<8x8xbf16>
    %cst_25 = arith.constant dense<0.000000e+00> : vector<8x8xf32>
    %59 = tpu.matmul %54, %56, %cst_25 {dimension_numbers = #tpu.dot_dimension_numbers<[1], [1], [0], [0], [0, 0, 1, 0], [], []>} : vector<8x8xbf16>, vector<8x8xbf16>, vector<8x8xf32> -> vector<8x8xf32>
    %cst_26 = arith.constant 0.353553385 : f32
    %60 = vector.broadcast %cst_26 : f32 to vector<8x8xf32>
    %61 = arith.mulf %59, %60 : vector<8x8xf32>
    %62 = arith.addf %61, %27 : vector<8x8xf32>
    %cst_27 = arith.constant dense<0xFF800000> : vector<8xf32>
    %63 = vector.multi_reduction <maximumf>, %62, %cst_27 [1] : vector<8x8xf32> to vector<8xf32>
    %64 = vector.shape_cast %63 : vector<8xf32> to vector<8x1xf32>
    %65 = vector.broadcast %64 : vector<8x1xf32> to vector<8x8xf32>
    %66 = arith.subf %62, %65 : vector<8x8xf32>
    %67 = math.exp %66 : vector<8x8xf32>
    %cst_28 = arith.constant dense<0.000000e+00> : vector<8xf32>
    %68 = vector.multi_reduction <add>, %67, %cst_28 [1] : vector<8x8xf32> to vector<8xf32>
    %69 = vector.shape_cast %68 : vector<8xf32> to vector<8x1xf32>
    %70 = tpu.reciprocal %69 {approx = true} : vector<8x1xf32> -> vector<8x1xf32>
    %71 = vector.broadcast %70 : vector<8x1xf32> to vector<8x8xf32>
    %72 = arith.mulf %67, %71 : vector<8x8xf32>
    %73 = arith.truncf %72 : vector<8x8xf32> to vector<8x8xbf16>
    %cst_29 = arith.constant dense<0.000000e+00> : vector<8x8xf32>
    %74 = tpu.matmul %73, %58, %cst_29 {dimension_numbers = #tpu.dot_dimension_numbers<[1], [0], [0], [1], [0, 0, 1, 1], [], []>} : vector<8x8xbf16>, vector<8x8xbf16>, vector<8x8xf32> -> vector<8x8xf32>
    %c0_30 = arith.constant 0 : index
    %c1 = arith.constant 1 : index
    %c0_31 = arith.constant 0 : index
    %c0_32 = arith.constant 0 : index
    %75 = vector.load %arg11[%c0_30, %c1, %c0_31, %c0_32] : memref<1x4x8x8xf32, #tpu.memory_space<vmem>>, vector<1x1x8x8xf32>
    %76 = vector.shape_cast %75 : vector<1x1x8x8xf32> to vector<8x8xf32>
    %77 = vector.shape_cast %72 : vector<8x8xf32> to vector<1x1x8x8xf32>
    tpu.vector_store %arg11[%c0_30, %c1, %c0_31, %c0_32], %77 {strides = array<i32>} : memref<1x4x8x8xf32, #tpu.memory_space<vmem>>, vector<1x1x8x8xf32>,
    %78 = vector.extract_strided_slice %12 {offsets = [0, 16], sizes = [8, 8], strides = [1, 1]} : vector<8x32xf32> to vector<8x8xf32>
    %79 = arith.truncf %78 : vector<8x8xf32> to vector<8x8xbf16>
    %80 = vector.extract_strided_slice %20 {offsets = [0, 16], sizes = [8, 8], strides = [1, 1]} : vector<8x32xf32> to vector<8x8xf32>
    %81 = arith.truncf %80 : vector<8x8xf32> to vector<8x8xbf16>
    %82 = vector.extract_strided_slice %21 {offsets = [0, 16], sizes = [8, 8], strides = [1, 1]} : vector<8x32xf32> to vector<8x8xf32>
    %83 = arith.truncf %82 : vector<8x8xf32> to vector<8x8xbf16>
    %cst_33 = arith.constant dense<0.000000e+00> : vector<8x8xf32>
    %84 = tpu.matmul %79, %81, %cst_33 {dimension_numbers = #tpu.dot_dimension_numbers<[1], [1], [0], [0], [0, 0, 1, 0], [], []>} : vector<8x8xbf16>, vector<8x8xbf16>, vector<8x8xf32> -> vector<8x8xf32>
    %cst_34 = arith.constant 0.353553385 : f32
    %85 = vector.broadcast %cst_34 : f32 to vector<8x8xf32>
    %86 = arith.mulf %84, %85 : vector<8x8xf32>
    %87 = arith.addf %86, %27 : vector<8x8xf32>
    %cst_35 = arith.constant dense<0xFF800000> : vector<8xf32>
    %88 = vector.multi_reduction <maximumf>, %87, %cst_35 [1] : vector<8x8xf32> to vector<8xf32>
    %89 = vector.shape_cast %88 : vector<8xf32> to vector<8x1xf32>
    %90 = vector.broadcast %89 : vector<8x1xf32> to vector<8x8xf32>
    %91 = arith.subf %87, %90 : vector<8x8xf32>
    %92 = math.exp %91 : vector<8x8xf32>
    %cst_36 = arith.constant dense<0.000000e+00> : vector<8xf32>
    %93 = vector.multi_reduction <add>, %92, %cst_36 [1] : vector<8x8xf32> to vector<8xf32>
    %94 = vector.shape_cast %93 : vector<8xf32> to vector<8x1xf32>
    %95 = tpu.reciprocal %94 {approx = true} : vector<8x1xf32> -> vector<8x1xf32>
    %96 = vector.broadcast %95 : vector<8x1xf32> to vector<8x8xf32>
    %97 = arith.mulf %92, %96 : vector<8x8xf32>
    %98 = arith.truncf %97 : vector<8x8xf32> to vector<8x8xbf16>
    %cst_37 = arith.constant dense<0.000000e+00> : vector<8x8xf32>
    %99 = tpu.matmul %98, %83, %cst_37 {dimension_numbers = #tpu.dot_dimension_numbers<[1], [0], [0], [1], [0, 0, 1, 1], [], []>} : vector<8x8xbf16>, vector<8x8xbf16>, vector<8x8xf32> -> vector<8x8xf32>
    %c0_38 = arith.constant 0 : index
    %c2 = arith.constant 2 : index
    %c0_39 = arith.constant 0 : index
    %c0_40 = arith.constant 0 : index
    %100 = vector.load %arg11[%c0_38, %c2, %c0_39, %c0_40] : memref<1x4x8x8xf32, #tpu.memory_space<vmem>>, vector<1x1x8x8xf32>
    %101 = vector.shape_cast %100 : vector<1x1x8x8xf32> to vector<8x8xf32>
    %102 = vector.shape_cast %97 : vector<8x8xf32> to vector<1x1x8x8xf32>
    tpu.vector_store %arg11[%c0_38, %c2, %c0_39, %c0_40], %102 {strides = array<i32>} : memref<1x4x8x8xf32, #tpu.memory_space<vmem>>, vector<1x1x8x8xf32>,
    %103 = vector.extract_strided_slice %12 {offsets = [0, 24], sizes = [8, 8], strides = [1, 1]} : vector<8x32xf32> to vector<8x8xf32>
    %104 = arith.truncf %103 : vector<8x8xf32> to vector<8x8xbf16>
    %105 = vector.extract_strided_slice %20 {offsets = [0, 24], sizes = [8, 8], strides = [1, 1]} : vector<8x32xf32> to vector<8x8xf32>
    %106 = arith.truncf %105 : vector<8x8xf32> to vector<8x8xbf16>
    %107 = vector.extract_strided_slice %21 {offsets = [0, 24], sizes = [8, 8], strides = [1, 1]} : vector<8x32xf32> to vector<8x8xf32>
    %108 = arith.truncf %107 : vector<8x8xf32> to vector<8x8xbf16>
    %cst_41 = arith.constant dense<0.000000e+00> : vector<8x8xf32>
    %109 = tpu.matmul %104, %106, %cst_41 {dimension_numbers = #tpu.dot_dimension_numbers<[1], [1], [0], [0], [0, 0, 1, 0], [], []>} : vector<8x8xbf16>, vector<8x8xbf16>, vector<8x8xf32> -> vector<8x8xf32>
    %cst_42 = arith.constant 0.353553385 : f32
    %110 = vector.broadcast %cst_42 : f32 to vector<8x8xf32>
    %111 = arith.mulf %109, %110 : vector<8x8xf32>
    %112 = arith.addf %111, %27 : vector<8x8xf32>
    %cst_43 = arith.constant dense<0xFF800000> : vector<8xf32>
    %113 = vector.multi_reduction <maximumf>, %112, %cst_43 [1] : vector<8x8xf32> to vector<8xf32>
    %114 = vector.shape_cast %113 : vector<8xf32> to vector<8x1xf32>
    %115 = vector.broadcast %114 : vector<8x1xf32> to vector<8x8xf32>
    %116 = arith.subf %112, %115 : vector<8x8xf32>
    %117 = math.exp %116 : vector<8x8xf32>
    %cst_44 = arith.constant dense<0.000000e+00> : vector<8xf32>
    %118 = vector.multi_reduction <add>, %117, %cst_44 [1] : vector<8x8xf32> to vector<8xf32>
    %119 = vector.shape_cast %118 : vector<8xf32> to vector<8x1xf32>
    %120 = tpu.reciprocal %119 {approx = true} : vector<8x1xf32> -> vector<8x1xf32>
    %121 = vector.broadcast %120 : vector<8x1xf32> to vector<8x8xf32>
    %122 = arith.mulf %117, %121 : vector<8x8xf32>
    %123 = arith.truncf %122 : vector<8x8xf32> to vector<8x8xbf16>
    %cst_45 = arith.constant dense<0.000000e+00> : vector<8x8xf32>
    %124 = tpu.matmul %123, %108, %cst_45 {dimension_numbers = #tpu.dot_dimension_numbers<[1], [0], [0], [1], [0, 0, 1, 1], [], []>} : vector<8x8xbf16>, vector<8x8xbf16>, vector<8x8xf32> -> vector<8x8xf32>
    %c0_46 = arith.constant 0 : index
    %c3 = arith.constant 3 : index
    %c0_47 = arith.constant 0 : index
    %c0_48 = arith.constant 0 : index
    %125 = vector.load %arg11[%c0_46, %c3, %c0_47, %c0_48] : memref<1x4x8x8xf32, #tpu.memory_space<vmem>>, vector<1x1x8x8xf32>
    %126 = vector.shape_cast %125 : vector<1x1x8x8xf32> to vector<8x8xf32>
    %127 = vector.shape_cast %122 : vector<8x8xf32> to vector<1x1x8x8xf32>
    tpu.vector_store %arg11[%c0_46, %c3, %c0_47, %c0_48], %127 {strides = array<i32>} : memref<1x4x8x8xf32, #tpu.memory_space<vmem>>, vector<1x1x8x8xf32>,
    %128 = tpu.concatenate %49, %74, %99, %124 in 1 : vector<8x8xf32>, vector<8x8xf32>, vector<8x8xf32>, vector<8x8xf32> -> vector<8x32xf32>
    %129 = arith.truncf %128 : vector<8x32xf32> to vector<8x32xbf16>
    %c0_49 = arith.constant 0 : index
    %c0_50 = arith.constant 0 : index
    %130 = vector.load %arg6[%c0_49, %c0_50] : memref<32x32xf32, #tpu.memory_space<vmem>>, vector<32x32xf32>
    %131 = arith.truncf %130 : vector<32x32xf32> to vector<32x32xbf16>
    %cst_51 = arith.constant dense<0.000000e+00> : vector<8x32xf32>
    %132 = tpu.matmul %129, %131, %cst_51 {dimension_numbers = #tpu.dot_dimension_numbers<[1], [0], [0], [1], [0, 0, 1, 1], [], []>} : vector<8x32xbf16>, vector<32x32xbf16>, vector<8x32xf32> -> vector<8x32xf32>
    %c0_52 = arith.constant 0 : index
    %c0_53 = arith.constant 0 : index
    %133 = vector.load %arg7[%c0_52, %c0_53] : memref<1x32xf32, #tpu.memory_space<vmem>>, vector<1x32xf32>
    %134 = vector.broadcast %133 : vector<1x32xf32> to vector<8x32xf32>
    %135 = arith.addf %132, %134 : vector<8x32xf32>
    %136 = arith.addf %1, %135 : vector<8x32xf32>
    %cst_54 = arith.constant dense<0.000000e+00> : vector<8xf32>
    %137 = vector.multi_reduction <add>, %136, %cst_54 [1] : vector<8x32xf32> to vector<8xf32>
    %138 = vector.shape_cast %137 : vector<8xf32> to vector<8x1xf32>
    %cst_55 = arith.constant 3.200000e+01 : f32
    %139 = vector.broadcast %cst_55 : f32 to vector<8x1xf32>
    %140 = arith.divf %138, %139 : vector<8x1xf32>
    %141 = vector.broadcast %140 : vector<8x1xf32> to vector<8x32xf32>
    %142 = arith.subf %136, %141 : vector<8x32xf32>
    %143 = arith.mulf %142, %142 : vector<8x32xf32>
    %cst_56 = arith.constant dense<0.000000e+00> : vector<8xf32>
    %144 = vector.multi_reduction <add>, %143, %cst_56 [1] : vector<8x32xf32> to vector<8xf32>
    %145 = vector.shape_cast %144 : vector<8xf32> to vector<8x1xf32>
    %cst_57 = arith.constant 3.200000e+01 : f32
    %146 = vector.broadcast %cst_57 : f32 to vector<8x1xf32>
    %147 = arith.divf %145, %146 : vector<8x1xf32>
    %148 = vector.broadcast %140 : vector<8x1xf32> to vector<8x32xf32>
    %149 = arith.subf %136, %148 : vector<8x32xf32>
    %cst_58 = arith.constant 9.99999974E-6 : f32
    %150 = vector.broadcast %cst_58 : f32 to vector<8x1xf32>
    %151 = arith.addf %147, %150 : vector<8x1xf32>
    %152 = math.rsqrt %151 : vector<8x1xf32>
    %153 = vector.broadcast %152 : vector<8x1xf32> to vector<8x32xf32>
    %154 = arith.mulf %149, %153 : vector<8x32xf32>
    %c0_59 = arith.constant 0 : index
    %c0_60 = arith.constant 0 : index
    %155 = vector.load %arg8[%c0_59, %c0_60] : memref<1x32xf32, #tpu.memory_space<vmem>>, vector<1x32xf32>
    %156 = vector.broadcast %155 : vector<1x32xf32> to vector<8x32xf32>
    %157 = arith.mulf %154, %156 : vector<8x32xf32>
    %c0_61 = arith.constant 0 : index
    %c0_62 = arith.constant 0 : index
    %158 = vector.load %arg9[%c0_61, %c0_62] : memref<1x32xf32, #tpu.memory_space<vmem>>, vector<1x32xf32>
    %159 = vector.broadcast %158 : vector<1x32xf32> to vector<8x32xf32>
    %160 = arith.addf %157, %159 : vector<8x32xf32>
    %c0_63 = arith.constant 0 : index
    %c0_64 = arith.constant 0 : index
    %c0_65 = arith.constant 0 : index
    %161 = vector.load %arg10[%c0_63, %c0_64, %c0_65] : memref<1x8x32xf32, #tpu.memory_space<vmem>>, vector<1x8x32xf32>
    %162 = vector.shape_cast %161 : vector<1x8x32xf32> to vector<8x32xf32>
    %163 = vector.shape_cast %160 : vector<8x32xf32> to vector<1x8x32xf32>
    tpu.vector_store %arg10[%c0_63, %c0_64, %c0_65], %163 {strides = array<i32>} : memref<1x8x32xf32, #tpu.memory_space<vmem>>, vector<1x8x32xf32>,
    return
  }
  func.func @transform_0(%arg0: i32) -> (i32, i32, i32) {
    %c0_i32 = arith.constant 0 : i32
    %c0_i32_0 = arith.constant 0 : i32
    %c0_i32_1 = arith.constant 0 : i32
    return %arg0, %c0_i32, %c0_i32_0 : i32, i32, i32
  }
  func.func @transform_1(%arg0: i32) -> (i32, i32, i32) {
    %c0_i32 = arith.constant 0 : i32
    %c0_i32_0 = arith.constant 0 : i32
    %c0_i32_1 = arith.constant 0 : i32
    return %arg0, %c0_i32, %c0_i32_0 : i32, i32, i32
  }
  func.func @transform_2(%arg0: i32) -> (i32, i32, i32, i32) {
    %c0_i32 = arith.constant 0 : i32
    %c0_i32_0 = arith.constant 0 : i32
    %c0_i32_1 = arith.constant 0 : i32
    %c0_i32_2 = arith.constant 0 : i32
    return %arg0, %c0_i32, %c0_i32_0, %c0_i32_1 : i32, i32, i32, i32
  }
  func.func @transform_3(%arg0: i32) -> (i32, i32) {
    %c0_i32 = arith.constant 0 : i32
    %c0_i32_0 = arith.constant 0 : i32
    %c0_i32_1 = arith.constant 0 : i32
    return %c0_i32, %c0_i32_0 : i32, i32
  }
  func.func @transform_4(%arg0: i32) -> (i32, i32) {
    %c0_i32 = arith.constant 0 : i32
    %c0_i32_0 = arith.constant 0 : i32
    %c0_i32_1 = arith.constant 0 : i32
    return %c0_i32, %c0_i32_0 : i32, i32
  }
  func.func @transform_5(%arg0: i32) -> (i32, i32) {
    %c0_i32 = arith.constant 0 : i32
    %c0_i32_0 = arith.constant 0 : i32
    %c0_i32_1 = arith.constant 0 : i32
    return %c0_i32, %c0_i32_0 : i32, i32
  }
  func.func @transform_6(%arg0: i32) -> (i32, i32) {
    %c0_i32 = arith.constant 0 : i32
    %c0_i32_0 = arith.constant 0 : i32
    %c0_i32_1 = arith.constant 0 : i32
    return %c0_i32, %c0_i32_0 : i32, i32
  }
  func.func @transform_7(%arg0: i32) -> (i32, i32) {
    %c0_i32 = arith.constant 0 : i32
    %c0_i32_0 = arith.constant 0 : i32
    %c0_i32_1 = arith.constant 0 : i32
    return %c0_i32, %c0_i32_0 : i32, i32
  }
  func.func @transform_8(%arg0: i32) -> (i32, i32) {
    %c0_i32 = arith.constant 0 : i32
    %c0_i32_0 = arith.constant 0 : i32
    %c0_i32_1 = arith.constant 0 : i32
    return %c0_i32, %c0_i32_0 : i32, i32
  }
  func.func @transform_9(%arg0: i32) -> (i32, i32, i32) {
    %c0_i32 = arith.constant 0 : i32
    %c0_i32_0 = arith.constant 0 : i32
    %c0_i32_1 = arith.constant 0 : i32
    return %arg0, %c0_i32, %c0_i32_0 : i32, i32, i32
  }
  func.func @transform_10(%arg0: i32) -> (i32, i32, i32, i32) {
    %c0_i32 = arith.constant 0 : i32
    %c0_i32_0 = arith.constant 0 : i32
    %c0_i32_1 = arith.constant 0 : i32
    %c0_i32_2 = arith.constant 0 : i32
    return %arg0, %c0_i32, %c0_i32_0, %c0_i32_1 : i32, i32, i32, i32
  }
}

</mosaic_0001>

<llo_original>
// kernel: transformer_decoder_layer.5
$region0: #{transformer_decoder_layer.5}
  #allocation0 [shape = 'u32[]', space=smem, size = 0x4, offset = 0x4, fixed_abs, tag = 'smem constant byte address 0x4 - core index']
  #allocation1 [shape = 'u32[144,128]{1,0:T(1,128)}', space=vmem, size = 0x12000, scoped, tag = 'internal scratch']
  %s0 = inlined_call_operand.vmem [shape: f32[2,8,32], index: 0, kind: input, shape index: {}]
  %s1 = inlined_call_operand.vmem [shape: f32[32,64], index: 1, kind: input, shape index: {}]
  %s2 = inlined_call_operand.vmem [shape: f32[1,64], index: 2, kind: input, shape index: {}]
  %s3 = inlined_call_operand.vmem [shape: f32[64,32], index: 3, kind: input, shape index: {}]
  %s4 = inlined_call_operand.vmem [shape: f32[1,32], index: 4, kind: input, shape index: {}]
  %s5 = inlined_call_operand.vmem [shape: f32[1,32], index: 5, kind: input, shape index: {}]
  %s6 = inlined_call_operand.vmem [shape: f32[1,32], index: 6, kind: input, shape index: {}]
  %s7 = inlined_call_operand.hbm [shape: f32[2,8,32], index: 7, kind: output, shape index: {}]
  %s8 = sld [smem:[#allocation0]]
  $region61: #{transformer_decoder_layer.5} parent=0
    _
  %s10 = ssub.s32 1, %s8
  %s11 = scalar_select 0, %s10, %s8
  $region1: #{transformer_decoder_layer.5} parent=0
    #allocation2 [shape = 'u8[8192]{0}', space=vmem, size = 0x2000, scoped, tag = 'output window, operand 0']
    #allocation3 [shape = 's32[2]{0}', space=sflag, size = 0x8, scoped, tag = 'scoped memory for transformer_decoder_layer.5']
    %12 = vsyncpa [#allocation3], 0
    %s13 = scalar_lea.sflag [#allocation3], 1
    %14 = vsyncpa %s13, 0
    loop: start=0, step=1, limit=4
    $region2: #{transformer_decoder_layer.5} parent=1 // loop_pre_header
      _
    $region3: #{transformer_decoder_layer.5} parent=1 // loop_header
      %s16 = sphi 0, %s20
      %p17 = scmp.ge.s32.totalorder %s16, 4
      %s26 = sphi 0, %s28
      %s29 = sphi 0, %s26
      %s30 = sphi 0, %s29
      %s46 = sphi 0, %s30
      %s50 = sphi 0, %s50
      %s52 = sphi 0, %s50
      %s53 = sphi 0, %s52
      %s67 = sphi 0, %s53
      %s71 = sphi 0, %s71
      %s73 = sphi 0, %s71
      %s74 = sphi 0, %s73
      %s88 = sphi 0, %s74
      %s92 = sphi 0, %s92
      %s94 = sphi 0, %s92
      %s95 = sphi 0, %s94
      %s109 = sphi 0, %s95
      %s113 = sphi 0, %s113
      %s115 = sphi 0, %s113
      %s116 = sphi 0, %s115
      %s130 = sphi 0, %s116
      %s134 = sphi 0, %s134
      %s136 = sphi 0, %s134
      %s137 = sphi 0, %s136
      %s151 = sphi 0, %s137
      %s155 = sphi 0, %s155
      %s157 = sphi 0, %s155
      %s158 = sphi 0, %s157
      %s172 = sphi 0, %s158
      %s178 = sphi 0, %s180
      %s181 = sphi 0, %s178
      %s182 = sphi 0, %s181
      %s198 = sphi 0, %s182
    $region4: #{transformer_decoder_layer.5} parent=1 // loop_header_branch
      %19 = sbr.rel (%p17) target = $region8
    $region5: #{transformer_decoder_layer.5} parent=1 // loop_body
      %s21 = ssub.s32 %s16, 1
      %s22 = ssub.s32 %s16, 2
      %s23 = sadd.s32 %s16, 1
      %s24 = ssub.s32 %s16, %s23
      %p25 = scmp.eq.s32.totalorder %s24, 0
      %s27 = sadd.s32 %s26, 1
      %s28 = scalar_select %p25, %s26, %s27
      %p31 = pneg %p25
      %p32 = scmp.eq.s32.totalorder %s16, 1
      %p33 = por %p31, %p32
      %p34 = scmp.ne.s32.totalorder %s26, %s29
      %p35 = scmp.eq.s32.totalorder %s16, 0
      %p36 = por %p34, %p35
      %p37 = scmp.ne.s32.totalorder %s26, %s29
      %p38 = scmp.eq.s32.totalorder %s21, 1
      %p39 = por %p37, %p38
      %p40 = scmp.ne.s32.totalorder %s29, %s30
      %p41 = scmp.eq.s32.totalorder %s21, 0
      %p42 = por %p40, %p41
      %p43 = scmp.ne.s32.totalorder %s29, %s30
      %p44 = scmp.eq.s32.totalorder %s22, 1
      %p45 = por %p43, %p44
      %p47 = scmp.ne.s32.totalorder %s30, %s46
      %p48 = scmp.eq.s32.totalorder %s22, 0
      %p49 = por %p47, %p48
      %s51 = sadd.s32 %s50, 1
      %p54 = scmp.eq.s32.totalorder %s16, 1
      %p55 = scmp.ne.s32.totalorder %s50, %s52
      %p56 = scmp.eq.s32.totalorder %s16, 0
      %p57 = por %p55, %p56
      %p58 = scmp.ne.s32.totalorder %s50, %s52
      %p59 = scmp.eq.s32.totalorder %s21, 1
      %p60 = por %p58, %p59
      %p61 = scmp.ne.s32.totalorder %s52, %s53
      %p62 = scmp.eq.s32.totalorder %s21, 0
      %p63 = por %p61, %p62
      %p64 = scmp.ne.s32.totalorder %s52, %s53
      %p65 = scmp.eq.s32.totalorder %s22, 1
      %p66 = por %p64, %p65
      %p68 = scmp.ne.s32.totalorder %s53, %s67
      %p69 = scmp.eq.s32.totalorder %s22, 0
      %p70 = por %p68, %p69
      %s72 = sadd.s32 %s71, 1
      %p75 = scmp.eq.s32.totalorder %s16, 1
      %p76 = scmp.ne.s32.totalorder %s71, %s73
      %p77 = scmp.eq.s32.totalorder %s16, 0
      %p78 = por %p76, %p77
      %p79 = scmp.ne.s32.totalorder %s71, %s73
      %p80 = scmp.eq.s32.totalorder %s21, 1
      %p81 = por %p79, %p80
      %p82 = scmp.ne.s32.totalorder %s73, %s74
      %p83 = scmp.eq.s32.totalorder %s21, 0
      %p84 = por %p82, %p83
      %p85 = scmp.ne.s32.totalorder %s73, %s74
      %p86 = scmp.eq.s32.totalorder %s22, 1
      %p87 = por %p85, %p86
      %p89 = scmp.ne.s32.totalorder %s74, %s88
      %p90 = scmp.eq.s32.totalorder %s22, 0
      %p91 = por %p89, %p90
      %s93 = sadd.s32 %s92, 1
      %p96 = scmp.eq.s32.totalorder %s16, 1
      %p97 = scmp.ne.s32.totalorder %s92, %s94
      %p98 = scmp.eq.s32.totalorder %s16, 0
      %p99 = por %p97, %p98
      %p100 = scmp.ne.s32.totalorder %s92, %s94
      %p101 = scmp.eq.s32.totalorder %s21, 1
      %p102 = por %p100, %p101
      %p103 = scmp.ne.s32.totalorder %s94, %s95
      %p104 = scmp.eq.s32.totalorder %s21, 0
      %p105 = por %p103, %p104
      %p106 = scmp.ne.s32.totalorder %s94, %s95
      %p107 = scmp.eq.s32.totalorder %s22, 1
      %p108 = por %p106, %p107
      %p110 = scmp.ne.s32.totalorder %s95, %s109
      %p111 = scmp.eq.s32.totalorder %s22, 0
      %p112 = por %p110, %p111
      %s114 = sadd.s32 %s113, 1
      %p117 = scmp.eq.s32.totalorder %s16, 1
      %p118 = scmp.ne.s32.totalorder %s113, %s115
      %p119 = scmp.eq.s32.totalorder %s16, 0
      %p120 = por %p118, %p119
      %p121 = scmp.ne.s32.totalorder %s113, %s115
      %p122 = scmp.eq.s32.totalorder %s21, 1
      %p123 = por %p121, %p122
      %p124 = scmp.ne.s32.totalorder %s115, %s116
      %p125 = scmp.eq.s32.totalorder %s21, 0
      %p126 = por %p124, %p125
      %p127 = scmp.ne.s32.totalorder %s115, %s116
      %p128 = scmp.eq.s32.totalorder %s22, 1
      %p129 = por %p127, %p128
      %p131 = scmp.ne.s32.totalorder %s116, %s130
      %p132 = scmp.eq.s32.totalorder %s22, 0
      %p133 = por %p131, %p132
      %s135 = sadd.s32 %s134, 1
      %p138 = scmp.eq.s32.totalorder %s16, 1
      %p139 = scmp.ne.s32.totalorder %s134, %s136
      %p140 = scmp.eq.s32.totalorder %s16, 0
      %p141 = por %p139, %p140
      %p142 = scmp.ne.s32.totalorder %s134, %s136
      %p143 = scmp.eq.s32.totalorder %s21, 1
      %p144 = por %p142, %p143
      %p145 = scmp.ne.s32.totalorder %s136, %s137
      %p146 = scmp.eq.s32.totalorder %s21, 0
      %p147 = por %p145, %p146
      %p148 = scmp.ne.s32.totalorder %s136, %s137
      %p149 = scmp.eq.s32.totalorder %s22, 1
      %p150 = por %p148, %p149
      %p152 = scmp.ne.s32.totalorder %s137, %s151
      %p153 = scmp.eq.s32.totalorder %s22, 0
      %p154 = por %p152, %p153
      %s156 = sadd.s32 %s155, 1
      %p159 = scmp.eq.s32.totalorder %s16, 1
      %p160 = scmp.ne.s32.totalorder %s155, %s157
      %p161 = scmp.eq.s32.totalorder %s16, 0
      %p162 = por %p160, %p161
      %p163 = scmp.ne.s32.totalorder %s155, %s157
      %p164 = scmp.eq.s32.totalorder %s21, 1
      %p165 = por %p163, %p164
      %p166 = scmp.ne.s32.totalorder %s157, %s158
      %p167 = scmp.eq.s32.totalorder %s21, 0
      %p168 = por %p166, %p167
      %p169 = scmp.ne.s32.totalorder %s157, %s158
      %p170 = scmp.eq.s32.totalorder %s22, 1
      %p171 = por %p169, %p170
      %p173 = scmp.ne.s32.totalorder %s158, %s172
      %p174 = scmp.eq.s32.totalorder %s22, 0
      %p175 = por %p173, %p174
      %s176 = ssub.s32 %s16, %s23
      %p177 = scmp.eq.s32.totalorder %s176, 0
      %s179 = sadd.s32 %s178, 1
      %s180 = scalar_select %p177, %s178, %s179
      %p183 = pneg %p177
      %p184 = scmp.eq.s32.totalorder %s16, 1
      %p185 = por %p183, %p184
      %p186 = scmp.ne.s32.totalorder %s178, %s181
      %p187 = scmp.eq.s32.totalorder %s16, 0
      %p188 = por %p186, %p187
      %p189 = scmp.ne.s32.totalorder %s178, %s181
      %p190 = scmp.eq.s32.totalorder %s21, 1
      %p191 = por %p189, %p190
      %p192 = scmp.ne.s32.totalorder %s181, %s182
      %p193 = scmp.eq.s32.totalorder %s21, 0
      %p194 = por %p192, %p193
      %p195 = scmp.ne.s32.totalorder %s181, %s182
      %p196 = scmp.eq.s32.totalorder %s22, 1
      %p197 = por %p195, %p196
      %p199 = scmp.ne.s32.totalorder %s182, %s198
      %p200 = scmp.eq.s32.totalorder %s22, 0
      %p201 = por %p199, %p200
      %p202 = scmp.le.s32.totalorder 1, %s16
      %p203 = scmp.lt.s32.totalorder %s16, 3
      %p204 = pnand %p202, %p203
      %p205 = pneg %p204
      // Predicated region
      $region9: #{transformer_decoder_layer.5} parent=5 // pred_check
        _
      $region10: #{transformer_decoder_layer.5} parent=5 // pred_check_branch
        %207 = sbr.rel (%p204) target = $region12
      $region11: #{transformer_decoder_layer.5} parent=5 // pred_region
        %s208 = ssub.s32 %s16, 1
        // Predicated region
        $region13: #{transformer_decoder_layer.5} parent=11 // pred_check
          %p209 = pneg %p63
        $region14: #{transformer_decoder_layer.5} parent=11 // pred_check_branch
          %211 = sbr.rel (%p209) target = $region16
        $region15: #{transformer_decoder_layer.5} parent=11 // pred_region
          _
        $region16: #{transformer_decoder_layer.5} parent=11 // pred_fallthru
          _
        // Predicated region
        $region17: #{transformer_decoder_layer.5} parent=11 // pred_check
          %p212 = pneg %p84
        $region18: #{transformer_decoder_layer.5} parent=11 // pred_check_branch
          %214 = sbr.rel (%p212) target = $region20
        $region19: #{transformer_decoder_layer.5} parent=11 // pred_region
          _
        $region20: #{transformer_decoder_layer.5} parent=11 // pred_fallthru
          _
        // Predicated region
        $region21: #{transformer_decoder_layer.5} parent=11 // pred_check
          %p215 = pneg %p105
        $region22: #{transformer_decoder_layer.5} parent=11 // pred_check_branch
          %217 = sbr.rel (%p215) target = $region24
        $region23: #{transformer_decoder_layer.5} parent=11 // pred_region
          _
        $region24: #{transformer_decoder_layer.5} parent=11 // pred_fallthru
          _
        // Predicated region
        $region25: #{transformer_decoder_layer.5} parent=11 // pred_check
          %p218 = pneg %p126
        $region26: #{transformer_decoder_layer.5} parent=11 // pred_check_branch
          %220 = sbr.rel (%p218) target = $region28
        $region27: #{transformer_decoder_layer.5} parent=11 // pred_region
          _
        $region28: #{transformer_decoder_layer.5} parent=11 // pred_fallthru
          _
        // Predicated region
        $region29: #{transformer_decoder_layer.5} parent=11 // pred_check
          %p221 = pneg %p147
        $region30: #{transformer_decoder_layer.5} parent=11 // pred_check_branch
          %223 = sbr.rel (%p221) target = $region32
        $region31: #{transformer_decoder_layer.5} parent=11 // pred_region
          _
        $region32: #{transformer_decoder_layer.5} parent=11 // pred_fallthru
          _
        // Predicated region
        $region33: #{transformer_decoder_layer.5} parent=11 // pred_check
          %p224 = pneg %p168
        $region34: #{transformer_decoder_layer.5} parent=11 // pred_check_branch
          %226 = sbr.rel (%p224) target = $region36
        $region35: #{transformer_decoder_layer.5} parent=11 // pred_region
          _
        $region36: #{transformer_decoder_layer.5} parent=11 // pred_fallthru
          _
      $region12: #{transformer_decoder_layer.5} parent=5 // pred_fallthru
        _
      %p227 = scmp.lt.s32.totalorder %s16, 2
      // Predicated region
      $region37: #{transformer_decoder_layer.5} parent=5 // pred_check
        %p228 = pneg %p227
      $region38: #{transformer_decoder_layer.5} parent=5 // pred_check_branch
        %230 = sbr.rel (%p228) target = $region40
      $region39: #{transformer_decoder_layer.5} parent=5 // pred_region
        // Predicated region
        $region41: #{transformer_decoder_layer.5} parent=39 // pred_check
          %p231 = pneg %p36
        $region42: #{transformer_decoder_layer.5} parent=39 // pred_check_branch
          %233 = sbr.rel (%p231) target = $region44
        $region43: #{transformer_decoder_layer.5} parent=39 // pred_region
          %p234 = scmp.lt.s32.totalorder %s16, 1
          %s235 = scalar_select %p234, %s16, 1
          %s236 = smul.addr %s235, 8
          %s237 = scalar_lea.vmem %s0, %s236
        $region44: #{transformer_decoder_layer.5} parent=39 // pred_fallthru
          _
      $region40: #{transformer_decoder_layer.5} parent=5 // pred_fallthru
        _
      %p238 = scmp.le.s32.totalorder 1, %s16
      %p239 = scmp.lt.s32.totalorder %s16, 3
      %p240 = pnand %p238, %p239
      %p241 = pneg %p240
      // Predicated region
      $region45: #{transformer_decoder_layer.5} parent=5 // pred_check
        _
      $region46: #{transformer_decoder_layer.5} parent=5 // pred_check_branch
        %243 = sbr.rel (%p240) target = $region48
      $region47: #{transformer_decoder_layer.5} parent=5 // pred_region
        %s244 = ssub.s32 %s16, 1
        %p245 = scmp.lt.s32.totalorder %s21, 1
        %s246 = scalar_select %p245, %s21, 1
        %s247 = smul.addr %s246, 8
        %s248 = scalar_lea.vmem %s0, %s247
        %p249 = pneg %p42
        %p250 = pneg %p39
        %p251 = pneg %p63
        %p252 = pneg %p60
        %p253 = pneg %p84
        %p254 = pneg %p81
        %p255 = pneg %p105
        %p256 = pneg %p102
        %p257 = pneg %p126
        %p258 = pneg %p123
        %p259 = pneg %p147
        %p260 = pneg %p144
        %p261 = pneg %p168
        %p262 = pneg %p165
        %p263 = pneg %p194
        %p264 = pneg %p191
        %s265 = sand.u32 %s181, 1
        %s266 = scalar_lea.sflag [#allocation3], %s265
        %s267 = sand.u32 %s181, 1
        %s268 = smul.addr %s267, 8
        %s269 = scalar_lea.vmem [#allocation2], %s268
        %p270 = scmp.lt.s32.totalorder %s21, 1
        %s271 = scalar_select %p270, %s21, 1
        %s272 = smul.addr %s271, 8
        %s273 = scalar_lea.vmem %s0, %s272
        %v275 = vld [vmem:[%s273] sm:$0xff]
        %v276 = vpack.c.bf16 %v275, %v275
        %v277 = vld [vmem:[%s1] sm:$0xff]
        %v278 = vld [vmem:[%s1 + $0x8] sm:$0xff]
        %v279 = vld [vmem:[%s1 + $0x10] sm:$0xff]
        %v280 = vld [vmem:[%s1 + $0x18] sm:$0xff]
        %v281 = vpack.c.bf16 %v278, %v277
        %v282 = vpack.c.bf16 %v280, %v279
        %v283 = vld [vmem:[%s2] sm:$0x1]
        %v285 = vlaneseq
        %v286 = vshrl.u32 %v285, 7
        %v287 = vsub.s32 0, %v286
        %v288 = vrot.slane %v283, %v287
        %vm290 = vcmask 261120
        %v292 = vsel %vm290, %v276, 0
        %294 = vmatprep.subr.bf16.mxu0 0
        %295 = vmatpush1.bf16.msra.mxu0 %v281
        %296 = vmatprep.subr.bf16.mxu0 0
        %297 = vmatpush1.bf16.msra.mxu0 %v282
        %298 = vmatprep.subr.bf16.mxu0 0
        %299 = vmatpush1.bf16.msra.mxu0 0
        %300 = vmatprep.subr.bf16.mxu0 0
        %301 = vmatpush1.bf16.msra.mxu0 0
        %302 = vmatprep.subr.bf16.mxu0 0
        %303 = vmatpush1.bf16.msra.mxu0 0
        %304 = vmatprep.subr.bf16.mxu0 0
        %305 = vmatpush1.bf16.msra.mxu0 0
        %306 = vmatprep.subr.bf16.mxu0 0
        %307 = vmatpush1.bf16.msra.mxu0 0
        %308 = vmatprep.subr.bf16.mxu0 0
        %309 = vmatpush1.bf16.msra.mxu0 0
        %310 = vmatprep.subr.bf16.mxu0 0
        %311 = vmatpush1.bf16.msra.mxu0 0
        %312 = vmatprep.subr.bf16.mxu0 0
        %313 = vmatpush1.bf16.msra.mxu0 0
        %314 = vmatprep.subr.bf16.mxu0 0
        %315 = vmatpush1.bf16.msra.mxu0 0
        %316 = vmatprep.subr.bf16.mxu0 0
        %317 = vmatpush1.bf16.msra.mxu0 0
        %318 = vmatprep.subr.bf16.mxu0 0
        %319 = vmatpush1.bf16.msra.mxu0 0
        %320 = vmatprep.subr.bf16.mxu0 0
        %321 = vmatpush1.bf16.msra.mxu0 0
        %322 = vmatprep.subr.bf16.mxu0 0
        %323 = vmatpush1.bf16.msra.mxu0 0
        %324 = vmatprep.subr.bf16.mxu0 0
        %325 = vmatpush1.bf16.msra.mxu0 0
        %326 = vmatprep.mubr.bf16.mxu0 0
        %327 = vmatmul.mubr.bf16.gmra.mrb[0].mxu0 %v292
        %v328 = vpop.f32.mrb[0].mxu0
        %v329 = vadd.f32 %v288, %v328
        %v330 = vpop.f32.mrb[0].mxu0
        %v331 = vpop.f32.mrb[0].mxu0
        %v332 = vpop.f32.mrb[0].mxu0
        %333 = vdwg.mxu0
        %v334 = vmax.f32 %v329, 0.0
        %v335 = vpack.c.bf16 %v334, %v334
        %v336 = vld [vmem:[%s3] sm:$0xff]
        %v337 = vld [vmem:[%s3 + $0x8] sm:$0xff]
        %v338 = vld [vmem:[%s3 + $0x10] sm:$0xff]
        %v339 = vld [vmem:[%s3 + $0x18] sm:$0xff]
        %v340 = vld [vmem:[%s3 + $0x20] sm:$0xff]
        %v341 = vld [vmem:[%s3 + $0x28] sm:$0xff]
        %v342 = vld [vmem:[%s3 + $0x30] sm:$0xff]
        %v343 = vld [vmem:[%s3 + $0x38] sm:$0xff]
        %v344 = vpack.c.bf16 %v337, %v336
        %v345 = vpack.c.bf16 %v339, %v338
        %v346 = vpack.c.bf16 %v341, %v340
        %v347 = vpack.c.bf16 %v343, %v342
        %v348 = vld [vmem:[%s4] sm:$0x1]
        %v350 = vlaneseq
        %v351 = vshrl.u32 %v350, 7
        %v352 = vsub.s32 0, %v351
        %v353 = vrot.slane %v348, %v352
        %vm355 = vcmask 523264
        %v357 = vsel %vm355, %v335, 0
        %359 = vmatprep.subr.bf16.mxu0 0
        %360 = vmatpush1.bf16.msra.mxu0 %v344
        %361 = vmatprep.subr.bf16.mxu0 0
        %362 = vmatpush1.bf16.msra.mxu0 %v345
        %363 = vmatprep.subr.bf16.mxu0 0
        %364 = vmatpush1.bf16.msra.mxu0 %v346
        %365 = vmatprep.subr.bf16.mxu0 0
        %366 = vmatpush1.bf16.msra.mxu0 %v347
        %367 = vmatprep.subr.bf16.mxu0 0
        %368 = vmatpush1.bf16.msra.mxu0 0
        %369 = vmatprep.subr.bf16.mxu0 0
        %370 = vmatpush1.bf16.msra.mxu0 0
        %371 = vmatprep.subr.bf16.mxu0 0
        %372 = vmatpush1.bf16.msra.mxu0 0
        %373 = vmatprep.subr.bf16.mxu0 0
        %374 = vmatpush1.bf16.msra.mxu0 0
        %375 = vmatprep.subr.bf16.mxu0 0
        %376 = vmatpush1.bf16.msra.mxu0 0
        %377 = vmatprep.subr.bf16.mxu0 0
        %378 = vmatpush1.bf16.msra.mxu0 0
        %379 = vmatprep.subr.bf16.mxu0 0
        %380 = vmatpush1.bf16.msra.mxu0 0
        %381 = vmatprep.subr.bf16.mxu0 0
        %382 = vmatpush1.bf16.msra.mxu0 0
        %383 = vmatprep.subr.bf16.mxu0 0
        %384 = vmatpush1.bf16.msra.mxu0 0
        %385 = vmatprep.subr.bf16.mxu0 0
        %386 = vmatpush1.bf16.msra.mxu0 0
        %387 = vmatprep.subr.bf16.mxu0 0
        %388 = vmatpush1.bf16.msra.mxu0 0
        %389 = vmatprep.subr.bf16.mxu0 0
        %390 = vmatpush1.bf16.msra.mxu0 0
        %391 = vmatprep.mubr.bf16.mxu0 0
        %392 = vmatmul.mubr.bf16.gmra.mrb[0].mxu0 %v357
        %v393 = vpop.f32.mrb[0].mxu0
        %v394 = vadd.f32 %v353, %v393
        %v395 = vpop.f32.mrb[0].mxu0
        %v396 = vpop.f32.mrb[0].mxu0
        %v397 = vpop.f32.mrb[0].mxu0
        %398 = vdwg.mxu0
        %v399 = vadd.f32 %v275, %v394
        %v400 = vsel %vm290, %v399, 0.0
        %401 = vadd.xlane.f32.xlu0 %v400
        %v402 = vpop.xlane.xlu0 %401
        %v403 = vrcp.pop 32.0
        %v404 = vmul.f32 %v402, %v403
        %v405 = vsub.f32 %v399, %v404
        %v406 = vmul.f32 %v405, %v405
        %v407 = vsel %vm290, %v406, 0.0
        %408 = vadd.xlane.f32.xlu0 %v407
        %v409 = vpop.xlane.xlu0 %408
        %v410 = vmul.f32 %v409, %v403
        %v411 = vadd.f32 %v410, 1e-05
        %v412 = vrsqrt.pop %v411
        %v413 = vmul.f32 %v405, %v412
        %v414 = vld [vmem:[%s5] sm:$0x1]
        %v416 = vlaneseq
        %v417 = vshrl.u32 %v416, 7
        %v418 = vsub.s32 0, %v417
        %v419 = vrot.slane %v414, %v418
        %v421 = vmul.f32 %v413, %v419
        %v422 = vld [vmem:[%s6] sm:$0x1]
        %v424 = vlaneseq
        %v425 = vshrl.u32 %v424, 7
        %v426 = vsub.s32 0, %v425
        %v427 = vrot.slane %v422, %v426
        %v429 = vadd.f32 %v421, %v427
        %430 = vst.msk [vmem:[%s269] sm:$0xff] %vm290, %v429
        %s431 = sand.u32 %s181, 1
        %s432 = scalar_lea.sflag [#allocation3], %s431
        %s433 = sand.u32 %s181, 1
        %s434 = smul.addr %s433, 8
        %s435 = scalar_lea.vmem [#allocation2], %s434
        // Predicated region
        $region49: #{transformer_decoder_layer.5} parent=47 // pred_check
          %p436 = pneg %p191
        $region50: #{transformer_decoder_layer.5} parent=47 // pred_check_branch
          %438 = sbr.rel (%p436) target = $region52
        $region51: #{transformer_decoder_layer.5} parent=47 // pred_region
          %s440 = ssub.s32 128, 128
          %441 = vsyncadd %s432, %s440
          %s442 = smul.addr %s21, 128
          %s443 = scalar_lea.hbm %s7, %s442
          %s445 = sshll.u32 %s435, 4
          %s446 = int_to_ptr.vmem [resolvable:$true] %s445
          %448 = dma.vmem_to_hbm [thread:$0]  %s446, 128, %s443, %s432
        $region52: #{transformer_decoder_layer.5} parent=47 // pred_fallthru
          _
      $region48: #{transformer_decoder_layer.5} parent=5 // pred_fallthru
        _
      %p449 = scmp.le.s32.totalorder 2, %s16
      // Predicated region
      $region53: #{transformer_decoder_layer.5} parent=5 // pred_check
        %p450 = pneg %p449
      $region54: #{transformer_decoder_layer.5} parent=5 // pred_check_branch
        %452 = sbr.rel (%p450) target = $region56
      $region55: #{transformer_decoder_layer.5} parent=5 // pred_region
        %s453 = ssub.s32 %s16, 2
        // Predicated region
        $region57: #{transformer_decoder_layer.5} parent=55 // pred_check
          %p454 = pneg %p197
        $region58: #{transformer_decoder_layer.5} parent=55 // pred_check_branch
          %456 = sbr.rel (%p454) target = $region60
        $region59: #{transformer_decoder_layer.5} parent=55 // pred_region
          %s457 = sand.u32 %s182, 1
          %s458 = scalar_lea.sflag [#allocation3], %s457
          %s459 = sand.u32 %s182, 1
          %s460 = smul.addr %s459, 8
          %s461 = scalar_lea.vmem [#allocation2], %s460
          %462 = dma.done %s458, 128
        $region60: #{transformer_decoder_layer.5} parent=55 // pred_fallthru
          _
      $region56: #{transformer_decoder_layer.5} parent=5 // pred_fallthru
        _
    $region6: #{transformer_decoder_layer.5} parent=1 // loop_footer
      %s20 = sadd.s32 1, %s16
    $region7: #{transformer_decoder_layer.5} parent=1 // loop_footer_branch
      %15 = sbr.rel target = $region3
    $region8: #{transformer_decoder_layer.5} parent=1 // loop_exit
      _
    %463 = vsyncpa [#allocation3], 1
    %s464 = scalar_lea.sflag [#allocation3], 1
    %465 = vsyncpa %s464, 1

// kernel: transformer_decoder_layer.3
$region0: #{transformer_decoder_layer.3}
  #allocation0 [shape = 'u32[]', space=smem, size = 0x4, offset = 0x4, fixed_abs, tag = 'smem constant byte address 0x4 - core index']
  #allocation1 [shape = 'u32[144,128]{1,0:T(1,128)}', space=vmem, size = 0x12000, scoped, tag = 'internal scratch']
  %s0 = inlined_call_operand.vmem [shape: f32[2,8,32], index: 0, kind: input, shape index: {}, may-alias: {0,1}]
  %s1 = inlined_call_operand.vmem [shape: f32[2,8,32], index: 1, kind: input, shape index: {}, may-alias: {0,1}]
  %s2 = inlined_call_operand.vmem [shape: f32[2,1,8,8], index: 2, kind: input, shape index: {}]
  %s3 = inlined_call_operand.vmem [shape: f32[32,96], index: 3, kind: input, shape index: {}]
  %s4 = inlined_call_operand.hbm [shape: f32[1,96], index: 4, kind: input, shape index: {}]
  %s5 = inlined_call_operand.hbm [shape: f32[32,32], index: 5, kind: input, shape index: {}]
  %s6 = inlined_call_operand.hbm [shape: f32[1,32], index: 6, kind: input, shape index: {}]
  %s7 = inlined_call_operand.vmem [shape: f32[1,32], index: 7, kind: input, shape index: {}]
  %s8 = inlined_call_operand.vmem [shape: f32[1,32], index: 8, kind: input, shape index: {}]
  %s9 = inlined_call_operand.vmem [shape: f32[2,8,32], index: 9, kind: output, shape index: {}]
  %s10 = sld [smem:[#allocation0]]
  $region81: #{transformer_decoder_layer.3} parent=0
    _
  %s12 = ssub.s32 1, %s10
  %s13 = scalar_select 0, %s12, %s10
  $region1: #{transformer_decoder_layer.3} parent=0
    #allocation2 [shape = 'u8[512]{0}', space=vmem, size = 0x400, scoped, tag = 'input window, operand 4, single buffered']
    #allocation3 [shape = 's32[2]{0}', space=sflag, size = 0x8, scoped, tag = 'scoped memory for transformer_decoder_layer.3']
    #allocation4 [shape = 'u8[16384]{0}', space=vmem, size = 0x4000, scoped, tag = 'input window, operand 5, single buffered']
    #allocation5 [shape = 's32[1]{0}', space=sflag, size = 0x4, scoped, tag = 'scoped memory for transformer_decoder_layer.3']
    #allocation6 [shape = 'u8[512]{0}', space=vmem, size = 0x400, scoped, tag = 'input window, operand 6, single buffered']
    %14 = vsyncpa [#allocation3], 0
    %15 = vsyncpa [#allocation5], 0
    loop: start=0, step=1, limit=4
    $region2: #{transformer_decoder_layer.3} parent=1 // loop_pre_header
      _
    $region3: #{transformer_decoder_layer.3} parent=1 // loop_header
      %s17 = sphi 0, %s21
      %p18 = scmp.ge.s32.totalorder %s17, 4
      %s27 = sphi 0, %s29
      %s30 = sphi 0, %s27
      %s31 = sphi 0, %s30
      %s47 = sphi 0, %s31
      %s53 = sphi 0, %s55
      %s56 = sphi 0, %s53
      %s57 = sphi 0, %s56
      %s73 = sphi 0, %s57
      %s79 = sphi 0, %s81
      %s82 = sphi 0, %s79
      %s83 = sphi 0, %s82
      %s99 = sphi 0, %s83
      %s103 = sphi 0, %s103
      %s105 = sphi 0, %s103
      %s106 = sphi 0, %s105
      %s120 = sphi 0, %s106
      %s124 = sphi 0, %s124
      %s126 = sphi 0, %s124
      %s127 = sphi 0, %s126
      %s141 = sphi 0, %s127
      %s145 = sphi 0, %s145
      %s147 = sphi 0, %s145
      %s148 = sphi 0, %s147
      %s162 = sphi 0, %s148
      %s166 = sphi 0, %s166
      %s168 = sphi 0, %s166
      %s169 = sphi 0, %s168
      %s183 = sphi 0, %s169
      %s187 = sphi 0, %s187
      %s189 = sphi 0, %s187
      %s190 = sphi 0, %s189
      %s204 = sphi 0, %s190
      %s208 = sphi 0, %s208
      %s210 = sphi 0, %s208
      %s211 = sphi 0, %s210
      %s225 = sphi 0, %s211
      %s231 = sphi 0, %s233
      %s234 = sphi 0, %s231
      %s235 = sphi 0, %s234
      %s251 = sphi 0, %s235
    $region4: #{transformer_decoder_layer.3} parent=1 // loop_header_branch
      %20 = sbr.rel (%p18) target = $region8
    $region5: #{transformer_decoder_layer.3} parent=1 // loop_body
      %s22 = ssub.s32 %s17, 1
      %s23 = ssub.s32 %s17, 2
      %s24 = sadd.s32 %s17, 1
      %s25 = ssub.s32 %s17, %s24
      %p26 = scmp.eq.s32.totalorder %s25, 0
      %s28 = sadd.s32 %s27, 1
      %s29 = scalar_select %p26, %s27, %s28
      %p32 = pneg %p26
      %p33 = scmp.eq.s32.totalorder %s17, 1
      %p34 = por %p32, %p33
      %p35 = scmp.ne.s32.totalorder %s27, %s30
      %p36 = scmp.eq.s32.totalorder %s17, 0
      %p37 = por %p35, %p36
      %p38 = scmp.ne.s32.totalorder %s27, %s30
      %p39 = scmp.eq.s32.totalorder %s22, 1
      %p40 = por %p38, %p39
      %p41 = scmp.ne.s32.totalorder %s30, %s31
      %p42 = scmp.eq.s32.totalorder %s22, 0
      %p43 = por %p41, %p42
      %p44 = scmp.ne.s32.totalorder %s30, %s31
      %p45 = scmp.eq.s32.totalorder %s23, 1
      %p46 = por %p44, %p45
      %p48 = scmp.ne.s32.totalorder %s31, %s47
      %p49 = scmp.eq.s32.totalorder %s23, 0
      %p50 = por %p48, %p49
      %s51 = ssub.s32 %s17, %s24
      %p52 = scmp.eq.s32.totalorder %s51, 0
      %s54 = sadd.s32 %s53, 1
      %s55 = scalar_select %p52, %s53, %s54
      %p58 = pneg %p52
      %p59 = scmp.eq.s32.totalorder %s17, 1
      %p60 = por %p58, %p59
      %p61 = scmp.ne.s32.totalorder %s53, %s56
      %p62 = scmp.eq.s32.totalorder %s17, 0
      %p63 = por %p61, %p62
      %p64 = scmp.ne.s32.totalorder %s53, %s56
      %p65 = scmp.eq.s32.totalorder %s22, 1
      %p66 = por %p64, %p65
      %p67 = scmp.ne.s32.totalorder %s56, %s57
      %p68 = scmp.eq.s32.totalorder %s22, 0
      %p69 = por %p67, %p68
      %p70 = scmp.ne.s32.totalorder %s56, %s57
      %p71 = scmp.eq.s32.totalorder %s23, 1
      %p72 = por %p70, %p71
      %p74 = scmp.ne.s32.totalorder %s57, %s73
      %p75 = scmp.eq.s32.totalorder %s23, 0
      %p76 = por %p74, %p75
      %s77 = ssub.s32 %s17, %s24
      %p78 = scmp.eq.s32.totalorder %s77, 0
      %s80 = sadd.s32 %s79, 1
      %s81 = scalar_select %p78, %s79, %s80
      %p84 = pneg %p78
      %p85 = scmp.eq.s32.totalorder %s17, 1
      %p86 = por %p84, %p85
      %p87 = scmp.ne.s32.totalorder %s79, %s82
      %p88 = scmp.eq.s32.totalorder %s17, 0
      %p89 = por %p87, %p88
      %p90 = scmp.ne.s32.totalorder %s79, %s82
      %p91 = scmp.eq.s32.totalorder %s22, 1
      %p92 = por %p90, %p91
      %p93 = scmp.ne.s32.totalorder %s82, %s83
      %p94 = scmp.eq.s32.totalorder %s22, 0
      %p95 = por %p93, %p94
      %p96 = scmp.ne.s32.totalorder %s82, %s83
      %p97 = scmp.eq.s32.totalorder %s23, 1
      %p98 = por %p96, %p97
      %p100 = scmp.ne.s32.totalorder %s83, %s99
      %p101 = scmp.eq.s32.totalorder %s23, 0
      %p102 = por %p100, %p101
      %s104 = sadd.s32 %s103, 1
      %p107 = scmp.eq.s32.totalorder %s17, 1
      %p108 = scmp.ne.s32.totalorder %s103, %s105
      %p109 = scmp.eq.s32.totalorder %s17, 0
      %p110 = por %p108, %p109
      %p111 = scmp.ne.s32.totalorder %s103, %s105
      %p112 = scmp.eq.s32.totalorder %s22, 1
      %p113 = por %p111, %p112
      %p114 = scmp.ne.s32.totalorder %s105, %s106
      %p115 = scmp.eq.s32.totalorder %s22, 0
      %p116 = por %p114, %p115
      %p117 = scmp.ne.s32.totalorder %s105, %s106
      %p118 = scmp.eq.s32.totalorder %s23, 1
      %p119 = por %p117, %p118
      %p121 = scmp.ne.s32.totalorder %s106, %s120
      %p122 = scmp.eq.s32.totalorder %s23, 0
      %p123 = por %p121, %p122
      %s125 = sadd.s32 %s124, 1
      %p128 = scmp.eq.s32.totalorder %s17, 1
      %p129 = scmp.ne.s32.totalorder %s124, %s126
      %p130 = scmp.eq.s32.totalorder %s17, 0
      %p131 = por %p129, %p130
      %p132 = scmp.ne.s32.totalorder %s124, %s126
      %p133 = scmp.eq.s32.totalorder %s22, 1
      %p134 = por %p132, %p133
      %p135 = scmp.ne.s32.totalorder %s126, %s127
      %p136 = scmp.eq.s32.totalorder %s22, 0
      %p137 = por %p135, %p136
      %p138 = scmp.ne.s32.totalorder %s126, %s127
      %p139 = scmp.eq.s32.totalorder %s23, 1
      %p140 = por %p138, %p139
      %p142 = scmp.ne.s32.totalorder %s127, %s141
      %p143 = scmp.eq.s32.totalorder %s23, 0
      %p144 = por %p142, %p143
      %s146 = sadd.s32 %s145, 1
      %p149 = scmp.eq.s32.totalorder %s17, 1
      %p150 = scmp.ne.s32.totalorder %s145, %s147
      %p151 = scmp.eq.s32.totalorder %s17, 0
      %p152 = por %p150, %p151
      %p153 = scmp.ne.s32.totalorder %s145, %s147
      %p154 = scmp.eq.s32.totalorder %s22, 1
      %p155 = por %p153, %p154
      %p156 = scmp.ne.s32.totalorder %s147, %s148
      %p157 = scmp.eq.s32.totalorder %s22, 0
      %p158 = por %p156, %p157
      %p159 = scmp.ne.s32.totalorder %s147, %s148
      %p160 = scmp.eq.s32.totalorder %s23, 1
      %p161 = por %p159, %p160
      %p163 = scmp.ne.s32.totalorder %s148, %s162
      %p164 = scmp.eq.s32.totalorder %s23, 0
      %p165 = por %p163, %p164
      %s167 = sadd.s32 %s166, 1
      %p170 = scmp.eq.s32.totalorder %s17, 1
      %p171 = scmp.ne.s32.totalorder %s166, %s168
      %p172 = scmp.eq.s32.totalorder %s17, 0
      %p173 = por %p171, %p172
      %p174 = scmp.ne.s32.totalorder %s166, %s168
      %p175 = scmp.eq.s32.totalorder %s22, 1
      %p176 = por %p174, %p175
      %p177 = scmp.ne.s32.totalorder %s168, %s169
      %p178 = scmp.eq.s32.totalorder %s22, 0
      %p179 = por %p177, %p178
      %p180 = scmp.ne.s32.totalorder %s168, %s169
      %p181 = scmp.eq.s32.totalorder %s23, 1
      %p182 = por %p180, %p181
      %p184 = scmp.ne.s32.totalorder %s169, %s183
      %p185 = scmp.eq.s32.totalorder %s23, 0
      %p186 = por %p184, %p185
      %s188 = sadd.s32 %s187, 1
      %p191 = scmp.eq.s32.totalorder %s17, 1
      %p192 = scmp.ne.s32.totalorder %s187, %s189
      %p193 = scmp.eq.s32.totalorder %s17, 0
      %p194 = por %p192, %p193
      %p195 = scmp.ne.s32.totalorder %s187, %s189
      %p196 = scmp.eq.s32.totalorder %s22, 1
      %p197 = por %p195, %p196
      %p198 = scmp.ne.s32.totalorder %s189, %s190
      %p199 = scmp.eq.s32.totalorder %s22, 0
      %p200 = por %p198, %p199
      %p201 = scmp.ne.s32.totalorder %s189, %s190
      %p202 = scmp.eq.s32.totalorder %s23, 1
      %p203 = por %p201, %p202
      %p205 = scmp.ne.s32.totalorder %s190, %s204
      %p206 = scmp.eq.s32.totalorder %s23, 0
      %p207 = por %p205, %p206
      %s209 = sadd.s32 %s208, 1
      %p212 = scmp.eq.s32.totalorder %s17, 1
      %p213 = scmp.ne.s32.totalorder %s208, %s210
      %p214 = scmp.eq.s32.totalorder %s17, 0
      %p215 = por %p213, %p214
      %p216 = scmp.ne.s32.totalorder %s208, %s210
      %p217 = scmp.eq.s32.totalorder %s22, 1
      %p218 = por %p216, %p217
      %p219 = scmp.ne.s32.totalorder %s210, %s211
      %p220 = scmp.eq.s32.totalorder %s22, 0
      %p221 = por %p219, %p220
      %p222 = scmp.ne.s32.totalorder %s210, %s211
      %p223 = scmp.eq.s32.totalorder %s23, 1
      %p224 = por %p222, %p223
      %p226 = scmp.ne.s32.totalorder %s211, %s225
      %p227 = scmp.eq.s32.totalorder %s23, 0
      %p228 = por %p226, %p227
      %s229 = ssub.s32 %s17, %s24
      %p230 = scmp.eq.s32.totalorder %s229, 0
      %s232 = sadd.s32 %s231, 1
      %s233 = scalar_select %p230, %s231, %s232
      %p236 = pneg %p230
      %p237 = scmp.eq.s32.totalorder %s17, 1
      %p238 = por %p236, %p237
      %p239 = scmp.ne.s32.totalorder %s231, %s234
      %p240 = scmp.eq.s32.totalorder %s17, 0
      %p241 = por %p239, %p240
      %p242 = scmp.ne.s32.totalorder %s231, %s234
      %p243 = scmp.eq.s32.totalorder %s22, 1
      %p244 = por %p242, %p243
      %p245 = scmp.ne.s32.totalorder %s234, %s235
      %p246 = scmp.eq.s32.totalorder %s22, 0
      %p247 = por %p245, %p246
      %p248 = scmp.ne.s32.totalorder %s234, %s235
      %p249 = scmp.eq.s32.totalorder %s23, 1
      %p250 = por %p248, %p249
      %p252 = scmp.ne.s32.totalorder %s235, %s251
      %p253 = scmp.eq.s32.totalorder %s23, 0
      %p254 = por %p252, %p253
      %p255 = scmp.le.s32.totalorder 1, %s17
      %p256 = scmp.lt.s32.totalorder %s17, 3
      %p257 = pnand %p255, %p256
      %p258 = pneg %p257
      // Predicated region
      $region9: #{transformer_decoder_layer.3} parent=5 // pred_check
        _
      $region10: #{transformer_decoder_layer.3} parent=5 // pred_check_branch
        %260 = sbr.rel (%p257) target = $region12
      $region11: #{transformer_decoder_layer.3} parent=5 // pred_region
        %s261 = ssub.s32 %s17, 1
        // Predicated region
        $region13: #{transformer_decoder_layer.3} parent=11 // pred_check
          %p262 = pneg %p116
        $region14: #{transformer_decoder_layer.3} parent=11 // pred_check_branch
          %264 = sbr.rel (%p262) target = $region16
        $region15: #{transformer_decoder_layer.3} parent=11 // pred_region
          _
        $region16: #{transformer_decoder_layer.3} parent=11 // pred_fallthru
          _
        // Predicated region
        $region17: #{transformer_decoder_layer.3} parent=11 // pred_check
          %p265 = pneg %p137
        $region18: #{transformer_decoder_layer.3} parent=11 // pred_check_branch
          %267 = sbr.rel (%p265) target = $region20
        $region19: #{transformer_decoder_layer.3} parent=11 // pred_region
          %s269 = ssub.s32 16, 16
          %270 = vsyncadd [#allocation3], %s269
          %s272 = sshll.u32 [#allocation2], 4
          %s273 = int_to_ptr.vmem [resolvable:$true] %s272
          %275 = dma.hbm_to_vmem [thread:$0]  %s4, 16, %s273, [#allocation3]
        $region20: #{transformer_decoder_layer.3} parent=11 // pred_fallthru
          _
        // Predicated region
        $region21: #{transformer_decoder_layer.3} parent=11 // pred_check
          %p276 = pneg %p158
        $region22: #{transformer_decoder_layer.3} parent=11 // pred_check_branch
          %278 = sbr.rel (%p276) target = $region24
        $region23: #{transformer_decoder_layer.3} parent=11 // pred_region
          %s280 = ssub.s32 512, 512
          %281 = vsyncadd [#allocation5], %s280
          %s282 = sshll.u32 [#allocation4], 4
          %s283 = int_to_ptr.vmem [resolvable:$true] %s282
          %288 = dma.hbm_to_vmem [thread:$0]  %s5, 512, %s283, [#allocation5], 128, 128, 8
        $region24: #{transformer_decoder_layer.3} parent=11 // pred_fallthru
          _
        // Predicated region
        $region25: #{transformer_decoder_layer.3} parent=11 // pred_check
          %p289 = pneg %p179
        $region26: #{transformer_decoder_layer.3} parent=11 // pred_check_branch
          %291 = sbr.rel (%p289) target = $region28
        $region27: #{transformer_decoder_layer.3} parent=11 // pred_region
          %s293 = ssub.s32 16, 16
          %294 = vsyncadd [#allocation5], %s293
          %s296 = sshll.u32 [#allocation6], 4
          %s297 = int_to_ptr.vmem [resolvable:$true] %s296
          %299 = dma.hbm_to_vmem [thread:$0]  %s6, 16, %s297, [#allocation5]
        $region28: #{transformer_decoder_layer.3} parent=11 // pred_fallthru
          _
        // Predicated region
        $region29: #{transformer_decoder_layer.3} parent=11 // pred_check
          %p300 = pneg %p200
        $region30: #{transformer_decoder_layer.3} parent=11 // pred_check_branch
          %302 = sbr.rel (%p300) target = $region32
        $region31: #{transformer_decoder_layer.3} parent=11 // pred_region
          _
        $region32: #{transformer_decoder_layer.3} parent=11 // pred_fallthru
          _
        // Predicated region
        $region33: #{transformer_decoder_layer.3} parent=11 // pred_check
          %p303 = pneg %p221
        $region34: #{transformer_decoder_layer.3} parent=11 // pred_check_branch
          %305 = sbr.rel (%p303) target = $region36
        $region35: #{transformer_decoder_layer.3} parent=11 // pred_region
          _
        $region36: #{transformer_decoder_layer.3} parent=11 // pred_fallthru
          _
      $region12: #{transformer_decoder_layer.3} parent=5 // pred_fallthru
        _
      %p306 = scmp.lt.s32.totalorder %s17, 2
      // Predicated region
      $region37: #{transformer_decoder_layer.3} parent=5 // pred_check
        %p307 = pneg %p306
      $region38: #{transformer_decoder_layer.3} parent=5 // pred_check_branch
        %309 = sbr.rel (%p307) target = $region40
      $region39: #{transformer_decoder_layer.3} parent=5 // pred_region
        // Predicated region
        $region41: #{transformer_decoder_layer.3} parent=39 // pred_check
          %p310 = pneg %p37
        $region42: #{transformer_decoder_layer.3} parent=39 // pred_check_branch
          %312 = sbr.rel (%p310) target = $region44
        $region43: #{transformer_decoder_layer.3} parent=39 // pred_region
          %p313 = scmp.lt.s32.totalorder %s17, 1
          %s314 = scalar_select %p313, %s17, 1
          %s315 = smul.addr %s314, 8
          %s316 = scalar_lea.vmem %s0, %s315
        $region44: #{transformer_decoder_layer.3} parent=39 // pred_fallthru
          _
        // Predicated region
        $region45: #{transformer_decoder_layer.3} parent=39 // pred_check
          %p317 = pneg %p63
        $region46: #{transformer_decoder_layer.3} parent=39 // pred_check_branch
          %319 = sbr.rel (%p317) target = $region48
        $region47: #{transformer_decoder_layer.3} parent=39 // pred_region
          %p320 = scmp.lt.s32.totalorder %s17, 1
          %s321 = scalar_select %p320, %s17, 1
          %s322 = smul.addr %s321, 8
          %s323 = scalar_lea.vmem %s1, %s322
        $region48: #{transformer_decoder_layer.3} parent=39 // pred_fallthru
          _
        // Predicated region
        $region49: #{transformer_decoder_layer.3} parent=39 // pred_check
          %p324 = pneg %p89
        $region50: #{transformer_decoder_layer.3} parent=39 // pred_check_branch
          %326 = sbr.rel (%p324) target = $region52
        $region51: #{transformer_decoder_layer.3} parent=39 // pred_region
          %p327 = scmp.lt.s32.totalorder %s17, 1
          %s328 = scalar_select %p327, %s17, 1
          %s329 = smul.addr %s328, 8
          %s330 = scalar_lea.vmem %s2, %s329
        $region52: #{transformer_decoder_layer.3} parent=39 // pred_fallthru
          _
      $region40: #{transformer_decoder_layer.3} parent=5 // pred_fallthru
        _
      %p331 = scmp.le.s32.totalorder 1, %s17
      %p332 = scmp.lt.s32.totalorder %s17, 3
      %p333 = pnand %p331, %p332
      %p334 = pneg %p333
      // Predicated region
      $region53: #{transformer_decoder_layer.3} parent=5 // pred_check
        _
      $region54: #{transformer_decoder_layer.3} parent=5 // pred_check_branch
        %336 = sbr.rel (%p333) target = $region56
      $region55: #{transformer_decoder_layer.3} parent=5 // pred_region
        %s337 = ssub.s32 %s17, 1
        // Predicated region
        $region57: #{transformer_decoder_layer.3} parent=55 // pred_check
          %p338 = pneg %p137
        $region58: #{transformer_decoder_layer.3} parent=55 // pred_check_branch
          %340 = sbr.rel (%p338) target = $region60
        $region59: #{transformer_decoder_layer.3} parent=55 // pred_region
          %341 = dma.done [#allocation3], 16
        $region60: #{transformer_decoder_layer.3} parent=55 // pred_fallthru
          _
        // Predicated region
        $region61: #{transformer_decoder_layer.3} parent=55 // pred_check
          %p342 = pneg %p158
        $region62: #{transformer_decoder_layer.3} parent=55 // pred_check_branch
          %344 = sbr.rel (%p342) target = $region64
        $region63: #{transformer_decoder_layer.3} parent=55 // pred_region
          %345 = dma.done [#allocation5], 512
        $region64: #{transformer_decoder_layer.3} parent=55 // pred_fallthru
          _
        // Predicated region
        $region65: #{transformer_decoder_layer.3} parent=55 // pred_check
          %p346 = pneg %p179
        $region66: #{transformer_decoder_layer.3} parent=55 // pred_check_branch
          %348 = sbr.rel (%p346) target = $region68
        $region67: #{transformer_decoder_layer.3} parent=55 // pred_region
          %349 = dma.done [#allocation5], 16
        $region68: #{transformer_decoder_layer.3} parent=55 // pred_fallthru
          _
        %p350 = scmp.lt.s32.totalorder %s22, 1
        %s351 = scalar_select %p350, %s22, 1
        %s352 = smul.addr %s351, 8
        %s353 = scalar_lea.vmem %s0, %s352
        %p354 = pneg %p43
        %p355 = pneg %p40
        %p356 = scmp.lt.s32.totalorder %s22, 1
        %s357 = scalar_select %p356, %s22, 1
        %s358 = smul.addr %s357, 8
        %s359 = scalar_lea.vmem %s1, %s358
        %p360 = pneg %p69
        %p361 = pneg %p66
        %p362 = scmp.lt.s32.totalorder %s22, 1
        %s363 = scalar_select %p362, %s22, 1
        %s364 = smul.addr %s363, 8
        %s365 = scalar_lea.vmem %s2, %s364
        %p366 = pneg %p95
        %p367 = pneg %p92
        %p368 = pneg %p116
        %p369 = pneg %p113
        %p370 = pneg %p137
        %p371 = pneg %p134
        %p372 = pneg %p158
        %p373 = pneg %p155
        %p374 = pneg %p179
        %p375 = pneg %p176
        %p376 = pneg %p200
        %p377 = pneg %p197
        %p378 = pneg %p221
        %p379 = pneg %p218
        %p380 = pneg %p247
        %p381 = pneg %p244
        %p382 = scmp.lt.s32.totalorder %s22, 1
        %s383 = scalar_select %p382, %s22, 1
        %s384 = smul.addr %s383, 8
        %s385 = scalar_lea.vmem %s9, %s384
        %p386 = scmp.lt.s32.totalorder %s22, 1
        %s387 = scalar_select %p386, %s22, 1
        %s388 = smul.addr %s387, 8
        %s389 = scalar_lea.vmem %s0, %s388
        %p390 = scmp.lt.s32.totalorder %s22, 1
        %s391 = scalar_select %p390, %s22, 1
        %s392 = smul.addr %s391, 8
        %s393 = scalar_lea.vmem %s1, %s392
        %p394 = scmp.lt.s32.totalorder %s22, 1
        %s395 = scalar_select %p394, %s22, 1
        %s396 = smul.addr %s395, 8
        %s397 = scalar_lea.vmem %s2, %s396
        %p398 = scmp.lt.s32.totalorder %s22, 1
        %s399 = scalar_select %p398, %s22, 1
        %s400 = smul.addr %s399, 8
        %s401 = scalar_lea.vmem %s9, %s400
        %v403 = vld [vmem:[%s389] sm:$0xff]
        %v404 = vld [vmem:[#allocation2] sm:$0x1]
        %v405 = vpack.c.bf16 %v403, %v403
        %v406 = vld [vmem:[%s3] sm:$0xff]
        %v407 = vld [vmem:[%s3 + $0x8] sm:$0xff]
        %v408 = vld [vmem:[%s3 + $0x10] sm:$0xff]
        %v409 = vld [vmem:[%s3 + $0x18] sm:$0xff]
        %v410 = vpack.c.bf16 %v407, %v406
        %v411 = vpack.c.bf16 %v409, %v408
        %v413 = vlaneseq
        %v414 = vshrl.u32 %v413, 7
        %v415 = vsub.s32 0, %v414
        %v416 = vrot.slane %v404, %v415
        %vm418 = vcmask 261120
        %v420 = vsel %vm418, %v405, 0
        %422 = vmatprep.subr.bf16.mxu0 0
        %423 = vmatpush1.bf16.msra.mxu0 %v410
        %424 = vmatprep.subr.bf16.mxu0 0
        %425 = vmatpush1.bf16.msra.mxu0 %v411
        %426 = vmatprep.subr.bf16.mxu0 0
        %427 = vmatpush1.bf16.msra.mxu0 0
        %428 = vmatprep.subr.bf16.mxu0 0
        %429 = vmatpush1.bf16.msra.mxu0 0
        %430 = vmatprep.subr.bf16.mxu0 0
        %431 = vmatpush1.bf16.msra.mxu0 0
        %432 = vmatprep.subr.bf16.mxu0 0
        %433 = vmatpush1.bf16.msra.mxu0 0
        %434 = vmatprep.subr.bf16.mxu0 0
        %435 = vmatpush1.bf16.msra.mxu0 0
        %436 = vmatprep.subr.bf16.mxu0 0
        %437 = vmatpush1.bf16.msra.mxu0 0
        %438 = vmatprep.subr.bf16.mxu0 0
        %439 = vmatpush1.bf16.msra.mxu0 0
        %440 = vmatprep.subr.bf16.mxu0 0
        %441 = vmatpush1.bf16.msra.mxu0 0
        %442 = vmatprep.subr.bf16.mxu0 0
        %443 = vmatpush1.bf16.msra.mxu0 0
        %444 = vmatprep.subr.bf16.mxu0 0
        %445 = vmatpush1.bf16.msra.mxu0 0
        %446 = vmatprep.subr.bf16.mxu0 0
        %447 = vmatpush1.bf16.msra.mxu0 0
        %448 = vmatprep.subr.bf16.mxu0 0
        %449 = vmatpush1.bf16.msra.mxu0 0
        %450 = vmatprep.subr.bf16.mxu0 0
        %451 = vmatpush1.bf16.msra.mxu0 0
        %452 = vmatprep.subr.bf16.mxu0 0
        %453 = vmatpush1.bf16.msra.mxu0 0
        %454 = vmatprep.mubr.bf16.mxu0 0
        %455 = vmatmul.mubr.bf16.gmra.mrb[0].mxu0 %v420
        %v456 = vpop.f32.mrb[0].mxu0
        %v457 = vadd.f32 %v416, %v456
        %v458 = vpop.f32.mrb[0].mxu0
        %v459 = vpop.f32.mrb[0].mxu0
        %v460 = vpop.f32.mrb[0].mxu0
        %461 = vdwg.mxu0
        %v462 = vld [vmem:[%s397] sm:$0xff]
        %v463 = vsub.f32 %v462, 1.0
        %v464 = vmul.f32 %v463, 1e+09
        %v465 = vpack.c.bf16 %v457, %v457
        %467 = vrot.lane.b32.xlu0 %v465, 96
        %v468 = vpop.permute.xlu0 %467
        %vm469 = vcmask 64512
        %v471 = vsel %vm469, %v465, 0
        %v474 = vsel %vm469, %v468, 0
        %476 = vmatprep.subr.bf16.mxu0 0
        %477 = vmatpush1.bf16.xpose.msra.mxu0 %v474
        %478 = vmatprep.subr.bf16.mxu0 0
        %479 = vmatpush1.bf16.xpose.msra.mxu0 0
        %480 = vmatprep.subr.bf16.mxu0 0
        %481 = vmatpush1.bf16.xpose.msra.mxu0 0
        %482 = vmatprep.subr.bf16.mxu0 0
        %483 = vmatpush1.bf16.xpose.msra.mxu0 0
        %484 = vmatprep.subr.bf16.mxu0 0
        %485 = vmatpush1.bf16.xpose.msra.mxu0 0
        %486 = vmatprep.subr.bf16.mxu0 0
        %487 = vmatpush1.bf16.xpose.msra.mxu0 0
        %488 = vmatprep.subr.bf16.mxu0 0
        %489 = vmatpush1.bf16.xpose.msra.mxu0 0
        %490 = vmatprep.subr.bf16.mxu0 0
        %491 = vmatpush1.bf16.xpose.msra.mxu0 0
        %492 = vmatprep.subr.bf16.mxu0 0
        %493 = vmatpush1.bf16.xpose.msra.mxu0 0
        %494 = vmatprep.subr.bf16.mxu0 0
        %495 = vmatpush1.bf16.xpose.msra.mxu0 0
        %496 = vmatprep.subr.bf16.mxu0 0
        %497 = vmatpush1.bf16.xpose.msra.mxu0 0
        %498 = vmatprep.subr.bf16.mxu0 0
        %499 = vmatpush1.bf16.xpose.msra.mxu0 0
        %500 = vmatprep.subr.bf16.mxu0 0
        %501 = vmatpush1.bf16.xpose.msra.mxu0 0
        %502 = vmatprep.subr.bf16.mxu0 0
        %503 = vmatpush1.bf16.xpose.msra.mxu0 0
        %504 = vmatprep.subr.bf16.mxu0 0
        %505 = vmatpush1.bf16.xpose.msra.mxu0 0
        %506 = vmatprep.subr.bf16.mxu0 0
        %507 = vmatpush1.bf16.xpose.msra.mxu0 0
        %508 = vmatprep.mubr.bf16.mxu0 0
        %509 = vmatmul.mubr.bf16.gmra.mrb[0].mxu0 %v471
        %v510 = vpop.f32.mrb[0].mxu0
        %v511 = vadd.f32 0.0, %v510
        %v512 = vpop.f32.mrb[0].mxu0
        %v513 = vpop.f32.mrb[0].mxu0
        %v514 = vpop.f32.mrb[0].mxu0
        %515 = vdwg.mxu0
        %v516 = vmul.f32 %v511, 0.35355338
        %v517 = vadd.f32 %v516, %v464
        %v518 = vsel %vm469, %v517, -inf
        %519 = vmax.xlane.f32.xlu0 %v518
        %v520 = vpop.xlane.xlu0 %519
        %v521 = vsub.f32 %v517, %v520
        %v522 = vmul.f32 %v521, 1.442695
        %v523 = vpow.pop %v522
        %v524 = vsel %vm469, %v523, 0.0
        %525 = vadd.xlane.f32.xlu0 %v524
        %v526 = vpop.xlane.xlu0 %525
        %v527 = vrcp.pop %v526
        %v528 = vmul.f32 %v523, %v527
        %v529 = vpack.c.bf16 %v528, %v528
        %530 = vrot.lane.b32.xlu0 %v465, 64
        %v531 = vpop.permute.xlu0 %530
        %v533 = vsel %vm469, %v529, 0
        %vm535 = vcmask 1043456
        %v537 = vsel %vm535, %v531, 0
        %539 = vmatprep.subr.bf16.mxu0 0
        %540 = vmatpush1.bf16.msra.mxu0 %v537
        %541 = vmatprep.subr.bf16.mxu0 0
        %542 = vmatpush1.bf16.msra.mxu0 0
        %543 = vmatprep.subr.bf16.mxu0 0
        %544 = vmatpush1.bf16.msra.mxu0 0
        %545 = vmatprep.subr.bf16.mxu0 0
        %546 = vmatpush1.bf16.msra.mxu0 0
        %547 = vmatprep.subr.bf16.mxu0 0
        %548 = vmatpush1.bf16.msra.mxu0 0
        %549 = vmatprep.subr.bf16.mxu0 0
        %550 = vmatpush1.bf16.msra.mxu0 0
        %551 = vmatprep.subr.bf16.mxu0 0
        %552 = vmatpush1.bf16.msra.mxu0 0
        %553 = vmatprep.subr.bf16.mxu0 0
        %554 = vmatpush1.bf16.msra.mxu0 0
        %555 = vmatprep.subr.bf16.mxu0 0
        %556 = vmatpush1.bf16.msra.mxu0 0
        %557 = vmatprep.subr.bf16.mxu0 0
        %558 = vmatpush1.bf16.msra.mxu0 0
        %559 = vmatprep.subr.bf16.mxu0 0
        %560 = vmatpush1.bf16.msra.mxu0 0
        %561 = vmatprep.subr.bf16.mxu0 0
        %562 = vmatpush1.bf16.msra.mxu0 0
        %563 = vmatprep.subr.bf16.mxu0 0
        %564 = vmatpush1.bf16.msra.mxu0 0
        %565 = vmatprep.subr.bf16.mxu0 0
        %566 = vmatpush1.bf16.msra.mxu0 0
        %567 = vmatprep.subr.bf16.mxu0 0
        %568 = vmatpush1.bf16.msra.mxu0 0
        %569 = vmatprep.subr.bf16.mxu0 0
        %570 = vmatpush1.bf16.msra.mxu0 0
        %571 = vmatprep.mubr.bf16.mxu0 0
        %572 = vmatmul.mubr.bf16.gmra.mrb[0].mxu0 %v533
        %v573 = vpop.f32.mrb[0].mxu0
        %v574 = vadd.f32 0.0, %v573
        %v575 = vpop.f32.mrb[0].mxu0
        %v576 = vpop.f32.mrb[0].mxu0
        %v577 = vpop.f32.mrb[0].mxu0
        %578 = vdwg.mxu0
        %579 = vrot.lane.b32.xlu0 %v465, 120
        %v580 = vpop.permute.xlu0 %579
        %581 = vrot.lane.b32.xlu0 %v465, 88
        %v582 = vpop.permute.xlu0 %581
        %v584 = vsel %vm469, %v580, 0
        %v587 = vsel %vm469, %v582, 0
        %589 = vmatprep.subr.bf16.mxu0 0
        %590 = vmatpush1.bf16.xpose.msra.mxu0 %v587
        %591 = vmatprep.subr.bf16.mxu0 0
        %592 = vmatpush1.bf16.xpose.msra.mxu0 0
        %593 = vmatprep.subr.bf16.mxu0 0
        %594 = vmatpush1.bf16.xpose.msra.mxu0 0
        %595 = vmatprep.subr.bf16.mxu0 0
        %596 = vmatpush1.bf16.xpose.msra.mxu0 0
        %597 = vmatprep.subr.bf16.mxu0 0
        %598 = vmatpush1.bf16.xpose.msra.mxu0 0
        %599 = vmatprep.subr.bf16.mxu0 0
        %600 = vmatpush1.bf16.xpose.msra.mxu0 0
        %601 = vmatprep.subr.bf16.mxu0 0
        %602 = vmatpush1.bf16.xpose.msra.mxu0 0
        %603 = vmatprep.subr.bf16.mxu0 0
        %604 = vmatpush1.bf16.xpose.msra.mxu0 0
        %605 = vmatprep.subr.bf16.mxu0 0
        %606 = vmatpush1.bf16.xpose.msra.mxu0 0
        %607 = vmatprep.subr.bf16.mxu0 0
        %608 = vmatpush1.bf16.xpose.msra.mxu0 0
        %609 = vmatprep.subr.bf16.mxu0 0
        %610 = vmatpush1.bf16.xpose.msra.mxu0 0
        %611 = vmatprep.subr.bf16.mxu0 0
        %612 = vmatpush1.bf16.xpose.msra.mxu0 0
        %613 = vmatprep.subr.bf16.mxu0 0
        %614 = vmatpush1.bf16.xpose.msra.mxu0 0
        %615 = vmatprep.subr.bf16.mxu0 0
        %616 = vmatpush1.bf16.xpose.msra.mxu0 0
        %617 = vmatprep.subr.bf16.mxu0 0
        %618 = vmatpush1.bf16.xpose.msra.mxu0 0
        %619 = vmatprep.subr.bf16.mxu0 0
        %620 = vmatpush1.bf16.xpose.msra.mxu0 0
        %621 = vmatprep.mubr.bf16.mxu0 0
        %622 = vmatmul.mubr.bf16.gmra.mrb[0].mxu0 %v584
        %v623 = vpop.f32.mrb[0].mxu0
        %v624 = vadd.f32 0.0, %v623
        %v625 = vpop.f32.mrb[0].mxu0
        %v626 = vpop.f32.mrb[0].mxu0
        %v627 = vpop.f32.mrb[0].mxu0
        %628 = vdwg.mxu0
        %v629 = vmul.f32 %v624, 0.35355338
        %v630 = vadd.f32 %v629, %v464
        %v631 = vsel %vm469, %v630, -inf
        %632 = vmax.xlane.f32.xlu0 %v631
        %v633 = vpop.xlane.xlu0 %632
        %v634 = vsub.f32 %v630, %v633
        %v635 = vmul.f32 %v634, 1.442695
        %v636 = vpow.pop %v635
        %v637 = vsel %vm469, %v636, 0.0
        %638 = vadd.xlane.f32.xlu0 %v637
        %v639 = vpop.xlane.xlu0 %638
        %v640 = vrcp.pop %v639
        %v641 = vmul.f32 %v636, %v640
        %v642 = vpack.c.bf16 %v641, %v641
        %643 = vrot.lane.b32.xlu0 %v465, 56
        %v644 = vpop.permute.xlu0 %643
        %v646 = vsel %vm469, %v642, 0
        %v649 = vsel %vm535, %v644, 0
        %651 = vmatprep.subr.bf16.mxu0 0
        %652 = vmatpush1.bf16.msra.mxu0 %v649
        %653 = vmatprep.subr.bf16.mxu0 0
        %654 = vmatpush1.bf16.msra.mxu0 0
        %655 = vmatprep.subr.bf16.mxu0 0
        %656 = vmatpush1.bf16.msra.mxu0 0
        %657 = vmatprep.subr.bf16.mxu0 0
        %658 = vmatpush1.bf16.msra.mxu0 0
        %659 = vmatprep.subr.bf16.mxu0 0
        %660 = vmatpush1.bf16.msra.mxu0 0
        %661 = vmatprep.subr.bf16.mxu0 0
        %662 = vmatpush1.bf16.msra.mxu0 0
        %663 = vmatprep.subr.bf16.mxu0 0
        %664 = vmatpush1.bf16.msra.mxu0 0
        %665 = vmatprep.subr.bf16.mxu0 0
        %666 = vmatpush1.bf16.msra.mxu0 0
        %667 = vmatprep.subr.bf16.mxu0 0
        %668 = vmatpush1.bf16.msra.mxu0 0
        %669 = vmatprep.subr.bf16.mxu0 0
        %670 = vmatpush1.bf16.msra.mxu0 0
        %671 = vmatprep.subr.bf16.mxu0 0
        %672 = vmatpush1.bf16.msra.mxu0 0
        %673 = vmatprep.subr.bf16.mxu0 0
        %674 = vmatpush1.bf16.msra.mxu0 0
        %675 = vmatprep.subr.bf16.mxu0 0
        %676 = vmatpush1.bf16.msra.mxu0 0
        %677 = vmatprep.subr.bf16.mxu0 0
        %678 = vmatpush1.bf16.msra.mxu0 0
        %679 = vmatprep.subr.bf16.mxu0 0
        %680 = vmatpush1.bf16.msra.mxu0 0
        %681 = vmatprep.subr.bf16.mxu0 0
        %682 = vmatpush1.bf16.msra.mxu0 0
        %683 = vmatprep.mubr.bf16.mxu0 0
        %684 = vmatmul.mubr.bf16.gmra.mrb[0].mxu0 %v646
        %v685 = vpop.f32.mrb[0].mxu0
        %v686 = vadd.f32 0.0, %v685
        %v687 = vpop.f32.mrb[0].mxu0
        %v688 = vpop.f32.mrb[0].mxu0
        %v689 = vpop.f32.mrb[0].mxu0
        %690 = vdwg.mxu0
        %691 = vrot.lane.b32.xlu0 %v465, 112
        %v692 = vpop.permute.xlu0 %691
        %693 = vrot.lane.b32.xlu0 %v465, 80
        %v694 = vpop.permute.xlu0 %693
        %v696 = vsel %vm469, %v692, 0
        %v699 = vsel %vm469, %v694, 0
        %701 = vmatprep.subr.bf16.mxu0 0
        %702 = vmatpush1.bf16.xpose.msra.mxu0 %v699
        %703 = vmatprep.subr.bf16.mxu0 0
        %704 = vmatpush1.bf16.xpose.msra.mxu0 0
        %705 = vmatprep.subr.bf16.mxu0 0
        %706 = vmatpush1.bf16.xpose.msra.mxu0 0
        %707 = vmatprep.subr.bf16.mxu0 0
        %708 = vmatpush1.bf16.xpose.msra.mxu0 0
        %709 = vmatprep.subr.bf16.mxu0 0
        %710 = vmatpush1.bf16.xpose.msra.mxu0 0
        %711 = vmatprep.subr.bf16.mxu0 0
        %712 = vmatpush1.bf16.xpose.msra.mxu0 0
        %713 = vmatprep.subr.bf16.mxu0 0
        %714 = vmatpush1.bf16.xpose.msra.mxu0 0
        %715 = vmatprep.subr.bf16.mxu0 0
        %716 = vmatpush1.bf16.xpose.msra.mxu0 0
        %717 = vmatprep.subr.bf16.mxu0 0
        %718 = vmatpush1.bf16.xpose.msra.mxu0 0
        %719 = vmatprep.subr.bf16.mxu0 0
        %720 = vmatpush1.bf16.xpose.msra.mxu0 0
        %721 = vmatprep.subr.bf16.mxu0 0
        %722 = vmatpush1.bf16.xpose.msra.mxu0 0
        %723 = vmatprep.subr.bf16.mxu0 0
        %724 = vmatpush1.bf16.xpose.msra.mxu0 0
        %725 = vmatprep.subr.bf16.mxu0 0
        %726 = vmatpush1.bf16.xpose.msra.mxu0 0
        %727 = vmatprep.subr.bf16.mxu0 0
        %728 = vmatpush1.bf16.xpose.msra.mxu0 0
        %729 = vmatprep.subr.bf16.mxu0 0
        %730 = vmatpush1.bf16.xpose.msra.mxu0 0
        %731 = vmatprep.subr.bf16.mxu0 0
        %732 = vmatpush1.bf16.xpose.msra.mxu0 0
        %733 = vmatprep.mubr.bf16.mxu0 0
        %734 = vmatmul.mubr.bf16.gmra.mrb[0].mxu0 %v696
        %v735 = vpop.f32.mrb[0].mxu0
        %v736 = vadd.f32 0.0, %v735
        %v737 = vpop.f32.mrb[0].mxu0
        %v738 = vpop.f32.mrb[0].mxu0
        %v739 = vpop.f32.mrb[0].mxu0
        %740 = vdwg.mxu0
        %v741 = vmul.f32 %v736, 0.35355338
        %v742 = vadd.f32 %v741, %v464
        %v743 = vsel %vm469, %v742, -inf
        %744 = vmax.xlane.f32.xlu0 %v743
        %v745 = vpop.xlane.xlu0 %744
        %v746 = vsub.f32 %v742, %v745
        %v747 = vmul.f32 %v746, 1.442695
        %v748 = vpow.pop %v747
        %v749 = vsel %vm469, %v748, 0.0
        %750 = vadd.xlane.f32.xlu0 %v749
        %v751 = vpop.xlane.xlu0 %750
        %v752 = vrcp.pop %v751
        %v753 = vmul.f32 %v748, %v752
        %v754 = vpack.c.bf16 %v753, %v753
        %755 = vrot.lane.b32.xlu0 %v465, 48
        %v756 = vpop.permute.xlu0 %755
        %v758 = vsel %vm469, %v754, 0
        %v761 = vsel %vm535, %v756, 0
        %763 = vmatprep.subr.bf16.mxu0 0
        %764 = vmatpush1.bf16.msra.mxu0 %v761
        %765 = vmatprep.subr.bf16.mxu0 0
        %766 = vmatpush1.bf16.msra.mxu0 0
        %767 = vmatprep.subr.bf16.mxu0 0
        %768 = vmatpush1.bf16.msra.mxu0 0
        %769 = vmatprep.subr.bf16.mxu0 0
        %770 = vmatpush1.bf16.msra.mxu0 0
        %771 = vmatprep.subr.bf16.mxu0 0
        %772 = vmatpush1.bf16.msra.mxu0 0
        %773 = vmatprep.subr.bf16.mxu0 0
        %774 = vmatpush1.bf16.msra.mxu0 0
        %775 = vmatprep.subr.bf16.mxu0 0
        %776 = vmatpush1.bf16.msra.mxu0 0
        %777 = vmatprep.subr.bf16.mxu0 0
        %778 = vmatpush1.bf16.msra.mxu0 0
        %779 = vmatprep.subr.bf16.mxu0 0
        %780 = vmatpush1.bf16.msra.mxu0 0
        %781 = vmatprep.subr.bf16.mxu0 0
        %782 = vmatpush1.bf16.msra.mxu0 0
        %783 = vmatprep.subr.bf16.mxu0 0
        %784 = vmatpush1.bf16.msra.mxu0 0
        %785 = vmatprep.subr.bf16.mxu0 0
        %786 = vmatpush1.bf16.msra.mxu0 0
        %787 = vmatprep.subr.bf16.mxu0 0
        %788 = vmatpush1.bf16.msra.mxu0 0
        %789 = vmatprep.subr.bf16.mxu0 0
        %790 = vmatpush1.bf16.msra.mxu0 0
        %791 = vmatprep.subr.bf16.mxu0 0
        %792 = vmatpush1.bf16.msra.mxu0 0
        %793 = vmatprep.subr.bf16.mxu0 0
        %794 = vmatpush1.bf16.msra.mxu0 0
        %795 = vmatprep.mubr.bf16.mxu0 0
        %796 = vmatmul.mubr.bf16.gmra.mrb[0].mxu0 %v758
        %v797 = vpop.f32.mrb[0].mxu0
        %v798 = vadd.f32 0.0, %v797
        %v799 = vpop.f32.mrb[0].mxu0
        %v800 = vpop.f32.mrb[0].mxu0
        %v801 = vpop.f32.mrb[0].mxu0
        %802 = vdwg.mxu0
        %803 = vrot.lane.b32.xlu0 %v465, 104
        %v804 = vpop.permute.xlu0 %803
        %805 = vrot.lane.b32.xlu0 %v465, 72
        %v806 = vpop.permute.xlu0 %805
        %v808 = vsel %vm469, %v804, 0
        %v811 = vsel %vm469, %v806, 0
        %813 = vmatprep.subr.bf16.mxu0 0
        %814 = vmatpush1.bf16.xpose.msra.mxu0 %v811
        %815 = vmatprep.subr.bf16.mxu0 0
        %816 = vmatpush1.bf16.xpose.msra.mxu0 0
        %817 = vmatprep.subr.bf16.mxu0 0
        %818 = vmatpush1.bf16.xpose.msra.mxu0 0
        %819 = vmatprep.subr.bf16.mxu0 0
        %820 = vmatpush1.bf16.xpose.msra.mxu0 0
        %821 = vmatprep.subr.bf16.mxu0 0
        %822 = vmatpush1.bf16.xpose.msra.mxu0 0
        %823 = vmatprep.subr.bf16.mxu0 0
        %824 = vmatpush1.bf16.xpose.msra.mxu0 0
        %825 = vmatprep.subr.bf16.mxu0 0
        %826 = vmatpush1.bf16.xpose.msra.mxu0 0
        %827 = vmatprep.subr.bf16.mxu0 0
        %828 = vmatpush1.bf16.xpose.msra.mxu0 0
        %829 = vmatprep.subr.bf16.mxu0 0
        %830 = vmatpush1.bf16.xpose.msra.mxu0 0
        %831 = vmatprep.subr.bf16.mxu0 0
        %832 = vmatpush1.bf16.xpose.msra.mxu0 0
        %833 = vmatprep.subr.bf16.mxu0 0
        %834 = vmatpush1.bf16.xpose.msra.mxu0 0
        %835 = vmatprep.subr.bf16.mxu0 0
        %836 = vmatpush1.bf16.xpose.msra.mxu0 0
        %837 = vmatprep.subr.bf16.mxu0 0
        %838 = vmatpush1.bf16.xpose.msra.mxu0 0
        %839 = vmatprep.subr.bf16.mxu0 0
        %840 = vmatpush1.bf16.xpose.msra.mxu0 0
        %841 = vmatprep.subr.bf16.mxu0 0
        %842 = vmatpush1.bf16.xpose.msra.mxu0 0
        %843 = vmatprep.subr.bf16.mxu0 0
        %844 = vmatpush1.bf16.xpose.msra.mxu0 0
        %845 = vmatprep.mubr.bf16.mxu0 0
        %846 = vmatmul.mubr.bf16.gmra.mrb[0].mxu0 %v808
        %v847 = vpop.f32.mrb[0].mxu0
        %v848 = vadd.f32 0.0, %v847
        %v849 = vpop.f32.mrb[0].mxu0
        %v850 = vpop.f32.mrb[0].mxu0
        %v851 = vpop.f32.mrb[0].mxu0
        %852 = vdwg.mxu0
        %v853 = vmul.f32 %v848, 0.35355338
        %v854 = vadd.f32 %v853, %v464
        %v855 = vsel %vm469, %v854, -inf
        %856 = vmax.xlane.f32.xlu0 %v855
        %v857 = vpop.xlane.xlu0 %856
        %v858 = vsub.f32 %v854, %v857
        %v859 = vmul.f32 %v858, 1.442695
        %v860 = vpow.pop %v859
        %v861 = vsel %vm469, %v860, 0.0
        %862 = vadd.xlane.f32.xlu0 %v861
        %v863 = vpop.xlane.xlu0 %862
        %v864 = vrcp.pop %v863
        %v865 = vmul.f32 %v860, %v864
        %v866 = vpack.c.bf16 %v865, %v865
        %867 = vrot.lane.b32.xlu0 %v465, 40
        %v868 = vpop.permute.xlu0 %867
        %v870 = vsel %vm469, %v866, 0
        %v873 = vsel %vm535, %v868, 0
        %875 = vmatprep.subr.bf16.mxu0 0
        %876 = vmatpush1.bf16.msra.mxu0 %v873
        %877 = vmatprep.subr.bf16.mxu0 0
        %878 = vmatpush1.bf16.msra.mxu0 0
        %879 = vmatprep.subr.bf16.mxu0 0
        %880 = vmatpush1.bf16.msra.mxu0 0
        %881 = vmatprep.subr.bf16.mxu0 0
        %882 = vmatpush1.bf16.msra.mxu0 0
        %883 = vmatprep.subr.bf16.mxu0 0
        %884 = vmatpush1.bf16.msra.mxu0 0
        %885 = vmatprep.subr.bf16.mxu0 0
        %886 = vmatpush1.bf16.msra.mxu0 0
        %887 = vmatprep.subr.bf16.mxu0 0
        %888 = vmatpush1.bf16.msra.mxu0 0
        %889 = vmatprep.subr.bf16.mxu0 0
        %890 = vmatpush1.bf16.msra.mxu0 0
        %891 = vmatprep.subr.bf16.mxu0 0
        %892 = vmatpush1.bf16.msra.mxu0 0
        %893 = vmatprep.subr.bf16.mxu0 0
        %894 = vmatpush1.bf16.msra.mxu0 0
        %895 = vmatprep.subr.bf16.mxu0 0
        %896 = vmatpush1.bf16.msra.mxu0 0
        %897 = vmatprep.subr.bf16.mxu0 0
        %898 = vmatpush1.bf16.msra.mxu0 0
        %899 = vmatprep.subr.bf16.mxu0 0
        %900 = vmatpush1.bf16.msra.mxu0 0
        %901 = vmatprep.subr.bf16.mxu0 0
        %902 = vmatpush1.bf16.msra.mxu0 0
        %903 = vmatprep.subr.bf16.mxu0 0
        %904 = vmatpush1.bf16.msra.mxu0 0
        %905 = vmatprep.subr.bf16.mxu0 0
        %906 = vmatpush1.bf16.msra.mxu0 0
        %907 = vmatprep.mubr.bf16.mxu0 0
        %908 = vmatmul.mubr.bf16.gmra.mrb[0].mxu0 %v870
        %v909 = vpop.f32.mrb[0].mxu0
        %v910 = vadd.f32 0.0, %v909
        %v911 = vpop.f32.mrb[0].mxu0
        %v912 = vpop.f32.mrb[0].mxu0
        %v913 = vpop.f32.mrb[0].mxu0
        %914 = vdwg.mxu0
        %916 = vrot.lane.b32.xlu0 %v686, 8
        %v917 = vpop.permute.xlu0 %916
        %920 = vrot.lane.b32.xlu0 %v798, 16
        %v921 = vpop.permute.xlu0 %920
        %924 = vrot.lane.b32.xlu0 %v910, 24
        %v925 = vpop.permute.xlu0 %924
        %v927 = vsel %vm469, %v574, %v917
        %vm928 = vcmask 130048
        %v929 = vsel %vm928, %v927, %v921
        %vm930 = vcmask 195584
        %v931 = vsel %vm930, %v929, %v925
        %v932 = vpack.c.bf16 %v931, %v931
        %v933 = vld [vmem:[#allocation4] sm:$0xff]
        %v934 = vld [vmem:[#allocation4 + $0x8] sm:$0xff]
        %v935 = vld [vmem:[#allocation4 + $0x10] sm:$0xff]
        %v936 = vld [vmem:[#allocation4 + $0x18] sm:$0xff]
        %v937 = vpack.c.bf16 %v934, %v933
        %v938 = vpack.c.bf16 %v936, %v935
        %v939 = vld [vmem:[#allocation6] sm:$0x1]
        %v941 = vlaneseq
        %v942 = vshrl.u32 %v941, 7
        %v943 = vsub.s32 0, %v942
        %v944 = vrot.slane %v939, %v943
        %v947 = vsel %vm418, %v932, 0
        %949 = vmatprep.subr.bf16.mxu0 0
        %950 = vmatpush1.bf16.msra.mxu0 %v937
        %951 = vmatprep.subr.bf16.mxu0 0
        %952 = vmatpush1.bf16.msra.mxu0 %v938
        %953 = vmatprep.subr.bf16.mxu0 0
        %954 = vmatpush1.bf16.msra.mxu0 0
        %955 = vmatprep.subr.bf16.mxu0 0
        %956 = vmatpush1.bf16.msra.mxu0 0
        %957 = vmatprep.subr.bf16.mxu0 0
        %958 = vmatpush1.bf16.msra.mxu0 0
        %959 = vmatprep.subr.bf16.mxu0 0
        %960 = vmatpush1.bf16.msra.mxu0 0
        %961 = vmatprep.subr.bf16.mxu0 0
        %962 = vmatpush1.bf16.msra.mxu0 0
        %963 = vmatprep.subr.bf16.mxu0 0
        %964 = vmatpush1.bf16.msra.mxu0 0
        %965 = vmatprep.subr.bf16.mxu0 0
        %966 = vmatpush1.bf16.msra.mxu0 0
        %967 = vmatprep.subr.bf16.mxu0 0
        %968 = vmatpush1.bf16.msra.mxu0 0
        %969 = vmatprep.subr.bf16.mxu0 0
        %970 = vmatpush1.bf16.msra.mxu0 0
        %971 = vmatprep.subr.bf16.mxu0 0
        %972 = vmatpush1.bf16.msra.mxu0 0
        %973 = vmatprep.subr.bf16.mxu0 0
        %974 = vmatpush1.bf16.msra.mxu0 0
        %975 = vmatprep.subr.bf16.mxu0 0
        %976 = vmatpush1.bf16.msra.mxu0 0
        %977 = vmatprep.subr.bf16.mxu0 0
        %978 = vmatpush1.bf16.msra.mxu0 0
        %979 = vmatprep.subr.bf16.mxu0 0
        %980 = vmatpush1.bf16.msra.mxu0 0
        %981 = vmatprep.mubr.bf16.mxu0 0
        %982 = vmatmul.mubr.bf16.gmra.mrb[0].mxu0 %v947
        %v983 = vpop.f32.mrb[0].mxu0
        %v984 = vadd.f32 %v944, %v983
        %v985 = vpop.f32.mrb[0].mxu0
        %v986 = vpop.f32.mrb[0].mxu0
        %v987 = vpop.f32.mrb[0].mxu0
        %988 = vdwg.mxu0
        %v989 = vadd.f32 %v403, %v984
        %v990 = vsel %vm418, %v989, 0.0
        %991 = vadd.xlane.f32.xlu0 %v990
        %v992 = vpop.xlane.xlu0 %991
        %v993 = vrcp.pop 32.0
        %v994 = vmul.f32 %v992, %v993
        %v995 = vsub.f32 %v989, %v994
        %v996 = vmul.f32 %v995, %v995
        %v997 = vsel %vm418, %v996, 0.0
        %998 = vadd.xlane.f32.xlu0 %v997
        %v999 = vpop.xlane.xlu0 %998
        %v1000 = vmul.f32 %v999, %v993
        %v1001 = vadd.f32 %v1000, 1e-05
        %v1002 = vrsqrt.pop %v1001
        %v1003 = vmul.f32 %v995, %v1002
        %v1004 = vld [vmem:[%s7] sm:$0x1]
        %v1006 = vlaneseq
        %v1007 = vshrl.u32 %v1006, 7
        %v1008 = vsub.s32 0, %v1007
        %v1009 = vrot.slane %v1004, %v1008
        %v1011 = vmul.f32 %v1003, %v1009
        %v1012 = vld [vmem:[%s8] sm:$0x1]
        %v1014 = vlaneseq
        %v1015 = vshrl.u32 %v1014, 7
        %v1016 = vsub.s32 0, %v1015
        %v1017 = vrot.slane %v1012, %v1016
        %v1019 = vadd.f32 %v1011, %v1017
        %1020 = vst.msk [vmem:[%s401] sm:$0xff] %vm418, %v1019
        %p1021 = scmp.lt.s32.totalorder %s22, 1
        %s1022 = scalar_select %p1021, %s22, 1
        %s1023 = smul.addr %s1022, 8
        %s1024 = scalar_lea.vmem %s9, %s1023
        // Predicated region
        $region69: #{transformer_decoder_layer.3} parent=55 // pred_check
          %p1025 = pneg %p244
        $region70: #{transformer_decoder_layer.3} parent=55 // pred_check_branch
          %1027 = sbr.rel (%p1025) target = $region72
        $region71: #{transformer_decoder_layer.3} parent=55 // pred_region
          _
        $region72: #{transformer_decoder_layer.3} parent=55 // pred_fallthru
          _
      $region56: #{transformer_decoder_layer.3} parent=5 // pred_fallthru
        _
      %p1028 = scmp.le.s32.totalorder 2, %s17
      // Predicated region
      $region73: #{transformer_decoder_layer.3} parent=5 // pred_check
        %p1029 = pneg %p1028
      $region74: #{transformer_decoder_layer.3} parent=5 // pred_check_branch
        %1031 = sbr.rel (%p1029) target = $region76
      $region75: #{transformer_decoder_layer.3} parent=5 // pred_region
        %s1032 = ssub.s32 %s17, 2
        // Predicated region
        $region77: #{transformer_decoder_layer.3} parent=75 // pred_check
          %p1033 = pneg %p250
        $region78: #{transformer_decoder_layer.3} parent=75 // pred_check_branch
          %1035 = sbr.rel (%p1033) target = $region80
        $region79: #{transformer_decoder_layer.3} parent=75 // pred_region
          %p1036 = scmp.lt.s32.totalorder %s23, 1
          %s1037 = scalar_select %p1036, %s23, 1
          %s1038 = smul.addr %s1037, 8
          %s1039 = scalar_lea.vmem %s9, %s1038
        $region80: #{transformer_decoder_layer.3} parent=75 // pred_fallthru
          _
      $region76: #{transformer_decoder_layer.3} parent=5 // pred_fallthru
        _
    $region6: #{transformer_decoder_layer.3} parent=1 // loop_footer
      %s21 = sadd.s32 1, %s17
    $region7: #{transformer_decoder_layer.3} parent=1 // loop_footer_branch
      %16 = sbr.rel target = $region3
    $region8: #{transformer_decoder_layer.3} parent=1 // loop_exit
      _
    %1040 = vsyncpa [#allocation3], 1
    %s1041 = scalar_lea.sflag [#allocation3], 1
    %1042 = vsyncpa %s1041, 1
    %1043 = vsyncpa [#allocation5], 1

// kernel: transformer_decoder_layer.4
$region0: #{transformer_decoder_layer.4}
  #allocation0 [shape = 'u32[]', space=smem, size = 0x4, offset = 0x4, fixed_abs, tag = 'smem constant byte address 0x4 - core index']
  #allocation1 [shape = 'u32[144,128]{1,0:T(1,128)}', space=vmem, size = 0x12000, scoped, tag = 'internal scratch']
  %s0 = inlined_call_operand.vmem [shape: f32[2,8,32], index: 0, kind: input, shape index: {}]
  %s1 = inlined_call_operand.vmem [shape: f32[2,8,32], index: 1, kind: input, shape index: {}]
  %s2 = inlined_call_operand.vmem [shape: f32[2,1,8,8], index: 2, kind: input, shape index: {}]
  %s3 = inlined_call_operand.vmem [shape: f32[32,96], index: 3, kind: input, shape index: {}]
  %s4 = inlined_call_operand.vmem [shape: f32[1,96], index: 4, kind: input, shape index: {}]
  %s5 = inlined_call_operand.vmem [shape: f32[32,32], index: 5, kind: input, shape index: {}]
  %s6 = inlined_call_operand.vmem [shape: f32[1,32], index: 6, kind: input, shape index: {}]
  %s7 = inlined_call_operand.vmem [shape: f32[1,32], index: 7, kind: input, shape index: {}]
  %s8 = inlined_call_operand.vmem [shape: f32[1,32], index: 8, kind: input, shape index: {}]
  %s9 = inlined_call_operand.vmem [shape: f32[2,8,32], index: 9, kind: output, shape index: {0}]
  %s10 = inlined_call_operand.hbm [shape: f32[2,4,8,8], index: 10, kind: output, shape index: {1}]
  %11 = xla_tuple %s9, %s10
  %s12 = sld [smem:[#allocation0]]
  $region77: #{transformer_decoder_layer.4} parent=0
    _
  %s14 = ssub.s32 1, %s12
  %s15 = scalar_select 0, %s14, %s12
  $region1: #{transformer_decoder_layer.4} parent=0
    #allocation2 [shape = 'u8[32768]{0}', space=vmem, size = 0x8000, scoped, tag = 'output window, operand 1']
    #allocation3 [shape = 's32[2]{0}', space=sflag, size = 0x8, scoped, tag = 'scoped memory for transformer_decoder_layer.4']
    %16 = vsyncpa [#allocation3], 0
    %s17 = scalar_lea.sflag [#allocation3], 1
    %18 = vsyncpa %s17, 0
    loop: start=0, step=1, limit=4
    $region2: #{transformer_decoder_layer.4} parent=1 // loop_pre_header
      _
    $region3: #{transformer_decoder_layer.4} parent=1 // loop_header
      %s20 = sphi 0, %s24
      %p21 = scmp.ge.s32.totalorder %s20, 4
      %s30 = sphi 0, %s32
      %s33 = sphi 0, %s30
      %s34 = sphi 0, %s33
      %s50 = sphi 0, %s34
      %s56 = sphi 0, %s58
      %s59 = sphi 0, %s56
      %s60 = sphi 0, %s59
      %s76 = sphi 0, %s60
      %s82 = sphi 0, %s84
      %s85 = sphi 0, %s82
      %s86 = sphi 0, %s85
      %s102 = sphi 0, %s86
      %s106 = sphi 0, %s106
      %s108 = sphi 0, %s106
      %s109 = sphi 0, %s108
      %s123 = sphi 0, %s109
      %s127 = sphi 0, %s127
      %s129 = sphi 0, %s127
      %s130 = sphi 0, %s129
      %s144 = sphi 0, %s130
      %s148 = sphi 0, %s148
      %s150 = sphi 0, %s148
      %s151 = sphi 0, %s150
      %s165 = sphi 0, %s151
      %s169 = sphi 0, %s169
      %s171 = sphi 0, %s169
      %s172 = sphi 0, %s171
      %s186 = sphi 0, %s172
      %s190 = sphi 0, %s190
      %s192 = sphi 0, %s190
      %s193 = sphi 0, %s192
      %s207 = sphi 0, %s193
      %s211 = sphi 0, %s211
      %s213 = sphi 0, %s211
      %s214 = sphi 0, %s213
      %s228 = sphi 0, %s214
      %s234 = sphi 0, %s236
      %s237 = sphi 0, %s234
      %s238 = sphi 0, %s237
      %s254 = sphi 0, %s238
      %s260 = sphi 0, %s262
      %s263 = sphi 0, %s260
      %s264 = sphi 0, %s263
      %s280 = sphi 0, %s264
    $region4: #{transformer_decoder_layer.4} parent=1 // loop_header_branch
      %23 = sbr.rel (%p21) target = $region8
    $region5: #{transformer_decoder_layer.4} parent=1 // loop_body
      %s25 = ssub.s32 %s20, 1
      %s26 = ssub.s32 %s20, 2
      %s27 = sadd.s32 %s20, 1
      %s28 = ssub.s32 %s20, %s27
      %p29 = scmp.eq.s32.totalorder %s28, 0
      %s31 = sadd.s32 %s30, 1
      %s32 = scalar_select %p29, %s30, %s31
      %p35 = pneg %p29
      %p36 = scmp.eq.s32.totalorder %s20, 1
      %p37 = por %p35, %p36
      %p38 = scmp.ne.s32.totalorder %s30, %s33
      %p39 = scmp.eq.s32.totalorder %s20, 0
      %p40 = por %p38, %p39
      %p41 = scmp.ne.s32.totalorder %s30, %s33
      %p42 = scmp.eq.s32.totalorder %s25, 1
      %p43 = por %p41, %p42
      %p44 = scmp.ne.s32.totalorder %s33, %s34
      %p45 = scmp.eq.s32.totalorder %s25, 0
      %p46 = por %p44, %p45
      %p47 = scmp.ne.s32.totalorder %s33, %s34
      %p48 = scmp.eq.s32.totalorder %s26, 1
      %p49 = por %p47, %p48
      %p51 = scmp.ne.s32.totalorder %s34, %s50
      %p52 = scmp.eq.s32.totalorder %s26, 0
      %p53 = por %p51, %p52
      %s54 = ssub.s32 %s20, %s27
      %p55 = scmp.eq.s32.totalorder %s54, 0
      %s57 = sadd.s32 %s56, 1
      %s58 = scalar_select %p55, %s56, %s57
      %p61 = pneg %p55
      %p62 = scmp.eq.s32.totalorder %s20, 1
      %p63 = por %p61, %p62
      %p64 = scmp.ne.s32.totalorder %s56, %s59
      %p65 = scmp.eq.s32.totalorder %s20, 0
      %p66 = por %p64, %p65
      %p67 = scmp.ne.s32.totalorder %s56, %s59
      %p68 = scmp.eq.s32.totalorder %s25, 1
      %p69 = por %p67, %p68
      %p70 = scmp.ne.s32.totalorder %s59, %s60
      %p71 = scmp.eq.s32.totalorder %s25, 0
      %p72 = por %p70, %p71
      %p73 = scmp.ne.s32.totalorder %s59, %s60
      %p74 = scmp.eq.s32.totalorder %s26, 1
      %p75 = por %p73, %p74
      %p77 = scmp.ne.s32.totalorder %s60, %s76
      %p78 = scmp.eq.s32.totalorder %s26, 0
      %p79 = por %p77, %p78
      %s80 = ssub.s32 %s20, %s27
      %p81 = scmp.eq.s32.totalorder %s80, 0
      %s83 = sadd.s32 %s82, 1
      %s84 = scalar_select %p81, %s82, %s83
      %p87 = pneg %p81
      %p88 = scmp.eq.s32.totalorder %s20, 1
      %p89 = por %p87, %p88
      %p90 = scmp.ne.s32.totalorder %s82, %s85
      %p91 = scmp.eq.s32.totalorder %s20, 0
      %p92 = por %p90, %p91
      %p93 = scmp.ne.s32.totalorder %s82, %s85
      %p94 = scmp.eq.s32.totalorder %s25, 1
      %p95 = por %p93, %p94
      %p96 = scmp.ne.s32.totalorder %s85, %s86
      %p97 = scmp.eq.s32.totalorder %s25, 0
      %p98 = por %p96, %p97
      %p99 = scmp.ne.s32.totalorder %s85, %s86
      %p100 = scmp.eq.s32.totalorder %s26, 1
      %p101 = por %p99, %p100
      %p103 = scmp.ne.s32.totalorder %s86, %s102
      %p104 = scmp.eq.s32.totalorder %s26, 0
      %p105 = por %p103, %p104
      %s107 = sadd.s32 %s106, 1
      %p110 = scmp.eq.s32.totalorder %s20, 1
      %p111 = scmp.ne.s32.totalorder %s106, %s108
      %p112 = scmp.eq.s32.totalorder %s20, 0
      %p113 = por %p111, %p112
      %p114 = scmp.ne.s32.totalorder %s106, %s108
      %p115 = scmp.eq.s32.totalorder %s25, 1
      %p116 = por %p114, %p115
      %p117 = scmp.ne.s32.totalorder %s108, %s109
      %p118 = scmp.eq.s32.totalorder %s25, 0
      %p119 = por %p117, %p118
      %p120 = scmp.ne.s32.totalorder %s108, %s109
      %p121 = scmp.eq.s32.totalorder %s26, 1
      %p122 = por %p120, %p121
      %p124 = scmp.ne.s32.totalorder %s109, %s123
      %p125 = scmp.eq.s32.totalorder %s26, 0
      %p126 = por %p124, %p125
      %s128 = sadd.s32 %s127, 1
      %p131 = scmp.eq.s32.totalorder %s20, 1
      %p132 = scmp.ne.s32.totalorder %s127, %s129
      %p133 = scmp.eq.s32.totalorder %s20, 0
      %p134 = por %p132, %p133
      %p135 = scmp.ne.s32.totalorder %s127, %s129
      %p136 = scmp.eq.s32.totalorder %s25, 1
      %p137 = por %p135, %p136
      %p138 = scmp.ne.s32.totalorder %s129, %s130
      %p139 = scmp.eq.s32.totalorder %s25, 0
      %p140 = por %p138, %p139
      %p141 = scmp.ne.s32.totalorder %s129, %s130
      %p142 = scmp.eq.s32.totalorder %s26, 1
      %p143 = por %p141, %p142
      %p145 = scmp.ne.s32.totalorder %s130, %s144
      %p146 = scmp.eq.s32.totalorder %s26, 0
      %p147 = por %p145, %p146
      %s149 = sadd.s32 %s148, 1
      %p152 = scmp.eq.s32.totalorder %s20, 1
      %p153 = scmp.ne.s32.totalorder %s148, %s150
      %p154 = scmp.eq.s32.totalorder %s20, 0
      %p155 = por %p153, %p154
      %p156 = scmp.ne.s32.totalorder %s148, %s150
      %p157 = scmp.eq.s32.totalorder %s25, 1
      %p158 = por %p156, %p157
      %p159 = scmp.ne.s32.totalorder %s150, %s151
      %p160 = scmp.eq.s32.totalorder %s25, 0
      %p161 = por %p159, %p160
      %p162 = scmp.ne.s32.totalorder %s150, %s151
      %p163 = scmp.eq.s32.totalorder %s26, 1
      %p164 = por %p162, %p163
      %p166 = scmp.ne.s32.totalorder %s151, %s165
      %p167 = scmp.eq.s32.totalorder %s26, 0
      %p168 = por %p166, %p167
      %s170 = sadd.s32 %s169, 1
      %p173 = scmp.eq.s32.totalorder %s20, 1
      %p174 = scmp.ne.s32.totalorder %s169, %s171
      %p175 = scmp.eq.s32.totalorder %s20, 0
      %p176 = por %p174, %p175
      %p177 = scmp.ne.s32.totalorder %s169, %s171
      %p178 = scmp.eq.s32.totalorder %s25, 1
      %p179 = por %p177, %p178
      %p180 = scmp.ne.s32.totalorder %s171, %s172
      %p181 = scmp.eq.s32.totalorder %s25, 0
      %p182 = por %p180, %p181
      %p183 = scmp.ne.s32.totalorder %s171, %s172
      %p184 = scmp.eq.s32.totalorder %s26, 1
      %p185 = por %p183, %p184
      %p187 = scmp.ne.s32.totalorder %s172, %s186
      %p188 = scmp.eq.s32.totalorder %s26, 0
      %p189 = por %p187, %p188
      %s191 = sadd.s32 %s190, 1
      %p194 = scmp.eq.s32.totalorder %s20, 1
      %p195 = scmp.ne.s32.totalorder %s190, %s192
      %p196 = scmp.eq.s32.totalorder %s20, 0
      %p197 = por %p195, %p196
      %p198 = scmp.ne.s32.totalorder %s190, %s192
      %p199 = scmp.eq.s32.totalorder %s25, 1
      %p200 = por %p198, %p199
      %p201 = scmp.ne.s32.totalorder %s192, %s193
      %p202 = scmp.eq.s32.totalorder %s25, 0
      %p203 = por %p201, %p202
      %p204 = scmp.ne.s32.totalorder %s192, %s193
      %p205 = scmp.eq.s32.totalorder %s26, 1
      %p206 = por %p204, %p205
      %p208 = scmp.ne.s32.totalorder %s193, %s207
      %p209 = scmp.eq.s32.totalorder %s26, 0
      %p210 = por %p208, %p209
      %s212 = sadd.s32 %s211, 1
      %p215 = scmp.eq.s32.totalorder %s20, 1
      %p216 = scmp.ne.s32.totalorder %s211, %s213
      %p217 = scmp.eq.s32.totalorder %s20, 0
      %p218 = por %p216, %p217
      %p219 = scmp.ne.s32.totalorder %s211, %s213
      %p220 = scmp.eq.s32.totalorder %s25, 1
      %p221 = por %p219, %p220
      %p222 = scmp.ne.s32.totalorder %s213, %s214
      %p223 = scmp.eq.s32.totalorder %s25, 0
      %p224 = por %p222, %p223
      %p225 = scmp.ne.s32.totalorder %s213, %s214
      %p226 = scmp.eq.s32.totalorder %s26, 1
      %p227 = por %p225, %p226
      %p229 = scmp.ne.s32.totalorder %s214, %s228
      %p230 = scmp.eq.s32.totalorder %s26, 0
      %p231 = por %p229, %p230
      %s232 = ssub.s32 %s20, %s27
      %p233 = scmp.eq.s32.totalorder %s232, 0
      %s235 = sadd.s32 %s234, 1
      %s236 = scalar_select %p233, %s234, %s235
      %p239 = pneg %p233
      %p240 = scmp.eq.s32.totalorder %s20, 1
      %p241 = por %p239, %p240
      %p242 = scmp.ne.s32.totalorder %s234, %s237
      %p243 = scmp.eq.s32.totalorder %s20, 0
      %p244 = por %p242, %p243
      %p245 = scmp.ne.s32.totalorder %s234, %s237
      %p246 = scmp.eq.s32.totalorder %s25, 1
      %p247 = por %p245, %p246
      %p248 = scmp.ne.s32.totalorder %s237, %s238
      %p249 = scmp.eq.s32.totalorder %s25, 0
      %p250 = por %p248, %p249
      %p251 = scmp.ne.s32.totalorder %s237, %s238
      %p252 = scmp.eq.s32.totalorder %s26, 1
      %p253 = por %p251, %p252
      %p255 = scmp.ne.s32.totalorder %s238, %s254
      %p256 = scmp.eq.s32.totalorder %s26, 0
      %p257 = por %p255, %p256
      %s258 = ssub.s32 %s20, %s27
      %p259 = scmp.eq.s32.totalorder %s258, 0
      %s261 = sadd.s32 %s260, 1
      %s262 = scalar_select %p259, %s260, %s261
      %p265 = pneg %p259
      %p266 = scmp.eq.s32.totalorder %s20, 1
      %p267 = por %p265, %p266
      %p268 = scmp.ne.s32.totalorder %s260, %s263
      %p269 = scmp.eq.s32.totalorder %s20, 0
      %p270 = por %p268, %p269
      %p271 = scmp.ne.s32.totalorder %s260, %s263
      %p272 = scmp.eq.s32.totalorder %s25, 1
      %p273 = por %p271, %p272
      %p274 = scmp.ne.s32.totalorder %s263, %s264
      %p275 = scmp.eq.s32.totalorder %s25, 0
      %p276 = por %p274, %p275
      %p277 = scmp.ne.s32.totalorder %s263, %s264
      %p278 = scmp.eq.s32.totalorder %s26, 1
      %p279 = por %p277, %p278
      %p281 = scmp.ne.s32.totalorder %s264, %s280
      %p282 = scmp.eq.s32.totalorder %s26, 0
      %p283 = por %p281, %p282
      %p284 = scmp.le.s32.totalorder 1, %s20
      %p285 = scmp.lt.s32.totalorder %s20, 3
      %p286 = pnand %p284, %p285
      %p287 = pneg %p286
      // Predicated region
      $region9: #{transformer_decoder_layer.4} parent=5 // pred_check
        _
      $region10: #{transformer_decoder_layer.4} parent=5 // pred_check_branch
        %289 = sbr.rel (%p286) target = $region12
      $region11: #{transformer_decoder_layer.4} parent=5 // pred_region
        %s290 = ssub.s32 %s20, 1
        // Predicated region
        $region13: #{transformer_decoder_layer.4} parent=11 // pred_check
          %p291 = pneg %p119
        $region14: #{transformer_decoder_layer.4} parent=11 // pred_check_branch
          %293 = sbr.rel (%p291) target = $region16
        $region15: #{transformer_decoder_layer.4} parent=11 // pred_region
          _
        $region16: #{transformer_decoder_layer.4} parent=11 // pred_fallthru
          _
        // Predicated region
        $region17: #{transformer_decoder_layer.4} parent=11 // pred_check
          %p294 = pneg %p140
        $region18: #{transformer_decoder_layer.4} parent=11 // pred_check_branch
          %296 = sbr.rel (%p294) target = $region20
        $region19: #{transformer_decoder_layer.4} parent=11 // pred_region
          _
        $region20: #{transformer_decoder_layer.4} parent=11 // pred_fallthru
          _
        // Predicated region
        $region21: #{transformer_decoder_layer.4} parent=11 // pred_check
          %p297 = pneg %p161
        $region22: #{transformer_decoder_layer.4} parent=11 // pred_check_branch
          %299 = sbr.rel (%p297) target = $region24
        $region23: #{transformer_decoder_layer.4} parent=11 // pred_region
          _
        $region24: #{transformer_decoder_layer.4} parent=11 // pred_fallthru
          _
        // Predicated region
        $region25: #{transformer_decoder_layer.4} parent=11 // pred_check
          %p300 = pneg %p182
        $region26: #{transformer_decoder_layer.4} parent=11 // pred_check_branch
          %302 = sbr.rel (%p300) target = $region28
        $region27: #{transformer_decoder_layer.4} parent=11 // pred_region
          _
        $region28: #{transformer_decoder_layer.4} parent=11 // pred_fallthru
          _
        // Predicated region
        $region29: #{transformer_decoder_layer.4} parent=11 // pred_check
          %p303 = pneg %p203
        $region30: #{transformer_decoder_layer.4} parent=11 // pred_check_branch
          %305 = sbr.rel (%p303) target = $region32
        $region31: #{transformer_decoder_layer.4} parent=11 // pred_region
          _
        $region32: #{transformer_decoder_layer.4} parent=11 // pred_fallthru
          _
        // Predicated region
        $region33: #{transformer_decoder_layer.4} parent=11 // pred_check
          %p306 = pneg %p224
        $region34: #{transformer_decoder_layer.4} parent=11 // pred_check_branch
          %308 = sbr.rel (%p306) target = $region36
        $region35: #{transformer_decoder_layer.4} parent=11 // pred_region
          _
        $region36: #{transformer_decoder_layer.4} parent=11 // pred_fallthru
          _
      $region12: #{transformer_decoder_layer.4} parent=5 // pred_fallthru
        _
      %p309 = scmp.lt.s32.totalorder %s20, 2
      // Predicated region
      $region37: #{transformer_decoder_layer.4} parent=5 // pred_check
        %p310 = pneg %p309
      $region38: #{transformer_decoder_layer.4} parent=5 // pred_check_branch
        %312 = sbr.rel (%p310) target = $region40
      $region39: #{transformer_decoder_layer.4} parent=5 // pred_region
        // Predicated region
        $region41: #{transformer_decoder_layer.4} parent=39 // pred_check
          %p313 = pneg %p40
        $region42: #{transformer_decoder_layer.4} parent=39 // pred_check_branch
          %315 = sbr.rel (%p313) target = $region44
        $region43: #{transformer_decoder_layer.4} parent=39 // pred_region
          %p316 = scmp.lt.s32.totalorder %s20, 1
          %s317 = scalar_select %p316, %s20, 1
          %s318 = smul.addr %s317, 8
          %s319 = scalar_lea.vmem %s0, %s318
        $region44: #{transformer_decoder_layer.4} parent=39 // pred_fallthru
          _
        // Predicated region
        $region45: #{transformer_decoder_layer.4} parent=39 // pred_check
          %p320 = pneg %p66
        $region46: #{transformer_decoder_layer.4} parent=39 // pred_check_branch
          %322 = sbr.rel (%p320) target = $region48
        $region47: #{transformer_decoder_layer.4} parent=39 // pred_region
          %p323 = scmp.lt.s32.totalorder %s20, 1
          %s324 = scalar_select %p323, %s20, 1
          %s325 = smul.addr %s324, 8
          %s326 = scalar_lea.vmem %s1, %s325
        $region48: #{transformer_decoder_layer.4} parent=39 // pred_fallthru
          _
        // Predicated region
        $region49: #{transformer_decoder_layer.4} parent=39 // pred_check
          %p327 = pneg %p92
        $region50: #{transformer_decoder_layer.4} parent=39 // pred_check_branch
          %329 = sbr.rel (%p327) target = $region52
        $region51: #{transformer_decoder_layer.4} parent=39 // pred_region
          %p330 = scmp.lt.s32.totalorder %s20, 1
          %s331 = scalar_select %p330, %s20, 1
          %s332 = smul.addr %s331, 8
          %s333 = scalar_lea.vmem %s2, %s332
        $region52: #{transformer_decoder_layer.4} parent=39 // pred_fallthru
          _
      $region40: #{transformer_decoder_layer.4} parent=5 // pred_fallthru
        _
      %p334 = scmp.le.s32.totalorder 1, %s20
      %p335 = scmp.lt.s32.totalorder %s20, 3
      %p336 = pnand %p334, %p335
      %p337 = pneg %p336
      // Predicated region
      $region53: #{transformer_decoder_layer.4} parent=5 // pred_check
        _
      $region54: #{transformer_decoder_layer.4} parent=5 // pred_check_branch
        %339 = sbr.rel (%p336) target = $region56
      $region55: #{transformer_decoder_layer.4} parent=5 // pred_region
        %s340 = ssub.s32 %s20, 1
        %p341 = scmp.lt.s32.totalorder %s25, 1
        %s342 = scalar_select %p341, %s25, 1
        %s343 = smul.addr %s342, 8
        %s344 = scalar_lea.vmem %s0, %s343
        %p345 = pneg %p46
        %p346 = pneg %p43
        %p347 = scmp.lt.s32.totalorder %s25, 1
        %s348 = scalar_select %p347, %s25, 1
        %s349 = smul.addr %s348, 8
        %s350 = scalar_lea.vmem %s1, %s349
        %p351 = pneg %p72
        %p352 = pneg %p69
        %p353 = scmp.lt.s32.totalorder %s25, 1
        %s354 = scalar_select %p353, %s25, 1
        %s355 = smul.addr %s354, 8
        %s356 = scalar_lea.vmem %s2, %s355
        %p357 = pneg %p98
        %p358 = pneg %p95
        %p359 = pneg %p119
        %p360 = pneg %p116
        %p361 = pneg %p140
        %p362 = pneg %p137
        %p363 = pneg %p161
        %p364 = pneg %p158
        %p365 = pneg %p182
        %p366 = pneg %p179
        %p367 = pneg %p203
        %p368 = pneg %p200
        %p369 = pneg %p224
        %p370 = pneg %p221
        %p371 = pneg %p250
        %p372 = pneg %p247
        %p373 = scmp.lt.s32.totalorder %s25, 1
        %s374 = scalar_select %p373, %s25, 1
        %s375 = smul.addr %s374, 8
        %s376 = scalar_lea.vmem %s9, %s375
        %p377 = pneg %p276
        %p378 = pneg %p273
        %s379 = sand.u32 %s263, 1
        %s380 = scalar_lea.sflag [#allocation3], %s379
        %s381 = sand.u32 %s263, 1
        %s382 = smul.addr %s381, 32
        %s383 = scalar_lea.vmem [#allocation2], %s382
        %p384 = scmp.lt.s32.totalorder %s25, 1
        %s385 = scalar_select %p384, %s25, 1
        %s386 = smul.addr %s385, 8
        %s387 = scalar_lea.vmem %s0, %s386
        %p388 = scmp.lt.s32.totalorder %s25, 1
        %s389 = scalar_select %p388, %s25, 1
        %s390 = smul.addr %s389, 8
        %s391 = scalar_lea.vmem %s1, %s390
        %p392 = scmp.lt.s32.totalorder %s25, 1
        %s393 = scalar_select %p392, %s25, 1
        %s394 = smul.addr %s393, 8
        %s395 = scalar_lea.vmem %s2, %s394
        %p396 = scmp.lt.s32.totalorder %s25, 1
        %s397 = scalar_select %p396, %s25, 1
        %s398 = smul.addr %s397, 8
        %s399 = scalar_lea.vmem %s9, %s398
        %v401 = vld [vmem:[%s387] sm:$0xff]
        %v402 = vld [vmem:[%s4] sm:$0x1]
        %v403 = vld [vmem:[%s391] sm:$0xff]
        %v404 = vld [vmem:[%s3] sm:$0xff]
        %v405 = vld [vmem:[%s3 + $0x8] sm:$0xff]
        %v406 = vld [vmem:[%s3 + $0x10] sm:$0xff]
        %v407 = vld [vmem:[%s3 + $0x18] sm:$0xff]
        %v408 = vpack.c.bf16 %v401, %v401
        %v409 = vpack.c.bf16 %v405, %v404
        %v410 = vpack.c.bf16 %v407, %v406
        %v412 = vlaneseq
        %v413 = vshrl.u32 %v412, 7
        %v414 = vsub.s32 0, %v413
        %v415 = vrot.slane %v402, %v414
        %vm417 = vcmask 261120
        %v419 = vsel %vm417, %v408, 0
        %421 = vmatprep.subr.bf16.mxu0 0
        %422 = vmatpush1.bf16.msra.mxu0 %v409
        %423 = vmatprep.subr.bf16.mxu0 0
        %424 = vmatpush1.bf16.msra.mxu0 %v410
        %425 = vmatprep.subr.bf16.mxu0 0
        %426 = vmatpush1.bf16.msra.mxu0 0
        %427 = vmatprep.subr.bf16.mxu0 0
        %428 = vmatpush1.bf16.msra.mxu0 0
        %429 = vmatprep.subr.bf16.mxu0 0
        %430 = vmatpush1.bf16.msra.mxu0 0
        %431 = vmatprep.subr.bf16.mxu0 0
        %432 = vmatpush1.bf16.msra.mxu0 0
        %433 = vmatprep.subr.bf16.mxu0 0
        %434 = vmatpush1.bf16.msra.mxu0 0
        %435 = vmatprep.subr.bf16.mxu0 0
        %436 = vmatpush1.bf16.msra.mxu0 0
        %437 = vmatprep.subr.bf16.mxu0 0
        %438 = vmatpush1.bf16.msra.mxu0 0
        %439 = vmatprep.subr.bf16.mxu0 0
        %440 = vmatpush1.bf16.msra.mxu0 0
        %441 = vmatprep.subr.bf16.mxu0 0
        %442 = vmatpush1.bf16.msra.mxu0 0
        %443 = vmatprep.subr.bf16.mxu0 0
        %444 = vmatpush1.bf16.msra.mxu0 0
        %445 = vmatprep.subr.bf16.mxu0 0
        %446 = vmatpush1.bf16.msra.mxu0 0
        %447 = vmatprep.subr.bf16.mxu0 0
        %448 = vmatpush1.bf16.msra.mxu0 0
        %449 = vmatprep.subr.bf16.mxu0 0
        %450 = vmatpush1.bf16.msra.mxu0 0
        %451 = vmatprep.subr.bf16.mxu0 0
        %452 = vmatpush1.bf16.msra.mxu0 0
        %453 = vmatprep.mubr.bf16.mxu0 0
        %454 = vmatmul.mubr.bf16.gmra.mrb[0].mxu0 %v419
        %v455 = vpop.f32.mrb[0].mxu0
        %v456 = vadd.f32 %v415, %v455
        %v457 = vpop.f32.mrb[0].mxu0
        %v458 = vpop.f32.mrb[0].mxu0
        %v459 = vpop.f32.mrb[0].mxu0
        %460 = vdwg.mxu0
        %v461 = vpack.c.bf16 %v403, %v403
        %464 = vrot.lane.b32.xlu0 %v409, 96
        %v465 = vpop.permute.xlu0 %464
        %466 = vrot.lane.b32.xlu0 %v410, 96
        %v467 = vpop.permute.xlu0 %466
        %470 = vrot.lane.b32.xlu0 %v415, 96
        %v471 = vpop.permute.xlu0 %470
        %v474 = vsel %vm417, %v461, 0
        %476 = vmatprep.subr.bf16.mxu0 0
        %477 = vmatpush1.bf16.msra.mxu0 %v465
        %478 = vmatprep.subr.bf16.mxu0 0
        %479 = vmatpush1.bf16.msra.mxu0 %v467
        %480 = vmatprep.subr.bf16.mxu0 0
        %481 = vmatpush1.bf16.msra.mxu0 0
        %482 = vmatprep.subr.bf16.mxu0 0
        %483 = vmatpush1.bf16.msra.mxu0 0
        %484 = vmatprep.subr.bf16.mxu0 0
        %485 = vmatpush1.bf16.msra.mxu0 0
        %486 = vmatprep.subr.bf16.mxu0 0
        %487 = vmatpush1.bf16.msra.mxu0 0
        %488 = vmatprep.subr.bf16.mxu0 0
        %489 = vmatpush1.bf16.msra.mxu0 0
        %490 = vmatprep.subr.bf16.mxu0 0
        %491 = vmatpush1.bf16.msra.mxu0 0
        %492 = vmatprep.subr.bf16.mxu0 0
        %493 = vmatpush1.bf16.msra.mxu0 0
        %494 = vmatprep.subr.bf16.mxu0 0
        %495 = vmatpush1.bf16.msra.mxu0 0
        %496 = vmatprep.subr.bf16.mxu0 0
        %497 = vmatpush1.bf16.msra.mxu0 0
        %498 = vmatprep.subr.bf16.mxu0 0
        %499 = vmatpush1.bf16.msra.mxu0 0
        %500 = vmatprep.subr.bf16.mxu0 0
        %501 = vmatpush1.bf16.msra.mxu0 0
        %502 = vmatprep.subr.bf16.mxu0 0
        %503 = vmatpush1.bf16.msra.mxu0 0
        %504 = vmatprep.subr.bf16.mxu0 0
        %505 = vmatpush1.bf16.msra.mxu0 0
        %506 = vmatprep.subr.bf16.mxu0 0
        %507 = vmatpush1.bf16.msra.mxu0 0
        %508 = vmatprep.mubr.bf16.mxu0 0
        %509 = vmatmul.mubr.bf16.gmra.mrb[0].mxu0 %v474
        %v510 = vpop.f32.mrb[0].mxu0
        %v511 = vadd.f32 %v471, %v510
        %v512 = vpop.f32.mrb[0].mxu0
        %v513 = vpop.f32.mrb[0].mxu0
        %v514 = vpop.f32.mrb[0].mxu0
        %515 = vdwg.mxu0
        %v516 = vld [vmem:[%s395] sm:$0xff]
        %v517 = vsub.f32 %v516, 1.0
        %v518 = vmul.f32 %v517, 1e+09
        %v519 = vpack.c.bf16 %v456, %v456
        %v520 = vpack.c.bf16 %v511, %v511
        %vm521 = vcmask 64512
        %v523 = vsel %vm521, %v519, 0
        %v526 = vsel %vm521, %v520, 0
        %528 = vmatprep.subr.bf16.mxu0 0
        %529 = vmatpush1.bf16.xpose.msra.mxu0 %v526
        %530 = vmatprep.subr.bf16.mxu0 0
        %531 = vmatpush1.bf16.xpose.msra.mxu0 0
        %532 = vmatprep.subr.bf16.mxu0 0
        %533 = vmatpush1.bf16.xpose.msra.mxu0 0
        %534 = vmatprep.subr.bf16.mxu0 0
        %535 = vmatpush1.bf16.xpose.msra.mxu0 0
        %536 = vmatprep.subr.bf16.mxu0 0
        %537 = vmatpush1.bf16.xpose.msra.mxu0 0
        %538 = vmatprep.subr.bf16.mxu0 0
        %539 = vmatpush1.bf16.xpose.msra.mxu0 0
        %540 = vmatprep.subr.bf16.mxu0 0
        %541 = vmatpush1.bf16.xpose.msra.mxu0 0
        %542 = vmatprep.subr.bf16.mxu0 0
        %543 = vmatpush1.bf16.xpose.msra.mxu0 0
        %544 = vmatprep.subr.bf16.mxu0 0
        %545 = vmatpush1.bf16.xpose.msra.mxu0 0
        %546 = vmatprep.subr.bf16.mxu0 0
        %547 = vmatpush1.bf16.xpose.msra.mxu0 0
        %548 = vmatprep.subr.bf16.mxu0 0
        %549 = vmatpush1.bf16.xpose.msra.mxu0 0
        %550 = vmatprep.subr.bf16.mxu0 0
        %551 = vmatpush1.bf16.xpose.msra.mxu0 0
        %552 = vmatprep.subr.bf16.mxu0 0
        %553 = vmatpush1.bf16.xpose.msra.mxu0 0
        %554 = vmatprep.subr.bf16.mxu0 0
        %555 = vmatpush1.bf16.xpose.msra.mxu0 0
        %556 = vmatprep.subr.bf16.mxu0 0
        %557 = vmatpush1.bf16.xpose.msra.mxu0 0
        %558 = vmatprep.subr.bf16.mxu0 0
        %559 = vmatpush1.bf16.xpose.msra.mxu0 0
        %560 = vmatprep.mubr.bf16.mxu0 0
        %561 = vmatmul.mubr.bf16.gmra.mrb[0].mxu0 %v523
        %v562 = vpop.f32.mrb[0].mxu0
        %v563 = vadd.f32 0.0, %v562
        %v564 = vpop.f32.mrb[0].mxu0
        %v565 = vpop.f32.mrb[0].mxu0
        %v566 = vpop.f32.mrb[0].mxu0
        %567 = vdwg.mxu0
        %v568 = vmul.f32 %v563, 0.35355338
        %v569 = vadd.f32 %v568, %v518
        %v570 = vsel %vm521, %v569, -inf
        %571 = vmax.xlane.f32.xlu0 %v570
        %v572 = vpop.xlane.xlu0 %571
        %v573 = vsub.f32 %v569, %v572
        %v574 = vmul.f32 %v573, 1.442695
        %v575 = vpow.pop %v574
        %v576 = vsel %vm521, %v575, 0.0
        %577 = vadd.xlane.f32.xlu0 %v576
        %v578 = vpop.xlane.xlu0 %577
        %v579 = vrcp.pop %v578
        %v580 = vmul.f32 %v575, %v579
        %v581 = vpack.c.bf16 %v580, %v580
        %583 = vrot.lane.b32.xlu0 %v520, 96
        %v584 = vpop.permute.xlu0 %583
        %v586 = vsel %vm521, %v581, 0
        %vm588 = vcmask 1043456
        %v590 = vsel %vm588, %v584, 0
        %592 = vmatprep.subr.bf16.mxu0 0
        %593 = vmatpush1.bf16.msra.mxu0 %v590
        %594 = vmatprep.subr.bf16.mxu0 0
        %595 = vmatpush1.bf16.msra.mxu0 0
        %596 = vmatprep.subr.bf16.mxu0 0
        %597 = vmatpush1.bf16.msra.mxu0 0
        %598 = vmatprep.subr.bf16.mxu0 0
        %599 = vmatpush1.bf16.msra.mxu0 0
        %600 = vmatprep.subr.bf16.mxu0 0
        %601 = vmatpush1.bf16.msra.mxu0 0
        %602 = vmatprep.subr.bf16.mxu0 0
        %603 = vmatpush1.bf16.msra.mxu0 0
        %604 = vmatprep.subr.bf16.mxu0 0
        %605 = vmatpush1.bf16.msra.mxu0 0
        %606 = vmatprep.subr.bf16.mxu0 0
        %607 = vmatpush1.bf16.msra.mxu0 0
        %608 = vmatprep.subr.bf16.mxu0 0
        %609 = vmatpush1.bf16.msra.mxu0 0
        %610 = vmatprep.subr.bf16.mxu0 0
        %611 = vmatpush1.bf16.msra.mxu0 0
        %612 = vmatprep.subr.bf16.mxu0 0
        %613 = vmatpush1.bf16.msra.mxu0 0
        %614 = vmatprep.subr.bf16.mxu0 0
        %615 = vmatpush1.bf16.msra.mxu0 0
        %616 = vmatprep.subr.bf16.mxu0 0
        %617 = vmatpush1.bf16.msra.mxu0 0
        %618 = vmatprep.subr.bf16.mxu0 0
        %619 = vmatpush1.bf16.msra.mxu0 0
        %620 = vmatprep.subr.bf16.mxu0 0
        %621 = vmatpush1.bf16.msra.mxu0 0
        %622 = vmatprep.subr.bf16.mxu0 0
        %623 = vmatpush1.bf16.msra.mxu0 0
        %624 = vmatprep.mubr.bf16.mxu0 0
        %625 = vmatmul.mubr.bf16.gmra.mrb[0].mxu0 %v586
        %v626 = vpop.f32.mrb[0].mxu0
        %v627 = vadd.f32 0.0, %v626
        %v628 = vpop.f32.mrb[0].mxu0
        %v629 = vpop.f32.mrb[0].mxu0
        %v630 = vpop.f32.mrb[0].mxu0
        %631 = vdwg.mxu0
        %632 = vst.msk [vmem:[%s383] sm:$0xff] %vm521, %v580
        %634 = vrot.lane.b32.xlu0 %v519, 120
        %v635 = vpop.permute.xlu0 %634
        %636 = vrot.lane.b32.xlu0 %v520, 120
        %v637 = vpop.permute.xlu0 %636
        %v639 = vsel %vm521, %v635, 0
        %v642 = vsel %vm521, %v637, 0
        %644 = vmatprep.subr.bf16.mxu0 0
        %645 = vmatpush1.bf16.xpose.msra.mxu0 %v642
        %646 = vmatprep.subr.bf16.mxu0 0
        %647 = vmatpush1.bf16.xpose.msra.mxu0 0
        %648 = vmatprep.subr.bf16.mxu0 0
        %649 = vmatpush1.bf16.xpose.msra.mxu0 0
        %650 = vmatprep.subr.bf16.mxu0 0
        %651 = vmatpush1.bf16.xpose.msra.mxu0 0
        %652 = vmatprep.subr.bf16.mxu0 0
        %653 = vmatpush1.bf16.xpose.msra.mxu0 0
        %654 = vmatprep.subr.bf16.mxu0 0
        %655 = vmatpush1.bf16.xpose.msra.mxu0 0
        %656 = vmatprep.subr.bf16.mxu0 0
        %657 = vmatpush1.bf16.xpose.msra.mxu0 0
        %658 = vmatprep.subr.bf16.mxu0 0
        %659 = vmatpush1.bf16.xpose.msra.mxu0 0
        %660 = vmatprep.subr.bf16.mxu0 0
        %661 = vmatpush1.bf16.xpose.msra.mxu0 0
        %662 = vmatprep.subr.bf16.mxu0 0
        %663 = vmatpush1.bf16.xpose.msra.mxu0 0
        %664 = vmatprep.subr.bf16.mxu0 0
        %665 = vmatpush1.bf16.xpose.msra.mxu0 0
        %666 = vmatprep.subr.bf16.mxu0 0
        %667 = vmatpush1.bf16.xpose.msra.mxu0 0
        %668 = vmatprep.subr.bf16.mxu0 0
        %669 = vmatpush1.bf16.xpose.msra.mxu0 0
        %670 = vmatprep.subr.bf16.mxu0 0
        %671 = vmatpush1.bf16.xpose.msra.mxu0 0
        %672 = vmatprep.subr.bf16.mxu0 0
        %673 = vmatpush1.bf16.xpose.msra.mxu0 0
        %674 = vmatprep.subr.bf16.mxu0 0
        %675 = vmatpush1.bf16.xpose.msra.mxu0 0
        %676 = vmatprep.mubr.bf16.mxu0 0
        %677 = vmatmul.mubr.bf16.gmra.mrb[0].mxu0 %v639
        %v678 = vpop.f32.mrb[0].mxu0
        %v679 = vadd.f32 0.0, %v678
        %v680 = vpop.f32.mrb[0].mxu0
        %v681 = vpop.f32.mrb[0].mxu0
        %v682 = vpop.f32.mrb[0].mxu0
        %683 = vdwg.mxu0
        %v684 = vmul.f32 %v679, 0.35355338
        %v685 = vadd.f32 %v684, %v518
        %v686 = vsel %vm521, %v685, -inf
        %687 = vmax.xlane.f32.xlu0 %v686
        %v688 = vpop.xlane.xlu0 %687
        %v689 = vsub.f32 %v685, %v688
        %v690 = vmul.f32 %v689, 1.442695
        %v691 = vpow.pop %v690
        %v692 = vsel %vm521, %v691, 0.0
        %693 = vadd.xlane.f32.xlu0 %v692
        %v694 = vpop.xlane.xlu0 %693
        %v695 = vrcp.pop %v694
        %v696 = vmul.f32 %v691, %v695
        %v697 = vpack.c.bf16 %v696, %v696
        %698 = vrot.lane.b32.xlu0 %v520, 88
        %v699 = vpop.permute.xlu0 %698
        %v701 = vsel %vm521, %v697, 0
        %v704 = vsel %vm588, %v699, 0
        %706 = vmatprep.subr.bf16.mxu0 0
        %707 = vmatpush1.bf16.msra.mxu0 %v704
        %708 = vmatprep.subr.bf16.mxu0 0
        %709 = vmatpush1.bf16.msra.mxu0 0
        %710 = vmatprep.subr.bf16.mxu0 0
        %711 = vmatpush1.bf16.msra.mxu0 0
        %712 = vmatprep.subr.bf16.mxu0 0
        %713 = vmatpush1.bf16.msra.mxu0 0
        %714 = vmatprep.subr.bf16.mxu0 0
        %715 = vmatpush1.bf16.msra.mxu0 0
        %716 = vmatprep.subr.bf16.mxu0 0
        %717 = vmatpush1.bf16.msra.mxu0 0
        %718 = vmatprep.subr.bf16.mxu0 0
        %719 = vmatpush1.bf16.msra.mxu0 0
        %720 = vmatprep.subr.bf16.mxu0 0
        %721 = vmatpush1.bf16.msra.mxu0 0
        %722 = vmatprep.subr.bf16.mxu0 0
        %723 = vmatpush1.bf16.msra.mxu0 0
        %724 = vmatprep.subr.bf16.mxu0 0
        %725 = vmatpush1.bf16.msra.mxu0 0
        %726 = vmatprep.subr.bf16.mxu0 0
        %727 = vmatpush1.bf16.msra.mxu0 0
        %728 = vmatprep.subr.bf16.mxu0 0
        %729 = vmatpush1.bf16.msra.mxu0 0
        %730 = vmatprep.subr.bf16.mxu0 0
        %731 = vmatpush1.bf16.msra.mxu0 0
        %732 = vmatprep.subr.bf16.mxu0 0
        %733 = vmatpush1.bf16.msra.mxu0 0
        %734 = vmatprep.subr.bf16.mxu0 0
        %735 = vmatpush1.bf16.msra.mxu0 0
        %736 = vmatprep.subr.bf16.mxu0 0
        %737 = vmatpush1.bf16.msra.mxu0 0
        %738 = vmatprep.mubr.bf16.mxu0 0
        %739 = vmatmul.mubr.bf16.gmra.mrb[0].mxu0 %v701
        %v740 = vpop.f32.mrb[0].mxu0
        %v741 = vadd.f32 0.0, %v740
        %v742 = vpop.f32.mrb[0].mxu0
        %v743 = vpop.f32.mrb[0].mxu0
        %v744 = vpop.f32.mrb[0].mxu0
        %745 = vdwg.mxu0
        %s746 = scalar_lea.vmem %s383, 8 [#allocation2]
        %747 = vst.msk [vmem:[%s746] sm:$0xff] %vm521, %v696
        %748 = vrot.lane.b32.xlu0 %v519, 112
        %v749 = vpop.permute.xlu0 %748
        %750 = vrot.lane.b32.xlu0 %v520, 112
        %v751 = vpop.permute.xlu0 %750
        %v753 = vsel %vm521, %v749, 0
        %v756 = vsel %vm521, %v751, 0
        %758 = vmatprep.subr.bf16.mxu0 0
        %759 = vmatpush1.bf16.xpose.msra.mxu0 %v756
        %760 = vmatprep.subr.bf16.mxu0 0
        %761 = vmatpush1.bf16.xpose.msra.mxu0 0
        %762 = vmatprep.subr.bf16.mxu0 0
        %763 = vmatpush1.bf16.xpose.msra.mxu0 0
        %764 = vmatprep.subr.bf16.mxu0 0
        %765 = vmatpush1.bf16.xpose.msra.mxu0 0
        %766 = vmatprep.subr.bf16.mxu0 0
        %767 = vmatpush1.bf16.xpose.msra.mxu0 0
        %768 = vmatprep.subr.bf16.mxu0 0
        %769 = vmatpush1.bf16.xpose.msra.mxu0 0
        %770 = vmatprep.subr.bf16.mxu0 0
        %771 = vmatpush1.bf16.xpose.msra.mxu0 0
        %772 = vmatprep.subr.bf16.mxu0 0
        %773 = vmatpush1.bf16.xpose.msra.mxu0 0
        %774 = vmatprep.subr.bf16.mxu0 0
        %775 = vmatpush1.bf16.xpose.msra.mxu0 0
        %776 = vmatprep.subr.bf16.mxu0 0
        %777 = vmatpush1.bf16.xpose.msra.mxu0 0
        %778 = vmatprep.subr.bf16.mxu0 0
        %779 = vmatpush1.bf16.xpose.msra.mxu0 0
        %780 = vmatprep.subr.bf16.mxu0 0
        %781 = vmatpush1.bf16.xpose.msra.mxu0 0
        %782 = vmatprep.subr.bf16.mxu0 0
        %783 = vmatpush1.bf16.xpose.msra.mxu0 0
        %784 = vmatprep.subr.bf16.mxu0 0
        %785 = vmatpush1.bf16.xpose.msra.mxu0 0
        %786 = vmatprep.subr.bf16.mxu0 0
        %787 = vmatpush1.bf16.xpose.msra.mxu0 0
        %788 = vmatprep.subr.bf16.mxu0 0
        %789 = vmatpush1.bf16.xpose.msra.mxu0 0
        %790 = vmatprep.mubr.bf16.mxu0 0
        %791 = vmatmul.mubr.bf16.gmra.mrb[0].mxu0 %v753
        %v792 = vpop.f32.mrb[0].mxu0
        %v793 = vadd.f32 0.0, %v792
        %v794 = vpop.f32.mrb[0].mxu0
        %v795 = vpop.f32.mrb[0].mxu0
        %v796 = vpop.f32.mrb[0].mxu0
        %797 = vdwg.mxu0
        %v798 = vmul.f32 %v793, 0.35355338
        %v799 = vadd.f32 %v798, %v518
        %v800 = vsel %vm521, %v799, -inf
        %801 = vmax.xlane.f32.xlu0 %v800
        %v802 = vpop.xlane.xlu0 %801
        %v803 = vsub.f32 %v799, %v802
        %v804 = vmul.f32 %v803, 1.442695
        %v805 = vpow.pop %v804
        %v806 = vsel %vm521, %v805, 0.0
        %807 = vadd.xlane.f32.xlu0 %v806
        %v808 = vpop.xlane.xlu0 %807
        %v809 = vrcp.pop %v808
        %v810 = vmul.f32 %v805, %v809
        %v811 = vpack.c.bf16 %v810, %v810
        %812 = vrot.lane.b32.xlu0 %v520, 80
        %v813 = vpop.permute.xlu0 %812
        %v815 = vsel %vm521, %v811, 0
        %v818 = vsel %vm588, %v813, 0
        %820 = vmatprep.subr.bf16.mxu0 0
        %821 = vmatpush1.bf16.msra.mxu0 %v818
        %822 = vmatprep.subr.bf16.mxu0 0
        %823 = vmatpush1.bf16.msra.mxu0 0
        %824 = vmatprep.subr.bf16.mxu0 0
        %825 = vmatpush1.bf16.msra.mxu0 0
        %826 = vmatprep.subr.bf16.mxu0 0
        %827 = vmatpush1.bf16.msra.mxu0 0
        %828 = vmatprep.subr.bf16.mxu0 0
        %829 = vmatpush1.bf16.msra.mxu0 0
        %830 = vmatprep.subr.bf16.mxu0 0
        %831 = vmatpush1.bf16.msra.mxu0 0
        %832 = vmatprep.subr.bf16.mxu0 0
        %833 = vmatpush1.bf16.msra.mxu0 0
        %834 = vmatprep.subr.bf16.mxu0 0
        %835 = vmatpush1.bf16.msra.mxu0 0
        %836 = vmatprep.subr.bf16.mxu0 0
        %837 = vmatpush1.bf16.msra.mxu0 0
        %838 = vmatprep.subr.bf16.mxu0 0
        %839 = vmatpush1.bf16.msra.mxu0 0
        %840 = vmatprep.subr.bf16.mxu0 0
        %841 = vmatpush1.bf16.msra.mxu0 0
        %842 = vmatprep.subr.bf16.mxu0 0
        %843 = vmatpush1.bf16.msra.mxu0 0
        %844 = vmatprep.subr.bf16.mxu0 0
        %845 = vmatpush1.bf16.msra.mxu0 0
        %846 = vmatprep.subr.bf16.mxu0 0
        %847 = vmatpush1.bf16.msra.mxu0 0
        %848 = vmatprep.subr.bf16.mxu0 0
        %849 = vmatpush1.bf16.msra.mxu0 0
        %850 = vmatprep.subr.bf16.mxu0 0
        %851 = vmatpush1.bf16.msra.mxu0 0
        %852 = vmatprep.mubr.bf16.mxu0 0
        %853 = vmatmul.mubr.bf16.gmra.mrb[0].mxu0 %v815
        %v854 = vpop.f32.mrb[0].mxu0
        %v855 = vadd.f32 0.0, %v854
        %v856 = vpop.f32.mrb[0].mxu0
        %v857 = vpop.f32.mrb[0].mxu0
        %v858 = vpop.f32.mrb[0].mxu0
        %859 = vdwg.mxu0
        %s860 = scalar_lea.vmem %s383, 16 [#allocation2]
        %861 = vst.msk [vmem:[%s860] sm:$0xff] %vm521, %v810
        %862 = vrot.lane.b32.xlu0 %v519, 104
        %v863 = vpop.permute.xlu0 %862
        %864 = vrot.lane.b32.xlu0 %v520, 104
        %v865 = vpop.permute.xlu0 %864
        %v867 = vsel %vm521, %v863, 0
        %v870 = vsel %vm521, %v865, 0
        %872 = vmatprep.subr.bf16.mxu0 0
        %873 = vmatpush1.bf16.xpose.msra.mxu0 %v870
        %874 = vmatprep.subr.bf16.mxu0 0
        %875 = vmatpush1.bf16.xpose.msra.mxu0 0
        %876 = vmatprep.subr.bf16.mxu0 0
        %877 = vmatpush1.bf16.xpose.msra.mxu0 0
        %878 = vmatprep.subr.bf16.mxu0 0
        %879 = vmatpush1.bf16.xpose.msra.mxu0 0
        %880 = vmatprep.subr.bf16.mxu0 0
        %881 = vmatpush1.bf16.xpose.msra.mxu0 0
        %882 = vmatprep.subr.bf16.mxu0 0
        %883 = vmatpush1.bf16.xpose.msra.mxu0 0
        %884 = vmatprep.subr.bf16.mxu0 0
        %885 = vmatpush1.bf16.xpose.msra.mxu0 0
        %886 = vmatprep.subr.bf16.mxu0 0
        %887 = vmatpush1.bf16.xpose.msra.mxu0 0
        %888 = vmatprep.subr.bf16.mxu0 0
        %889 = vmatpush1.bf16.xpose.msra.mxu0 0
        %890 = vmatprep.subr.bf16.mxu0 0
        %891 = vmatpush1.bf16.xpose.msra.mxu0 0
        %892 = vmatprep.subr.bf16.mxu0 0
        %893 = vmatpush1.bf16.xpose.msra.mxu0 0
        %894 = vmatprep.subr.bf16.mxu0 0
        %895 = vmatpush1.bf16.xpose.msra.mxu0 0
        %896 = vmatprep.subr.bf16.mxu0 0
        %897 = vmatpush1.bf16.xpose.msra.mxu0 0
        %898 = vmatprep.subr.bf16.mxu0 0
        %899 = vmatpush1.bf16.xpose.msra.mxu0 0
        %900 = vmatprep.subr.bf16.mxu0 0
        %901 = vmatpush1.bf16.xpose.msra.mxu0 0
        %902 = vmatprep.subr.bf16.mxu0 0
        %903 = vmatpush1.bf16.xpose.msra.mxu0 0
        %904 = vmatprep.mubr.bf16.mxu0 0
        %905 = vmatmul.mubr.bf16.gmra.mrb[0].mxu0 %v867
        %v906 = vpop.f32.mrb[0].mxu0
        %v907 = vadd.f32 0.0, %v906
        %v908 = vpop.f32.mrb[0].mxu0
        %v909 = vpop.f32.mrb[0].mxu0
        %v910 = vpop.f32.mrb[0].mxu0
        %911 = vdwg.mxu0
        %v912 = vmul.f32 %v907, 0.35355338
        %v913 = vadd.f32 %v912, %v518
        %v914 = vsel %vm521, %v913, -inf
        %915 = vmax.xlane.f32.xlu0 %v914
        %v916 = vpop.xlane.xlu0 %915
        %v917 = vsub.f32 %v913, %v916
        %v918 = vmul.f32 %v917, 1.442695
        %v919 = vpow.pop %v918
        %v920 = vsel %vm521, %v919, 0.0
        %921 = vadd.xlane.f32.xlu0 %v920
        %v922 = vpop.xlane.xlu0 %921
        %v923 = vrcp.pop %v922
        %v924 = vmul.f32 %v919, %v923
        %v925 = vpack.c.bf16 %v924, %v924
        %926 = vrot.lane.b32.xlu0 %v520, 72
        %v927 = vpop.permute.xlu0 %926
        %v929 = vsel %vm521, %v925, 0
        %v932 = vsel %vm588, %v927, 0
        %934 = vmatprep.subr.bf16.mxu0 0
        %935 = vmatpush1.bf16.msra.mxu0 %v932
        %936 = vmatprep.subr.bf16.mxu0 0
        %937 = vmatpush1.bf16.msra.mxu0 0
        %938 = vmatprep.subr.bf16.mxu0 0
        %939 = vmatpush1.bf16.msra.mxu0 0
        %940 = vmatprep.subr.bf16.mxu0 0
        %941 = vmatpush1.bf16.msra.mxu0 0
        %942 = vmatprep.subr.bf16.mxu0 0
        %943 = vmatpush1.bf16.msra.mxu0 0
        %944 = vmatprep.subr.bf16.mxu0 0
        %945 = vmatpush1.bf16.msra.mxu0 0
        %946 = vmatprep.subr.bf16.mxu0 0
        %947 = vmatpush1.bf16.msra.mxu0 0
        %948 = vmatprep.subr.bf16.mxu0 0
        %949 = vmatpush1.bf16.msra.mxu0 0
        %950 = vmatprep.subr.bf16.mxu0 0
        %951 = vmatpush1.bf16.msra.mxu0 0
        %952 = vmatprep.subr.bf16.mxu0 0
        %953 = vmatpush1.bf16.msra.mxu0 0
        %954 = vmatprep.subr.bf16.mxu0 0
        %955 = vmatpush1.bf16.msra.mxu0 0
        %956 = vmatprep.subr.bf16.mxu0 0
        %957 = vmatpush1.bf16.msra.mxu0 0
        %958 = vmatprep.subr.bf16.mxu0 0
        %959 = vmatpush1.bf16.msra.mxu0 0
        %960 = vmatprep.subr.bf16.mxu0 0
        %961 = vmatpush1.bf16.msra.mxu0 0
        %962 = vmatprep.subr.bf16.mxu0 0
        %963 = vmatpush1.bf16.msra.mxu0 0
        %964 = vmatprep.subr.bf16.mxu0 0
        %965 = vmatpush1.bf16.msra.mxu0 0
        %966 = vmatprep.mubr.bf16.mxu0 0
        %967 = vmatmul.mubr.bf16.gmra.mrb[0].mxu0 %v929
        %v968 = vpop.f32.mrb[0].mxu0
        %v969 = vadd.f32 0.0, %v968
        %v970 = vpop.f32.mrb[0].mxu0
        %v971 = vpop.f32.mrb[0].mxu0
        %v972 = vpop.f32.mrb[0].mxu0
        %973 = vdwg.mxu0
        %s974 = scalar_lea.vmem %s383, 24 [#allocation2]
        %975 = vst.msk [vmem:[%s974] sm:$0xff] %vm521, %v924
        %977 = vrot.lane.b32.xlu0 %v741, 8
        %v978 = vpop.permute.xlu0 %977
        %981 = vrot.lane.b32.xlu0 %v855, 16
        %v982 = vpop.permute.xlu0 %981
        %985 = vrot.lane.b32.xlu0 %v969, 24
        %v986 = vpop.permute.xlu0 %985
        %v988 = vsel %vm521, %v627, %v978
        %vm989 = vcmask 130048
        %v990 = vsel %vm989, %v988, %v982
        %vm991 = vcmask 195584
        %v992 = vsel %vm991, %v990, %v986
        %v993 = vpack.c.bf16 %v992, %v992
        %v994 = vld [vmem:[%s5] sm:$0xff]
        %v995 = vld [vmem:[%s5 + $0x8] sm:$0xff]
        %v996 = vld [vmem:[%s5 + $0x10] sm:$0xff]
        %v997 = vld [vmem:[%s5 + $0x18] sm:$0xff]
        %v998 = vpack.c.bf16 %v995, %v994
        %v999 = vpack.c.bf16 %v997, %v996
        %v1000 = vld [vmem:[%s6] sm:$0x1]
        %v1002 = vlaneseq
        %v1003 = vshrl.u32 %v1002, 7
        %v1004 = vsub.s32 0, %v1003
        %v1005 = vrot.slane %v1000, %v1004
        %v1008 = vsel %vm417, %v993, 0
        %1010 = vmatprep.subr.bf16.mxu0 0
        %1011 = vmatpush1.bf16.msra.mxu0 %v998
        %1012 = vmatprep.subr.bf16.mxu0 0
        %1013 = vmatpush1.bf16.msra.mxu0 %v999
        %1014 = vmatprep.subr.bf16.mxu0 0
        %1015 = vmatpush1.bf16.msra.mxu0 0
        %1016 = vmatprep.subr.bf16.mxu0 0
        %1017 = vmatpush1.bf16.msra.mxu0 0
        %1018 = vmatprep.subr.bf16.mxu0 0
        %1019 = vmatpush1.bf16.msra.mxu0 0
        %1020 = vmatprep.subr.bf16.mxu0 0
        %1021 = vmatpush1.bf16.msra.mxu0 0
        %1022 = vmatprep.subr.bf16.mxu0 0
        %1023 = vmatpush1.bf16.msra.mxu0 0
        %1024 = vmatprep.subr.bf16.mxu0 0
        %1025 = vmatpush1.bf16.msra.mxu0 0
        %1026 = vmatprep.subr.bf16.mxu0 0
        %1027 = vmatpush1.bf16.msra.mxu0 0
        %1028 = vmatprep.subr.bf16.mxu0 0
        %1029 = vmatpush1.bf16.msra.mxu0 0
        %1030 = vmatprep.subr.bf16.mxu0 0
        %1031 = vmatpush1.bf16.msra.mxu0 0
        %1032 = vmatprep.subr.bf16.mxu0 0
        %1033 = vmatpush1.bf16.msra.mxu0 0
        %1034 = vmatprep.subr.bf16.mxu0 0
        %1035 = vmatpush1.bf16.msra.mxu0 0
        %1036 = vmatprep.subr.bf16.mxu0 0
        %1037 = vmatpush1.bf16.msra.mxu0 0
        %1038 = vmatprep.subr.bf16.mxu0 0
        %1039 = vmatpush1.bf16.msra.mxu0 0
        %1040 = vmatprep.subr.bf16.mxu0 0
        %1041 = vmatpush1.bf16.msra.mxu0 0
        %1042 = vmatprep.mubr.bf16.mxu0 0
        %1043 = vmatmul.mubr.bf16.gmra.mrb[0].mxu0 %v1008
        %v1044 = vpop.f32.mrb[0].mxu0
        %v1045 = vadd.f32 %v1005, %v1044
        %v1046 = vpop.f32.mrb[0].mxu0
        %v1047 = vpop.f32.mrb[0].mxu0
        %v1048 = vpop.f32.mrb[0].mxu0
        %1049 = vdwg.mxu0
        %v1050 = vadd.f32 %v401, %v1045
        %v1051 = vsel %vm417, %v1050, 0.0
        %1052 = vadd.xlane.f32.xlu0 %v1051
        %v1053 = vpop.xlane.xlu0 %1052
        %v1054 = vrcp.pop 32.0
        %v1055 = vmul.f32 %v1053, %v1054
        %v1056 = vsub.f32 %v1050, %v1055
        %v1057 = vmul.f32 %v1056, %v1056
        %v1058 = vsel %vm417, %v1057, 0.0
        %1059 = vadd.xlane.f32.xlu0 %v1058
        %v1060 = vpop.xlane.xlu0 %1059
        %v1061 = vmul.f32 %v1060, %v1054
        %v1062 = vadd.f32 %v1061, 1e-05
        %v1063 = vrsqrt.pop %v1062
        %v1064 = vmul.f32 %v1056, %v1063
        %v1065 = vld [vmem:[%s7] sm:$0x1]
        %v1067 = vlaneseq
        %v1068 = vshrl.u32 %v1067, 7
        %v1069 = vsub.s32 0, %v1068
        %v1070 = vrot.slane %v1065, %v1069
        %v1072 = vmul.f32 %v1064, %v1070
        %v1073 = vld [vmem:[%s8] sm:$0x1]
        %v1075 = vlaneseq
        %v1076 = vshrl.u32 %v1075, 7
        %v1077 = vsub.s32 0, %v1076
        %v1078 = vrot.slane %v1073, %v1077
        %v1080 = vadd.f32 %v1072, %v1078
        %1081 = vst.msk [vmem:[%s399] sm:$0xff] %vm417, %v1080
        %p1082 = scmp.lt.s32.totalorder %s25, 1
        %s1083 = scalar_select %p1082, %s25, 1
        %s1084 = smul.addr %s1083, 8
        %s1085 = scalar_lea.vmem %s9, %s1084
        %s1086 = sand.u32 %s263, 1
        %s1087 = scalar_lea.sflag [#allocation3], %s1086
        %s1088 = sand.u32 %s263, 1
        %s1089 = smul.addr %s1088, 32
        %s1090 = scalar_lea.vmem [#allocation2], %s1089
        // Predicated region
        $region57: #{transformer_decoder_layer.4} parent=55 // pred_check
          %p1091 = pneg %p247
        $region58: #{transformer_decoder_layer.4} parent=55 // pred_check_branch
          %1093 = sbr.rel (%p1091) target = $region60
        $region59: #{transformer_decoder_layer.4} parent=55 // pred_region
          _
        $region60: #{transformer_decoder_layer.4} parent=55 // pred_fallthru
          _
        // Predicated region
        $region61: #{transformer_decoder_layer.4} parent=55 // pred_check
          %p1094 = pneg %p273
        $region62: #{transformer_decoder_layer.4} parent=55 // pred_check_branch
          %1096 = sbr.rel (%p1094) target = $region64
        $region63: #{transformer_decoder_layer.4} parent=55 // pred_region
          %s1098 = ssub.s32 512, 512
          %1099 = vsyncadd %s1087, %s1098
          %s1100 = smul.addr %s25, 4
          %s1101 = smul.addr %s1100, 128
          %s1102 = scalar_lea.hbm %s10, %s1101
          %s1103 = sshll.u32 %s1090, 4
          %s1104 = int_to_ptr.vmem [resolvable:$true] %s1103
          %1109 = dma.vmem_to_hbm [thread:$0]  %s1104, 512, %s1102, %s1087, 128, 128, 8
        $region64: #{transformer_decoder_layer.4} parent=55 // pred_fallthru
          _
      $region56: #{transformer_decoder_layer.4} parent=5 // pred_fallthru
        _
      %p1110 = scmp.le.s32.totalorder 2, %s20
      // Predicated region
      $region65: #{transformer_decoder_layer.4} parent=5 // pred_check
        %p1111 = pneg %p1110
      $region66: #{transformer_decoder_layer.4} parent=5 // pred_check_branch
        %1113 = sbr.rel (%p1111) target = $region68
      $region67: #{transformer_decoder_layer.4} parent=5 // pred_region
        %s1114 = ssub.s32 %s20, 2
        // Predicated region
        $region69: #{transformer_decoder_layer.4} parent=67 // pred_check
          %p1115 = pneg %p253
        $region70: #{transformer_decoder_layer.4} parent=67 // pred_check_branch
          %1117 = sbr.rel (%p1115) target = $region72
        $region71: #{transformer_decoder_layer.4} parent=67 // pred_region
          %p1118 = scmp.lt.s32.totalorder %s26, 1
          %s1119 = scalar_select %p1118, %s26, 1
          %s1120 = smul.addr %s1119, 8
          %s1121 = scalar_lea.vmem %s9, %s1120
        $region72: #{transformer_decoder_layer.4} parent=67 // pred_fallthru
          _
        // Predicated region
        $region73: #{transformer_decoder_layer.4} parent=67 // pred_check
          %p1122 = pneg %p279
        $region74: #{transformer_decoder_layer.4} parent=67 // pred_check_branch
          %1124 = sbr.rel (%p1122) target = $region76
        $region75: #{transformer_decoder_layer.4} parent=67 // pred_region
          %s1125 = sand.u32 %s264, 1
          %s1126 = scalar_lea.sflag [#allocation3], %s1125
          %s1127 = sand.u32 %s264, 1
          %s1128 = smul.addr %s1127, 32
          %s1129 = scalar_lea.vmem [#allocation2], %s1128
          %1130 = dma.done %s1126, 512
        $region76: #{transformer_decoder_layer.4} parent=67 // pred_fallthru
          _
      $region68: #{transformer_decoder_layer.4} parent=5 // pred_fallthru
        _
    $region6: #{transformer_decoder_layer.4} parent=1 // loop_footer
      %s24 = sadd.s32 1, %s20
    $region7: #{transformer_decoder_layer.4} parent=1 // loop_footer_branch
      %19 = sbr.rel target = $region3
    $region8: #{transformer_decoder_layer.4} parent=1 // loop_exit
      _
    %1131 = vsyncpa [#allocation3], 1
    %s1132 = scalar_lea.sflag [#allocation3], 1
    %1133 = vsyncpa %s1132, 1

</llo_original>
